<compile_context>
chip_gen: v5e
topology: v5e:2x2
jax: 0.10.0
libtpu: 0.0.40
codegen_flags: <defaults>
</compile_context>

<pallas_src>
import functools

import jax
import jax.numpy as jnp
from jax.experimental import pallas as pl
from jax.experimental.pallas import tpu as pltpu


def _round_up(n, m):
    return ((n + m - 1) // m) * m


# -----------------------------------------------------------------------------
# Kernel
# -----------------------------------------------------------------------------
def _autoencoder_kernel(
    # inputs: batch tile + VMEM-resident weights
    x_ref,
    we1_ref, be1_ref, we2_ref, be2_ref, we3_ref, be3_ref,            # encoder
    wp1_ref, bp1_ref, wp2_ref, bp2_ref, wp3_ref, bp3_ref,            # predictor
    wd1z_ref, wd1k_ref, bd1_ref, wd2_ref, bd2_ref, wd3_ref, bd3_ref,  # decoder
    # outputs
    yhat_ref, zhat_ref,
    *, precision,
):
    f32 = jnp.float32

    def matmul(h, w_ref):
        # cast activations to the weight compute dtype (no-op for f32);
        # accumulate in f32 on the MXU; bias-add / ReLU stay f32
        # (v5e's VPU/EUP have no bf16 elementwise path).
        return jnp.dot(h.astype(w_ref.dtype), w_ref[...],
                       preferred_element_type=f32, precision=precision)

    def linear(h, w_ref, b_ref):
        return matmul(h, w_ref) + b_ref[...]

    x = x_ref[...]

    # ---- encoder: Linear -> ReLU -> Linear -> ReLU -> (Dropout=id) -> Linear
    h = jnp.maximum(linear(x, we1_ref, be1_ref), 0.0)
    h = jnp.maximum(linear(h, we2_ref, be2_ref), 0.0)
    # TODO(synk): Dropout(p=0.5) reproduced in eval mode (identity); training
    # RNG cannot match torch's generator bit-for-bit.
    k = linear(h, we3_ref, be3_ref)

    # ---- predictor: Linear -> ReLU -> Linear -> ReLU -> (Dropout=id) -> Linear
    p = jnp.maximum(linear(k, wp1_ref, bp1_ref), 0.0)
    p = jnp.maximum(linear(p, wp2_ref, bp2_ref), 0.0)
    zhat = linear(p, wp3_ref, bp3_ref)

    # ---- decoder on concat([zhat, k], dim=1): the concat is fused into two
    # MXU dots against static slices of the d1 weight (no scratch round-trip).
    d = matmul(zhat, wd1z_ref) + matmul(k, wd1k_ref) + bd1_ref[...]
    d = jnp.maximum(d, 0.0)
    d = jnp.maximum(linear(d, wd2_ref, bd2_ref), 0.0)
    yhat = linear(d, wd3_ref, bd3_ref)

    yhat_ref[...] = yhat.astype(yhat_ref.dtype)
    zhat_ref[...] = zhat.astype(zhat_ref.dtype)


# -----------------------------------------------------------------------------
# Feature probe: single-buffered resident inputs (pl.Buffered(1))
# -----------------------------------------------------------------------------
@functools.lru_cache(maxsize=None)
def _buffered_one_supported():
    """Probe (once) whether pl.Buffered(1) lowers/compiles/runs; otherwise the
    forward falls back to the default double-buffered resident weights."""
    def _copy(x_ref, o_ref):
        o_ref[...] = x_ref[...]

    try:
        fn = pl.pallas_call(
            _copy,
            out_shape=jax.ShapeDtypeStruct((8, 128), jnp.float32),
            grid=(2,),
            in_specs=[pl.BlockSpec((8, 128), lambda i: (0, 0),
                                   pipeline_mode=pl.Buffered(1))],
            out_specs=pl.BlockSpec((8, 128), lambda i: (0, 0)),
        )
        out = jax.block_until_ready(fn(jnp.ones((8, 128), jnp.float32)))
        return bool(out[0, 0] == 1.0)
    except Exception:  # noqa: BLE001 - feature probe only
        return False


# -----------------------------------------------------------------------------
# One-time weight preparation (hoisted out of the hot path)
# -----------------------------------------------------------------------------
def prepare_params(params, *, compute_dtype=jnp.bfloat16):
    """Transpose to (in, out), zero-pad every feature dim to a multiple of 128
    (lane-dense dots/stores; exact for Linear+ReLU), cast matmul weights to
    `compute_dtype` (biases stay f32), and split the decoder's d1 weight into
    its zhat / k halves so the concat becomes two dots on resident slices."""
    hidden = params["e1_w"].shape[0]
    X_dim = params["e1_w"].shape[1]
    latent = params["e3_w"].shape[0]
    Z_dim = params["p3_w"].shape[0]
    Y_dim = params["d3_w"].shape[0]

    Xp = _round_up(X_dim, 128)
    Hp = _round_up(hidden, 128)
    Lp = _round_up(latent, 128)
    Zp = _round_up(Z_dim, 128)
    Yp = _round_up(Y_dim, 128)

    def wpad(w, in_p, out_p):
        w = jnp.asarray(w, jnp.float32).T                  # torch (out,in) -> (in,out)
        w = jnp.pad(w, ((0, in_p - w.shape[0]), (0, out_p - w.shape[1])))
        return w.astype(compute_dtype)

    def bpad(v, out_p):
        v = jnp.asarray(v, jnp.float32).reshape(1, -1)
        return jnp.pad(v, ((0, 0), (0, out_p - v.shape[1])))  # bias stays f32

    # decoder d1 weight, split at the concat boundary: rows [0:Z_dim] take
    # zhat, rows [Z_dim:] take k.
    d1t = jnp.asarray(params["d1_w"], jnp.float32).T        # (Z_dim+latent, hidden)
    wd1z = jnp.pad(d1t[:Z_dim], ((0, Zp - Z_dim), (0, Hp - hidden))).astype(compute_dtype)
    wd1k = jnp.pad(d1t[Z_dim:], ((0, Lp - latent), (0, Hp - hidden))).astype(compute_dtype)

    weights = (
        wpad(params["e1_w"], Xp, Hp), bpad(params["e1_b"], Hp),
        wpad(params["e2_w"], Hp, Hp), bpad(params["e2_b"], Hp),
        wpad(params["e3_w"], Hp, Lp), bpad(params["e3_b"], Lp),
        wpad(params["p1_w"], Lp, Hp), bpad(params["p1_b"], Hp),
        wpad(params["p2_w"], Hp, Hp), bpad(params["p2_b"], Hp),
        wpad(params["p3_w"], Hp, Zp), bpad(params["p3_b"], Zp),
        wd1z, wd1k, bpad(params["d1_b"], Hp),
        wpad(params["d2_w"], Hp, Hp), bpad(params["d2_b"], Hp),
        wpad(params["d3_w"], Hp, Yp), bpad(params["d3_b"], Yp),
    )

    # x-independent weight-norm regularizer: computed once here, never in-kernel.
    reg_norm = (jnp.linalg.norm(jnp.asarray(params["r0_w"], jnp.float32))
                + jnp.linalg.norm(jnp.asarray(params["r1_w"], jnp.float32)))

    dims = dict(X=X_dim, Y=Y_dim, Z=Z_dim, H=hidden, L=latent,
                Xp=Xp, Yp=Yp, Zp=Zp, Hp=Hp, Lp=Lp)
    return dict(weights=weights, reg_norm=reg_norm, dims=dims)


# -----------------------------------------------------------------------------
# Forward pass
# -----------------------------------------------------------------------------
def autoencoder_forward(x, prepped, *, l2_reg, tile_b=512, out_dtype=jnp.float32):
    """x: (B, X_dim) float32; prepped: output of prepare_params().

    Returns (yhat, zhat, reg_loss) matching Autoencoder.forward (eval mode).
    Sweep tile_b (256/512/1024, VMEM permitting) on v6e/v7x; out_dtype may be
    bf16 if the consumer tolerates it (halves output HBM traffic)."""
    x = jnp.asarray(x, jnp.float32)
    B = x.shape[0]
    d = prepped["dims"]
    Xp, Yp, Zp, Hp, Lp = d["Xp"], d["Yp"], d["Zp"], d["Hp"], d["Lp"]
    weights = prepped["weights"]

    # ---- batch tiling: balanced tiles (minimize padding), >= 2 grid steps
    # when B > 8 so the "parallel" axis feeds both v7x TensorCores.
    n_tiles = max(1, pl.cdiv(B, tile_b))
    if n_tiles == 1 and B > 8:
        n_tiles = 2
    TB = _round_up(pl.cdiv(B, n_tiles), 8)
    n_tiles = pl.cdiv(B, TB)
    Bp = n_tiles * TB
    grid = (n_tiles,)

    x_p = jnp.pad(x, ((0, Bp - B), (0, Xp - x.shape[1])))

    # ---- specs: batch-tiled x/outputs; weights resident via constant
    # index_map, single-buffered when pl.Buffered(1) is available.
    use_b1 = _buffered_one_supported()

    def resident(a):
        if use_b1:
            return pl.BlockSpec(a.shape, lambda i: (0, 0),
                                pipeline_mode=pl.Buffered(1))
        return pl.BlockSpec(a.shape, lambda i: (0, 0))

    in_specs = [pl.BlockSpec((TB, Xp), lambda i: (i, 0))]
    in_specs += [resident(a) for a in weights]
    out_specs = (
        pl.BlockSpec((TB, Yp), lambda i: (i, 0)),
        pl.BlockSpec((TB, Zp), lambda i: (i, 0)),
    )

    # ---- VMEM budget derived from the actual footprint (+ headroom).
    out_isz = jnp.dtype(out_dtype).itemsize
    w_bytes = sum(int(a.size) * a.dtype.itemsize for a in weights)
    w_resident = w_bytes * (1 if use_b1 else 2)
    io_bytes = 2 * TB * (Xp * 4 + (Yp + Zp) * out_isz)      # double-buffered tiles
    vmem_limit = int(1.5 * (w_resident + io_bytes)) + (4 << 20)
    vmem_limit = min(max(vmem_limit, 16 << 20), 128 << 20)

    # ---- cost hint for XLA scheduling around the custom call.
    flops = 2 * Bp * (Xp * Hp + Hp * Hp + Hp * Lp            # encoder
                      + Lp * Hp + Hp * Hp + Hp * Zp          # predictor
                      + Zp * Hp + Lp * Hp + Hp * Hp + Hp * Yp)  # decoder
    cost = pl.CostEstimate(
        flops=int(flops), transcendentals=0,
        bytes_accessed=int(x_p.size * 4 + w_bytes + Bp * (Yp + Zp) * out_isz))

    compute_dtype = weights[0].dtype
    precision = (jax.lax.Precision.HIGHEST
                 if compute_dtype == jnp.float32 else None)

    yhat_p, zhat_p = pl.pallas_call(
        functools.partial(_autoencoder_kernel, precision=precision),
        out_shape=(
            jax.ShapeDtypeStruct((Bp, Yp), out_dtype),
            jax.ShapeDtypeStruct((Bp, Zp), out_dtype),
        ),
        grid=grid,
        in_specs=in_specs,
        out_specs=out_specs,
        compiler_params=pltpu.CompilerParams(
            dimension_semantics=("parallel",),   # megacore split on v7x
            vmem_limit_bytes=vmem_limit,
        ),
        cost_estimate=cost,
    )(x_p, *weights)

    yhat = yhat_p[:B, :d["Y"]]
    zhat = zhat_p[:B, :d["Z"]]
    reg = l2_reg * prepped["reg_norm"]
    return yhat, zhat, reg


# -----------------------------------------------------------------------------
# Pure-JAX reference + deterministic init (for the self-test)
# -----------------------------------------------------------------------------
def _reference_forward(x, params, *, l2_reg):
    hp = jax.lax.Precision.HIGHEST

    def lin(h, w, bias):
        return (jnp.dot(h, jnp.asarray(w, jnp.float32).T, precision=hp)
                + jnp.asarray(bias, jnp.float32))

    h = jax.nn.relu(lin(x, params["e1_w"], params["e1_b"]))
    h = jax.nn.relu(lin(h, params["e2_w"], params["e2_b"]))
    k = lin(h, params["e3_w"], params["e3_b"])
    p = jax.nn.relu(lin(k, params["p1_w"], params["p1_b"]))
    p = jax.nn.relu(lin(p, params["p2_w"], params["p2_b"]))
    zhat = lin(p, params["p3_w"], params["p3_b"])
    cat = jnp.concatenate([zhat, k], axis=1)
    dd = jax.nn.relu(lin(cat, params["d1_w"], params["d1_b"]))
    dd = jax.nn.relu(lin(dd, params["d2_w"], params["d2_b"]))
    yhat = lin(dd, params["d3_w"], params["d3_b"])
    reg = l2_reg * (jnp.linalg.norm(jnp.asarray(params["r0_w"], jnp.float32))
                    + jnp.linalg.norm(jnp.asarray(params["r1_w"], jnp.float32)))
    return yhat, zhat, reg


def _init_params(key, X_dim, Y_dim, Z_dim, hidden_dim, latent_dim):
    shapes = {
        "e1_w": (hidden_dim, X_dim), "e1_b": (hidden_dim,),
        "e2_w": (hidden_dim, hidden_dim), "e2_b": (hidden_dim,),
        "e3_w": (latent_dim, hidden_dim), "e3_b": (latent_dim,),
        "p1_w": (hidden_dim, latent_dim), "p1_b": (hidden_dim,),
        "p2_w": (hidden_dim, hidden_dim), "p2_b": (hidden_dim,),
        "p3_w": (Z_dim, hidden_dim), "p3_b": (Z_dim,),
        "d1_w": (hidden_dim, latent_dim + Z_dim), "d1_b": (hidden_dim,),
        "d2_w": (hidden_dim, hidden_dim), "d2_b": (hidden_dim,),
        "d3_w": (Y_dim, hidden_dim), "d3_b": (Y_dim,),
        "r0_w": (hidden_dim, hidden_dim),
        "r1_w": (latent_dim, latent_dim),
    }
    params = {}
    for name, shape in sorted(shapes.items()):
        key, sub = jax.random.split(key)
        fan_in = shape[-1] if len(shape) > 1 else shape[0]
        params[name] = (jax.random.normal(sub, shape, jnp.float32)
                        * (1.0 / jnp.sqrt(fan_in)))
    return params


if __name__ == "__main__":
    # small shapes consistent with the module's forward
    B, X_dim, Y_dim, Z_dim = 48, 64, 48, 16
    hidden_dim, latent_dim = 128, 32
    l2_reg = 0.01

    key = jax.random.PRNGKey(0)
    kx, kp = jax.random.split(key)
    x = jax.random.normal(kx, (B, X_dim), jnp.float32)
    params = _init_params(kp, X_dim, Y_dim, Z_dim, hidden_dim, latent_dim)

    y_ref, z_ref, r_ref = _reference_forward(x, params, l2_reg=l2_reg)

    # exact path: f32 weights, f32 MXU accumulation
    prep_f32 = prepare_params(params, compute_dtype=jnp.float32)
    y32, z32, r32 = autoencoder_forward(x, prep_f32, l2_reg=l2_reg)
    jax.block_until_ready((y32, z32, r32))
    assert jnp.allclose(y32, y_ref, atol=2e-4, rtol=2e-4), "yhat mismatch (f32)"
    assert jnp.allclose(z32, z_ref, atol=2e-4, rtol=2e-4), "zhat mismatch (f32)"
    assert jnp.allclose(r32, r_ref, atol=1e-5, rtol=1e-5), "reg_loss mismatch"

    # fast path (default): bf16 weights/activations into the MXU, f32 accumulate
    prep_bf16 = prepare_params(params)
    y16, z16, _ = autoencoder_forward(x, prep_bf16, l2_reg=l2_reg)
    jax.block_until_ready((y16, z16))
    assert jnp.allclose(y16, y_ref, atol=1e-1, rtol=1e-1), "yhat mismatch (bf16)"
    assert jnp.allclose(z16, z_ref, atol=1e-1, rtol=1e-1), "zhat mismatch (bf16)"

    print("KERNEL_OK")
</pallas_src>

<mosaic_0001>
module attributes {stable_mosaic.version = 11 : i64} {
  func.func @_copy(%arg0: i32, %arg1: memref<8x128xf32, #tpu.memory_space<vmem>>, %arg2: memref<8x128xf32, #tpu.memory_space<vmem>>) attributes {dimension_semantics = [#tpu.dimension_semantics<arbitrary>], iteration_bounds = array<i64: 2>, scalar_prefetch = 0 : i64, scratch_operands = 0 : i64, tpu.core_type = #tpu.core_type<tc>, window_params = [{pipeline_mode = #tpu.pipeline_mode<synchronous>, transform_indices = @transform_0, window_bounds = array<i64: 8, 128>}, {pipeline_mode = #tpu.pipeline_mode<synchronous>, transform_indices = @transform_1, window_bounds = array<i64: 8, 128>}]} {
    %c0 = arith.constant 0 : index
    %c0_0 = arith.constant 0 : index
    %0 = vector.load %arg1[%c0, %c0_0] : memref<8x128xf32, #tpu.memory_space<vmem>>, vector<8x128xf32>
    %c0_1 = arith.constant 0 : index
    %c0_2 = arith.constant 0 : index
    %1 = vector.load %arg2[%c0_1, %c0_2] : memref<8x128xf32, #tpu.memory_space<vmem>>, vector<8x128xf32>
    tpu.vector_store %arg2[%c0_1, %c0_2], %0 {strides = array<i32>} : memref<8x128xf32, #tpu.memory_space<vmem>>, vector<8x128xf32>,
    return
  }
  func.func @transform_0(%arg0: i32) -> (i32, i32) {
    %c0_i32 = arith.constant 0 : i32
    %c0_i32_0 = arith.constant 0 : i32
    %c0_i32_1 = arith.constant 0 : i32
    return %c0_i32, %c0_i32_0 : i32, i32
  }
  func.func @transform_1(%arg0: i32) -> (i32, i32) {
    %c0_i32 = arith.constant 0 : i32
    %c0_i32_0 = arith.constant 0 : i32
    %c0_i32_1 = arith.constant 0 : i32
    return %c0_i32, %c0_i32_0 : i32, i32
  }
}

module attributes {stable_mosaic.version = 11 : i64} {
  func.func @_autoencoder_kernel(%arg0: i32, %arg1: memref<24x128xf32, #tpu.memory_space<vmem>>, %arg2: memref<128x128xf32, #tpu.memory_space<vmem>>, %arg3: memref<1x128xf32, #tpu.memory_space<vmem>>, %arg4: memref<128x128xf32, #tpu.memory_space<vmem>>, %arg5: memref<1x128xf32, #tpu.memory_space<vmem>>, %arg6: memref<128x128xf32, #tpu.memory_space<vmem>>, %arg7: memref<1x128xf32, #tpu.memory_space<vmem>>, %arg8: memref<128x128xf32, #tpu.memory_space<vmem>>, %arg9: memref<1x128xf32, #tpu.memory_space<vmem>>, %arg10: memref<128x128xf32, #tpu.memory_space<vmem>>, %arg11: memref<1x128xf32, #tpu.memory_space<vmem>>, %arg12: memref<128x128xf32, #tpu.memory_space<vmem>>, %arg13: memref<1x128xf32, #tpu.memory_space<vmem>>, %arg14: memref<128x128xf32, #tpu.memory_space<vmem>>, %arg15: memref<128x128xf32, #tpu.memory_space<vmem>>, %arg16: memref<1x128xf32, #tpu.memory_space<vmem>>, %arg17: memref<128x128xf32, #tpu.memory_space<vmem>>, %arg18: memref<1x128xf32, #tpu.memory_space<vmem>>, %arg19: memref<128x128xf32, #tpu.memory_space<vmem>>, %arg20: memref<1x128xf32, #tpu.memory_space<vmem>>, %arg21: memref<24x128xf32, #tpu.memory_space<vmem>>, %arg22: memref<24x128xf32, #tpu.memory_space<vmem>>) attributes {dimension_semantics = [#tpu.dimension_semantics<parallel>], iteration_bounds = array<i64: 2>, scalar_prefetch = 0 : i64, scratch_operands = 0 : i64, tpu.core_type = #tpu.core_type<tc>, window_params = [{transform_indices = @transform_0, window_bounds = array<i64: 24, 128>}, {pipeline_mode = #tpu.pipeline_mode<synchronous>, transform_indices = @transform_1, window_bounds = array<i64: 128, 128>}, {pipeline_mode = #tpu.pipeline_mode<synchronous>, transform_indices = @transform_2, window_bounds = array<i64: 1, 128>}, {pipeline_mode = #tpu.pipeline_mode<synchronous>, transform_indices = @transform_3, window_bounds = array<i64: 128, 128>}, {pipeline_mode = #tpu.pipeline_mode<synchronous>, transform_indices = @transform_4, window_bounds = array<i64: 1, 128>}, {pipeline_mode = #tpu.pipeline_mode<synchronous>, transform_indices = @transform_5, window_bounds = array<i64: 128, 128>}, {pipeline_mode = #tpu.pipeline_mode<synchronous>, transform_indices = @transform_6, window_bounds = array<i64: 1, 128>}, {pipeline_mode = #tpu.pipeline_mode<synchronous>, transform_indices = @transform_7, window_bounds = array<i64: 128, 128>}, {pipeline_mode = #tpu.pipeline_mode<synchronous>, transform_indices = @transform_8, window_bounds = array<i64: 1, 128>}, {pipeline_mode = #tpu.pipeline_mode<synchronous>, transform_indices = @transform_9, window_bounds = array<i64: 128, 128>}, {pipeline_mode = #tpu.pipeline_mode<synchronous>, transform_indices = @transform_10, window_bounds = array<i64: 1, 128>}, {pipeline_mode = #tpu.pipeline_mode<synchronous>, transform_indices = @transform_11, window_bounds = array<i64: 128, 128>}, {pipeline_mode = #tpu.pipeline_mode<synchronous>, transform_indices = @transform_12, window_bounds = array<i64: 1, 128>}, {pipeline_mode = #tpu.pipeline_mode<synchronous>, transform_indices = @transform_13, window_bounds = array<i64: 128, 128>}, {pipeline_mode = #tpu.pipeline_mode<synchronous>, transform_indices = @transform_14, window_bounds = array<i64: 128, 128>}, {pipeline_mode = #tpu.pipeline_mode<synchronous>, transform_indices = @transform_15, window_bounds = array<i64: 1, 128>}, {pipeline_mode = #tpu.pipeline_mode<synchronous>, transform_indices = @transform_16, window_bounds = array<i64: 128, 128>}, {pipeline_mode = #tpu.pipeline_mode<synchronous>, transform_indices = @transform_17, window_bounds = array<i64: 1, 128>}, {pipeline_mode = #tpu.pipeline_mode<synchronous>, transform_indices = @transform_18, window_bounds = array<i64: 128, 128>}, {pipeline_mode = #tpu.pipeline_mode<synchronous>, transform_indices = @transform_19, window_bounds = array<i64: 1, 128>}, {transform_indices = @transform_20, window_bounds = array<i64: 24, 128>}, {transform_indices = @transform_21, window_bounds = array<i64: 24, 128>}]} {
    %c0 = arith.constant 0 : index
    %c0_0 = arith.constant 0 : index
    %0 = vector.load %arg1[%c0, %c0_0] : memref<24x128xf32, #tpu.memory_space<vmem>>, vector<24x128xf32>
    %c0_1 = arith.constant 0 : index
    %c0_2 = arith.constant 0 : index
    %1 = vector.load %arg2[%c0_1, %c0_2] : memref<128x128xf32, #tpu.memory_space<vmem>>, vector<128x128xf32>
    %cst = arith.constant dense<0.000000e+00> : vector<24x128xf32>
    %2 = tpu.matmul %0, %1, %cst {dimension_numbers = #tpu.dot_dimension_numbers<[1], [0], [0], [1], [0, 0, 1, 1], [], []>, precision = #tpu.contract_precision<fp32>} : vector<24x128xf32>, vector<128x128xf32>, vector<24x128xf32> -> vector<24x128xf32>
    %c0_3 = arith.constant 0 : index
    %c0_4 = arith.constant 0 : index
    %3 = vector.load %arg3[%c0_3, %c0_4] : memref<1x128xf32, #tpu.memory_space<vmem>>, vector<1x128xf32>
    %4 = vector.broadcast %3 : vector<1x128xf32> to vector<24x128xf32>
    %5 = arith.addf %2, %4 : vector<24x128xf32>
    %cst_5 = arith.constant 0.000000e+00 : f32
    %6 = vector.broadcast %cst_5 : f32 to vector<24x128xf32>
    %7 = arith.maximumf %5, %6 : vector<24x128xf32>
    %c0_6 = arith.constant 0 : index
    %c0_7 = arith.constant 0 : index
    %8 = vector.load %arg4[%c0_6, %c0_7] : memref<128x128xf32, #tpu.memory_space<vmem>>, vector<128x128xf32>
    %cst_8 = arith.constant dense<0.000000e+00> : vector<24x128xf32>
    %9 = tpu.matmul %7, %8, %cst_8 {dimension_numbers = #tpu.dot_dimension_numbers<[1], [0], [0], [1], [0, 0, 1, 1], [], []>, precision = #tpu.contract_precision<fp32>} : vector<24x128xf32>, vector<128x128xf32>, vector<24x128xf32> -> vector<24x128xf32>
    %c0_9 = arith.constant 0 : index
    %c0_10 = arith.constant 0 : index
    %10 = vector.load %arg5[%c0_9, %c0_10] : memref<1x128xf32, #tpu.memory_space<vmem>>, vector<1x128xf32>
    %11 = vector.broadcast %10 : vector<1x128xf32> to vector<24x128xf32>
    %12 = arith.addf %9, %11 : vector<24x128xf32>
    %cst_11 = arith.constant 0.000000e+00 : f32
    %13 = vector.broadcast %cst_11 : f32 to vector<24x128xf32>
    %14 = arith.maximumf %12, %13 : vector<24x128xf32>
    %c0_12 = arith.constant 0 : index
    %c0_13 = arith.constant 0 : index
    %15 = vector.load %arg6[%c0_12, %c0_13] : memref<128x128xf32, #tpu.memory_space<vmem>>, vector<128x128xf32>
    %cst_14 = arith.constant dense<0.000000e+00> : vector<24x128xf32>
    %16 = tpu.matmul %14, %15, %cst_14 {dimension_numbers = #tpu.dot_dimension_numbers<[1], [0], [0], [1], [0, 0, 1, 1], [], []>, precision = #tpu.contract_precision<fp32>} : vector<24x128xf32>, vector<128x128xf32>, vector<24x128xf32> -> vector<24x128xf32>
    %c0_15 = arith.constant 0 : index
    %c0_16 = arith.constant 0 : index
    %17 = vector.load %arg7[%c0_15, %c0_16] : memref<1x128xf32, #tpu.memory_space<vmem>>, vector<1x128xf32>
    %18 = vector.broadcast %17 : vector<1x128xf32> to vector<24x128xf32>
    %19 = arith.addf %16, %18 : vector<24x128xf32>
    %c0_17 = arith.constant 0 : index
    %c0_18 = arith.constant 0 : index
    %20 = vector.load %arg8[%c0_17, %c0_18] : memref<128x128xf32, #tpu.memory_space<vmem>>, vector<128x128xf32>
    %cst_19 = arith.constant dense<0.000000e+00> : vector<24x128xf32>
    %21 = tpu.matmul %19, %20, %cst_19 {dimension_numbers = #tpu.dot_dimension_numbers<[1], [0], [0], [1], [0, 0, 1, 1], [], []>, precision = #tpu.contract_precision<fp32>} : vector<24x128xf32>, vector<128x128xf32>, vector<24x128xf32> -> vector<24x128xf32>
    %c0_20 = arith.constant 0 : index
    %c0_21 = arith.constant 0 : index
    %22 = vector.load %arg9[%c0_20, %c0_21] : memref<1x128xf32, #tpu.memory_space<vmem>>, vector<1x128xf32>
    %23 = vector.broadcast %22 : vector<1x128xf32> to vector<24x128xf32>
    %24 = arith.addf %21, %23 : vector<24x128xf32>
    %cst_22 = arith.constant 0.000000e+00 : f32
    %25 = vector.broadcast %cst_22 : f32 to vector<24x128xf32>
    %26 = arith.maximumf %24, %25 : vector<24x128xf32>
    %c0_23 = arith.constant 0 : index
    %c0_24 = arith.constant 0 : index
    %27 = vector.load %arg10[%c0_23, %c0_24] : memref<128x128xf32, #tpu.memory_space<vmem>>, vector<128x128xf32>
    %cst_25 = arith.constant dense<0.000000e+00> : vector<24x128xf32>
    %28 = tpu.matmul %26, %27, %cst_25 {dimension_numbers = #tpu.dot_dimension_numbers<[1], [0], [0], [1], [0, 0, 1, 1], [], []>, precision = #tpu.contract_precision<fp32>} : vector<24x128xf32>, vector<128x128xf32>, vector<24x128xf32> -> vector<24x128xf32>
    %c0_26 = arith.constant 0 : index
    %c0_27 = arith.constant 0 : index
    %29 = vector.load %arg11[%c0_26, %c0_27] : memref<1x128xf32, #tpu.memory_space<vmem>>, vector<1x128xf32>
    %30 = vector.broadcast %29 : vector<1x128xf32> to vector<24x128xf32>
    %31 = arith.addf %28, %30 : vector<24x128xf32>
    %cst_28 = arith.constant 0.000000e+00 : f32
    %32 = vector.broadcast %cst_28 : f32 to vector<24x128xf32>
    %33 = arith.maximumf %31, %32 : vector<24x128xf32>
    %c0_29 = arith.constant 0 : index
    %c0_30 = arith.constant 0 : index
    %34 = vector.load %arg12[%c0_29, %c0_30] : memref<128x128xf32, #tpu.memory_space<vmem>>, vector<128x128xf32>
    %cst_31 = arith.constant dense<0.000000e+00> : vector<24x128xf32>
    %35 = tpu.matmul %33, %34, %cst_31 {dimension_numbers = #tpu.dot_dimension_numbers<[1], [0], [0], [1], [0, 0, 1, 1], [], []>, precision = #tpu.contract_precision<fp32>} : vector<24x128xf32>, vector<128x128xf32>, vector<24x128xf32> -> vector<24x128xf32>
    %c0_32 = arith.constant 0 : index
    %c0_33 = arith.constant 0 : index
    %36 = vector.load %arg13[%c0_32, %c0_33] : memref<1x128xf32, #tpu.memory_space<vmem>>, vector<1x128xf32>
    %37 = vector.broadcast %36 : vector<1x128xf32> to vector<24x128xf32>
    %38 = arith.addf %35, %37 : vector<24x128xf32>
    %c0_34 = arith.constant 0 : index
    %c0_35 = arith.constant 0 : index
    %39 = vector.load %arg14[%c0_34, %c0_35] : memref<128x128xf32, #tpu.memory_space<vmem>>, vector<128x128xf32>
    %cst_36 = arith.constant dense<0.000000e+00> : vector<24x128xf32>
    %40 = tpu.matmul %38, %39, %cst_36 {dimension_numbers = #tpu.dot_dimension_numbers<[1], [0], [0], [1], [0, 0, 1, 1], [], []>, precision = #tpu.contract_precision<fp32>} : vector<24x128xf32>, vector<128x128xf32>, vector<24x128xf32> -> vector<24x128xf32>
    %c0_37 = arith.constant 0 : index
    %c0_38 = arith.constant 0 : index
    %41 = vector.load %arg15[%c0_37, %c0_38] : memref<128x128xf32, #tpu.memory_space<vmem>>, vector<128x128xf32>
    %cst_39 = arith.constant dense<0.000000e+00> : vector<24x128xf32>
    %42 = tpu.matmul %19, %41, %cst_39 {dimension_numbers = #tpu.dot_dimension_numbers<[1], [0], [0], [1], [0, 0, 1, 1], [], []>, precision = #tpu.contract_precision<fp32>} : vector<24x128xf32>, vector<128x128xf32>, vector<24x128xf32> -> vector<24x128xf32>
    %43 = arith.addf %40, %42 : vector<24x128xf32>
    %c0_40 = arith.constant 0 : index
    %c0_41 = arith.constant 0 : index
    %44 = vector.load %arg16[%c0_40, %c0_41] : memref<1x128xf32, #tpu.memory_space<vmem>>, vector<1x128xf32>
    %45 = vector.broadcast %44 : vector<1x128xf32> to vector<24x128xf32>
    %46 = arith.addf %43, %45 : vector<24x128xf32>
    %cst_42 = arith.constant 0.000000e+00 : f32
    %47 = vector.broadcast %cst_42 : f32 to vector<24x128xf32>
    %48 = arith.maximumf %46, %47 : vector<24x128xf32>
    %c0_43 = arith.constant 0 : index
    %c0_44 = arith.constant 0 : index
    %49 = vector.load %arg17[%c0_43, %c0_44] : memref<128x128xf32, #tpu.memory_space<vmem>>, vector<128x128xf32>
    %cst_45 = arith.constant dense<0.000000e+00> : vector<24x128xf32>
    %50 = tpu.matmul %48, %49, %cst_45 {dimension_numbers = #tpu.dot_dimension_numbers<[1], [0], [0], [1], [0, 0, 1, 1], [], []>, precision = #tpu.contract_precision<fp32>} : vector<24x128xf32>, vector<128x128xf32>, vector<24x128xf32> -> vector<24x128xf32>
    %c0_46 = arith.constant 0 : index
    %c0_47 = arith.constant 0 : index
    %51 = vector.load %arg18[%c0_46, %c0_47] : memref<1x128xf32, #tpu.memory_space<vmem>>, vector<1x128xf32>
    %52 = vector.broadcast %51 : vector<1x128xf32> to vector<24x128xf32>
    %53 = arith.addf %50, %52 : vector<24x128xf32>
    %cst_48 = arith.constant 0.000000e+00 : f32
    %54 = vector.broadcast %cst_48 : f32 to vector<24x128xf32>
    %55 = arith.maximumf %53, %54 : vector<24x128xf32>
    %c0_49 = arith.constant 0 : index
    %c0_50 = arith.constant 0 : index
    %56 = vector.load %arg19[%c0_49, %c0_50] : memref<128x128xf32, #tpu.memory_space<vmem>>, vector<128x128xf32>
    %cst_51 = arith.constant dense<0.000000e+00> : vector<24x128xf32>
    %57 = tpu.matmul %55, %56, %cst_51 {dimension_numbers = #tpu.dot_dimension_numbers<[1], [0], [0], [1], [0, 0, 1, 1], [], []>, precision = #tpu.contract_precision<fp32>} : vector<24x128xf32>, vector<128x128xf32>, vector<24x128xf32> -> vector<24x128xf32>
    %c0_52 = arith.constant 0 : index
    %c0_53 = arith.constant 0 : index
    %58 = vector.load %arg20[%c0_52, %c0_53] : memref<1x128xf32, #tpu.memory_space<vmem>>, vector<1x128xf32>
    %59 = vector.broadcast %58 : vector<1x128xf32> to vector<24x128xf32>
    %60 = arith.addf %57, %59 : vector<24x128xf32>
    %c0_54 = arith.constant 0 : index
    %c0_55 = arith.constant 0 : index
    %61 = vector.load %arg21[%c0_54, %c0_55] : memref<24x128xf32, #tpu.memory_space<vmem>>, vector<24x128xf32>
    tpu.vector_store %arg21[%c0_54, %c0_55], %60 {strides = array<i32>} : memref<24x128xf32, #tpu.memory_space<vmem>>, vector<24x128xf32>,
    %c0_56 = arith.constant 0 : index
    %c0_57 = arith.constant 0 : index
    %62 = vector.load %arg22[%c0_56, %c0_57] : memref<24x128xf32, #tpu.memory_space<vmem>>, vector<24x128xf32>
    tpu.vector_store %arg22[%c0_56, %c0_57], %38 {strides = array<i32>} : memref<24x128xf32, #tpu.memory_space<vmem>>, vector<24x128xf32>,
    return
  }
  func.func @transform_0(%arg0: i32) -> (i32, i32) {
    %c0_i32 = arith.constant 0 : i32
    %c0_i32_0 = arith.constant 0 : i32
    return %arg0, %c0_i32 : i32, i32
  }
  func.func @transform_1(%arg0: i32) -> (i32, i32) {
    %c0_i32 = arith.constant 0 : i32
    %c0_i32_0 = arith.constant 0 : i32
    %c0_i32_1 = arith.constant 0 : i32
    return %c0_i32, %c0_i32_0 : i32, i32
  }
  func.func @transform_2(%arg0: i32) -> (i32, i32) {
    %c0_i32 = arith.constant 0 : i32
    %c0_i32_0 = arith.constant 0 : i32
    %c0_i32_1 = arith.constant 0 : i32
    return %c0_i32, %c0_i32_0 : i32, i32
  }
  func.func @transform_3(%arg0: i32) -> (i32, i32) {
    %c0_i32 = arith.constant 0 : i32
    %c0_i32_0 = arith.constant 0 : i32
    %c0_i32_1 = arith.constant 0 : i32
    return %c0_i32, %c0_i32_0 : i32, i32
  }
  func.func @transform_4(%arg0: i32) -> (i32, i32) {
    %c0_i32 = arith.constant 0 : i32
    %c0_i32_0 = arith.constant 0 : i32
    %c0_i32_1 = arith.constant 0 : i32
    return %c0_i32, %c0_i32_0 : i32, i32
  }
  func.func @transform_5(%arg0: i32) -> (i32, i32) {
    %c0_i32 = arith.constant 0 : i32
    %c0_i32_0 = arith.constant 0 : i32
    %c0_i32_1 = arith.constant 0 : i32
    return %c0_i32, %c0_i32_0 : i32, i32
  }
  func.func @transform_6(%arg0: i32) -> (i32, i32) {
    %c0_i32 = arith.constant 0 : i32
    %c0_i32_0 = arith.constant 0 : i32
    %c0_i32_1 = arith.constant 0 : i32
    return %c0_i32, %c0_i32_0 : i32, i32
  }
  func.func @transform_7(%arg0: i32) -> (i32, i32) {
    %c0_i32 = arith.constant 0 : i32
    %c0_i32_0 = arith.constant 0 : i32
    %c0_i32_1 = arith.constant 0 : i32
    return %c0_i32, %c0_i32_0 : i32, i32
  }
  func.func @transform_8(%arg0: i32) -> (i32, i32) {
    %c0_i32 = arith.constant 0 : i32
    %c0_i32_0 = arith.constant 0 : i32
    %c0_i32_1 = arith.constant 0 : i32
    return %c0_i32, %c0_i32_0 : i32, i32
  }
  func.func @transform_9(%arg0: i32) -> (i32, i32) {
    %c0_i32 = arith.constant 0 : i32
    %c0_i32_0 = arith.constant 0 : i32
    %c0_i32_1 = arith.constant 0 : i32
    return %c0_i32, %c0_i32_0 : i32, i32
  }
  func.func @transform_10(%arg0: i32) -> (i32, i32) {
    %c0_i32 = arith.constant 0 : i32
    %c0_i32_0 = arith.constant 0 : i32
    %c0_i32_1 = arith.constant 0 : i32
    return %c0_i32, %c0_i32_0 : i32, i32
  }
  func.func @transform_11(%arg0: i32) -> (i32, i32) {
    %c0_i32 = arith.constant 0 : i32
    %c0_i32_0 = arith.constant 0 : i32
    %c0_i32_1 = arith.constant 0 : i32
    return %c0_i32, %c0_i32_0 : i32, i32
  }
  func.func @transform_12(%arg0: i32) -> (i32, i32) {
    %c0_i32 = arith.constant 0 : i32
    %c0_i32_0 = arith.constant 0 : i32
    %c0_i32_1 = arith.constant 0 : i32
    return %c0_i32, %c0_i32_0 : i32, i32
  }
  func.func @transform_13(%arg0: i32) -> (i32, i32) {
    %c0_i32 = arith.constant 0 : i32
    %c0_i32_0 = arith.constant 0 : i32
    %c0_i32_1 = arith.constant 0 : i32
    return %c0_i32, %c0_i32_0 : i32, i32
  }
  func.func @transform_14(%arg0: i32) -> (i32, i32) {
    %c0_i32 = arith.constant 0 : i32
    %c0_i32_0 = arith.constant 0 : i32
    %c0_i32_1 = arith.constant 0 : i32
    return %c0_i32, %c0_i32_0 : i32, i32
  }
  func.func @transform_15(%arg0: i32) -> (i32, i32) {
    %c0_i32 = arith.constant 0 : i32
    %c0_i32_0 = arith.constant 0 : i32
    %c0_i32_1 = arith.constant 0 : i32
    return %c0_i32, %c0_i32_0 : i32, i32
  }
  func.func @transform_16(%arg0: i32) -> (i32, i32) {
    %c0_i32 = arith.constant 0 : i32
    %c0_i32_0 = arith.constant 0 : i32
    %c0_i32_1 = arith.constant 0 : i32
    return %c0_i32, %c0_i32_0 : i32, i32
  }
  func.func @transform_17(%arg0: i32) -> (i32, i32) {
    %c0_i32 = arith.constant 0 : i32
    %c0_i32_0 = arith.constant 0 : i32
    %c0_i32_1 = arith.constant 0 : i32
    return %c0_i32, %c0_i32_0 : i32, i32
  }
  func.func @transform_18(%arg0: i32) -> (i32, i32) {
    %c0_i32 = arith.constant 0 : i32
    %c0_i32_0 = arith.constant 0 : i32
    %c0_i32_1 = arith.constant 0 : i32
    return %c0_i32, %c0_i32_0 : i32, i32
  }
  func.func @transform_19(%arg0: i32) -> (i32, i32) {
    %c0_i32 = arith.constant 0 : i32
    %c0_i32_0 = arith.constant 0 : i32
    %c0_i32_1 = arith.constant 0 : i32
    return %c0_i32, %c0_i32_0 : i32, i32
  }
  func.func @transform_20(%arg0: i32) -> (i32, i32) {
    %c0_i32 = arith.constant 0 : i32
    %c0_i32_0 = arith.constant 0 : i32
    return %arg0, %c0_i32 : i32, i32
  }
  func.func @transform_21(%arg0: i32) -> (i32, i32) {
    %c0_i32 = arith.constant 0 : i32
    %c0_i32_0 = arith.constant 0 : i32
    return %arg0, %c0_i32 : i32, i32
  }
}

</mosaic_0001>

<llo_original>
// kernel: tpu_custom_call.1
$region0: #{tpu_custom_call.1}
  #allocation0 [shape = 'u32[]', space=smem, size = 0x4, offset = 0x4, fixed_abs, tag = 'smem constant byte address 0x4 - core index']
  #allocation1 [shape = 'u32[72,128]{1,0:T(1,128)}', space=vmem, size = 0x9000, scoped, tag = 'internal scratch']
  %s0 = inlined_call_operand.hbm [shape: f32[8,128], index: 0, kind: input, shape index: {}]
  %s1 = inlined_call_operand.hbm [shape: f32[8,128], index: 1, kind: output, shape index: {}]
  %s2 = sld [smem:[#allocation0]]
  $region41: #{tpu_custom_call.1} parent=0
    _
  %s4 = ssub.s32 1, %s2
  %s5 = scalar_select 0, %s4, %s2
  $region1: #{tpu_custom_call.1} parent=0
    #allocation2 [shape = 'u8[4096]{0}', space=vmem, size = 0x1000, scoped, tag = 'input window, operand 0, single buffered']
    #allocation3 [shape = 's32[2]{0}', space=sflag, size = 0x8, scoped, tag = 'scoped memory for tpu_custom_call.1']
    #allocation4 [shape = 's32[2]{0}', space=sflag, size = 0x8, scoped, tag = 'scoped memory for tpu_custom_call.1']
    #allocation5 [shape = 'u8[4096]{0}', space=vmem, size = 0x1000, scoped, tag = 'output window, operand 0, single buffered']
    %6 = vsyncpa [#allocation3], 0
    %7 = vsyncpa [#allocation4], 0
    loop: start=0, step=1, limit=4
    $region2: #{tpu_custom_call.1} parent=1 // loop_pre_header
      _
    $region3: #{tpu_custom_call.1} parent=1 // loop_header
      %s9 = sphi 0, %s13
      %p10 = scmp.ge.s32.totalorder %s9, 4
      %s17 = sphi 0, %s17
      %s19 = sphi 0, %s17
      %s20 = sphi 0, %s19
      %s34 = sphi 0, %s20
      %s38 = sphi 0, %s38
      %s40 = sphi 0, %s38
      %s41 = sphi 0, %s40
      %s55 = sphi 0, %s41
    $region4: #{tpu_custom_call.1} parent=1 // loop_header_branch
      %12 = sbr.rel (%p10) target = $region8
    $region5: #{tpu_custom_call.1} parent=1 // loop_body
      %s14 = ssub.s32 %s9, 1
      %s15 = ssub.s32 %s9, 2
      %s16 = sadd.s32 %s9, 1
      %s18 = sadd.s32 %s17, 1
      %p21 = scmp.eq.s32.totalorder %s9, 1
      %p22 = scmp.ne.s32.totalorder %s17, %s19
      %p23 = scmp.eq.s32.totalorder %s9, 0
      %p24 = por %p22, %p23
      %p25 = scmp.ne.s32.totalorder %s17, %s19
      %p26 = scmp.eq.s32.totalorder %s14, 1
      %p27 = por %p25, %p26
      %p28 = scmp.ne.s32.totalorder %s19, %s20
      %p29 = scmp.eq.s32.totalorder %s14, 0
      %p30 = por %p28, %p29
      %p31 = scmp.ne.s32.totalorder %s19, %s20
      %p32 = scmp.eq.s32.totalorder %s15, 1
      %p33 = por %p31, %p32
      %p35 = scmp.ne.s32.totalorder %s20, %s34
      %p36 = scmp.eq.s32.totalorder %s15, 0
      %p37 = por %p35, %p36
      %s39 = sadd.s32 %s38, 1
      %p42 = scmp.eq.s32.totalorder %s9, 1
      %p43 = scmp.ne.s32.totalorder %s38, %s40
      %p44 = scmp.eq.s32.totalorder %s9, 0
      %p45 = por %p43, %p44
      %p46 = scmp.ne.s32.totalorder %s38, %s40
      %p47 = scmp.eq.s32.totalorder %s14, 1
      %p48 = por %p46, %p47
      %p49 = scmp.ne.s32.totalorder %s40, %s41
      %p50 = scmp.eq.s32.totalorder %s14, 0
      %p51 = por %p49, %p50
      %p52 = scmp.ne.s32.totalorder %s40, %s41
      %p53 = scmp.eq.s32.totalorder %s15, 1
      %p54 = por %p52, %p53
      %p56 = scmp.ne.s32.totalorder %s41, %s55
      %p57 = scmp.eq.s32.totalorder %s15, 0
      %p58 = por %p56, %p57
      %p59 = scmp.le.s32.totalorder 1, %s9
      %p60 = scmp.lt.s32.totalorder %s9, 3
      %p61 = pnand %p59, %p60
      %p62 = pneg %p61
      // Predicated region
      $region9: #{tpu_custom_call.1} parent=5 // pred_check
        _
      $region10: #{tpu_custom_call.1} parent=5 // pred_check_branch
        %64 = sbr.rel (%p61) target = $region12
      $region11: #{tpu_custom_call.1} parent=5 // pred_region
        %s65 = ssub.s32 %s9, 1
        // Predicated region
        $region13: #{tpu_custom_call.1} parent=11 // pred_check
          %p66 = pneg %p30
        $region14: #{tpu_custom_call.1} parent=11 // pred_check_branch
          %68 = sbr.rel (%p66) target = $region16
        $region15: #{tpu_custom_call.1} parent=11 // pred_region
          %70 = vsyncadd [#allocation3], 0
          %s72 = sshll.u32 %s0, 4
          %s73 = int_to_ptr.hbm [resolvable:$true] %s72
          %s74 = sshll.u32 [#allocation2], 4
          %s75 = int_to_ptr.vmem [resolvable:$true] %s74
          %77 = dma.hbm_to_vmem [thread:$0]  %s73, 128, %s75, [#allocation3]
        $region16: #{tpu_custom_call.1} parent=11 // pred_fallthru
          _
      $region12: #{tpu_custom_call.1} parent=5 // pred_fallthru
        _
      %p78 = scmp.lt.s32.totalorder %s9, 2
      // Predicated region
      $region17: #{tpu_custom_call.1} parent=5 // pred_check
        %p79 = pneg %p78
      $region18: #{tpu_custom_call.1} parent=5 // pred_check_branch
        %81 = sbr.rel (%p79) target = $region20
      $region19: #{tpu_custom_call.1} parent=5 // pred_region
        _
      $region20: #{tpu_custom_call.1} parent=5 // pred_fallthru
        _
      %p82 = scmp.le.s32.totalorder 1, %s9
      %p83 = scmp.lt.s32.totalorder %s9, 3
      %p84 = pnand %p82, %p83
      %p85 = pneg %p84
      // Predicated region
      $region21: #{tpu_custom_call.1} parent=5 // pred_check
        _
      $region22: #{tpu_custom_call.1} parent=5 // pred_check_branch
        %87 = sbr.rel (%p84) target = $region24
      $region23: #{tpu_custom_call.1} parent=5 // pred_region
        %s88 = ssub.s32 %s9, 1
        // Predicated region
        $region25: #{tpu_custom_call.1} parent=23 // pred_check
          %p89 = pneg %p30
        $region26: #{tpu_custom_call.1} parent=23 // pred_check_branch
          %91 = sbr.rel (%p89) target = $region28
        $region27: #{tpu_custom_call.1} parent=23 // pred_region
          %93 = dma.done [#allocation3], 128
        $region28: #{tpu_custom_call.1} parent=23 // pred_fallthru
          _
        %p94 = pneg %p30
        %p95 = pneg %p27
        %p96 = pneg %p51
        %p97 = pneg %p48
        %v98 = vld [vmem:[#allocation2] sm:$0xff]
        %99 = vst [vmem:[#allocation5] sm:$0xff] %v98
        // Predicated region
        $region29: #{tpu_custom_call.1} parent=23 // pred_check
          %p100 = pneg %p48
        $region30: #{tpu_custom_call.1} parent=23 // pred_check_branch
          %102 = sbr.rel (%p100) target = $region32
        $region31: #{tpu_custom_call.1} parent=23 // pred_region
          %104 = vsyncadd [#allocation4], 0
          %s106 = sshll.u32 [#allocation5], 4
          %s107 = int_to_ptr.vmem [resolvable:$true] %s106
          %s108 = sshll.u32 %s1, 4
          %s109 = int_to_ptr.hbm [resolvable:$true] %s108
          %111 = dma.vmem_to_hbm [thread:$0]  %s107, 128, %s109, [#allocation4]
        $region32: #{tpu_custom_call.1} parent=23 // pred_fallthru
          _
        // Predicated region
        $region33: #{tpu_custom_call.1} parent=23 // pred_check
          %p112 = pneg %p48
        $region34: #{tpu_custom_call.1} parent=23 // pred_check_branch
          %114 = sbr.rel (%p112) target = $region36
        $region35: #{tpu_custom_call.1} parent=23 // pred_region
          %116 = dma.done [#allocation4], 128
        $region36: #{tpu_custom_call.1} parent=23 // pred_fallthru
          _
      $region24: #{tpu_custom_call.1} parent=5 // pred_fallthru
        _
      %p117 = scmp.le.s32.totalorder 2, %s9
      // Predicated region
      $region37: #{tpu_custom_call.1} parent=5 // pred_check
        %p118 = pneg %p117
      $region38: #{tpu_custom_call.1} parent=5 // pred_check_branch
        %120 = sbr.rel (%p118) target = $region40
      $region39: #{tpu_custom_call.1} parent=5 // pred_region
        %s121 = ssub.s32 %s9, 2
      $region40: #{tpu_custom_call.1} parent=5 // pred_fallthru
        _
    $region6: #{tpu_custom_call.1} parent=1 // loop_footer
      %s13 = sadd.s32 1, %s9
    $region7: #{tpu_custom_call.1} parent=1 // loop_footer_branch
      %8 = sbr.rel target = $region3
    $region8: #{tpu_custom_call.1} parent=1 // loop_exit
      _
    %122 = vsyncpa [#allocation3], 1
    %s123 = scalar_lea.sflag [#allocation3], 1
    %124 = vsyncpa %s123, 1
    %125 = vsyncpa [#allocation4], 1
    %s126 = scalar_lea.sflag [#allocation4], 1
    %127 = vsyncpa %s126, 1

// kernel: tpu_custom_call.1
$region0: #{tpu_custom_call.1}
  #allocation0 [shape = 'u32[]', space=smem, size = 0x4, offset = 0x4, fixed_abs, tag = 'smem constant byte address 0x4 - core index']
  #allocation1 [shape = 'u32[72,128]{1,0:T(1,128)}', space=vmem, size = 0x9000, scoped, tag = 'internal scratch']
  %s0 = inlined_call_operand.hbm [shape: f32[48,128], index: 0, kind: input, shape index: {}]
  %s1 = inlined_call_operand.hbm [shape: f32[128,128], index: 1, kind: input, shape index: {}]
  %s2 = inlined_call_operand.vmem [shape: f32[1,128], index: 2, kind: input, shape index: {}]
  %s3 = inlined_call_operand.hbm [shape: f32[128,128], index: 3, kind: input, shape index: {}]
  %s4 = inlined_call_operand.vmem [shape: f32[1,128], index: 4, kind: input, shape index: {}]
  %s5 = inlined_call_operand.hbm [shape: f32[128,128], index: 5, kind: input, shape index: {}]
  %s6 = inlined_call_operand.vmem [shape: f32[1,128], index: 6, kind: input, shape index: {}]
  %s7 = inlined_call_operand.hbm [shape: f32[128,128], index: 7, kind: input, shape index: {}]
  %s8 = inlined_call_operand.vmem [shape: f32[1,128], index: 8, kind: input, shape index: {}]
  %s9 = inlined_call_operand.hbm [shape: f32[128,128], index: 9, kind: input, shape index: {}]
  %s10 = inlined_call_operand.vmem [shape: f32[1,128], index: 10, kind: input, shape index: {}]
  %s11 = inlined_call_operand.hbm [shape: f32[128,128], index: 11, kind: input, shape index: {}]
  %s12 = inlined_call_operand.vmem [shape: f32[1,128], index: 12, kind: input, shape index: {}]
  %s13 = inlined_call_operand.hbm [shape: f32[128,128], index: 13, kind: input, shape index: {}]
  %s14 = inlined_call_operand.hbm [shape: f32[128,128], index: 14, kind: input, shape index: {}]
  %s15 = inlined_call_operand.vmem [shape: f32[1,128], index: 15, kind: input, shape index: {}]
  %s16 = inlined_call_operand.hbm [shape: f32[128,128], index: 16, kind: input, shape index: {}]
  %s17 = inlined_call_operand.vmem [shape: f32[1,128], index: 17, kind: input, shape index: {}]
  %s18 = inlined_call_operand.hbm [shape: f32[128,128], index: 18, kind: input, shape index: {}]
  %s19 = inlined_call_operand.vmem [shape: f32[1,128], index: 19, kind: input, shape index: {}]
  %s20 = inlined_call_operand.hbm [shape: f32[48,128], index: 20, kind: output, shape index: {0}]
  %s21 = inlined_call_operand.hbm [shape: f32[48,128], index: 21, kind: output, shape index: {1}]
  %22 = xla_tuple %s20, %s21
  %s23 = sld [smem:[#allocation0]]
  $region165: #{tpu_custom_call.1} parent=0
    _
  %s25 = ssub.s32 1, %s23
  %s26 = scalar_select 0, %s25, %s23
  $region1: #{tpu_custom_call.1} parent=0
    #allocation2 [shape = 'u8[24576]{0}', space=vmem, size = 0x6000, scoped, tag = 'input window, operand 0']
    #allocation3 [shape = 's32[2]{0}', space=sflag, size = 0x8, scoped, tag = 'scoped memory for tpu_custom_call.1']
    #allocation4 [shape = 's32[2]{0}', space=sflag, size = 0x8, scoped, tag = 'scoped memory for tpu_custom_call.1']
    #allocation5 [shape = 'u8[65536]{0}', space=vmem, size = 0x10000, scoped, tag = 'input window, operand 1, single buffered']
    #allocation6 [shape = 's32[1]{0}', space=sflag, size = 0x4, scoped, tag = 'scoped memory for tpu_custom_call.1']
    #allocation7 [shape = 'u8[65536]{0}', space=vmem, size = 0x10000, scoped, tag = 'input window, operand 3, single buffered']
    #allocation8 [shape = 'u8[65536]{0}', space=vmem, size = 0x10000, scoped, tag = 'input window, operand 5, single buffered']
    #allocation9 [shape = 's32[1]{0}', space=sflag, size = 0x4, scoped, tag = 'scoped memory for tpu_custom_call.1']
    #allocation10 [shape = 'u8[65536]{0}', space=vmem, size = 0x10000, scoped, tag = 'input window, operand 7, single buffered']
    #allocation11 [shape = 'u8[65536]{0}', space=vmem, size = 0x10000, scoped, tag = 'input window, operand 9, single buffered']
    #allocation12 [shape = 's32[1]{0}', space=sflag, size = 0x4, scoped, tag = 'scoped memory for tpu_custom_call.1']
    #allocation13 [shape = 'u8[65536]{0}', space=vmem, size = 0x10000, scoped, tag = 'input window, operand 11, single buffered']
    #allocation14 [shape = 'u8[65536]{0}', space=vmem, size = 0x10000, scoped, tag = 'input window, operand 13, single buffered']
    #allocation15 [shape = 's32[1]{0}', space=sflag, size = 0x4, scoped, tag = 'scoped memory for tpu_custom_call.1']
    #allocation16 [shape = 'u8[65536]{0}', space=vmem, size = 0x10000, scoped, tag = 'input window, operand 14, single buffered']
    #allocation17 [shape = 'u8[65536]{0}', space=vmem, size = 0x10000, scoped, tag = 'input window, operand 16, single buffered']
    #allocation18 [shape = 's32[1]{0}', space=sflag, size = 0x4, scoped, tag = 'scoped memory for tpu_custom_call.1']
    #allocation19 [shape = 'u8[65536]{0}', space=vmem, size = 0x10000, scoped, tag = 'input window, operand 18, single buffered']
    #allocation20 [shape = 'u8[24576]{0}', space=vmem, size = 0x6000, scoped, tag = 'output window, operand 0']
    #allocation21 [shape = 'u8[24576]{0}', space=vmem, size = 0x6000, scoped, tag = 'output window, operand 1']
    #allocation22 [shape = 's32[2]{0}', space=sflag, size = 0x8, scoped, tag = 'scoped memory for tpu_custom_call.1']
    %27 = vsyncpa [#allocation3], 0
    %s28 = scalar_lea.sflag [#allocation3], 1
    %29 = vsyncpa %s28, 0
    %30 = vsyncpa [#allocation6], 0
    %31 = vsyncpa [#allocation9], 0
    %32 = vsyncpa [#allocation12], 0
    %33 = vsyncpa [#allocation15], 0
    %34 = vsyncpa [#allocation18], 0
    %35 = vsyncpa [#allocation4], 0
    %s36 = scalar_lea.sflag [#allocation4], 1
    %37 = vsyncpa %s36, 0
    %38 = vsyncpa [#allocation22], 0
    %s39 = scalar_lea.sflag [#allocation22], 1
    %40 = vsyncpa %s39, 0
    loop: start=0, step=1, limit=4
    $region2: #{tpu_custom_call.1} parent=1 // loop_pre_header
      _
    $region3: #{tpu_custom_call.1} parent=1 // loop_header
      %s42 = sphi 0, %s46
      %p43 = scmp.ge.s32.totalorder %s42, 4
      %s52 = sphi 0, %s54
      %s55 = sphi 0, %s52
      %s56 = sphi 0, %s55
      %s72 = sphi 0, %s56
      %s76 = sphi 0, %s76
      %s78 = sphi 0, %s76
      %s79 = sphi 0, %s78
      %s93 = sphi 0, %s79
      %s97 = sphi 0, %s97
      %s99 = sphi 0, %s97
      %s100 = sphi 0, %s99
      %s114 = sphi 0, %s100
      %s118 = sphi 0, %s118
      %s120 = sphi 0, %s118
      %s121 = sphi 0, %s120
      %s135 = sphi 0, %s121
      %s139 = sphi 0, %s139
      %s141 = sphi 0, %s139
      %s142 = sphi 0, %s141
      %s156 = sphi 0, %s142
      %s160 = sphi 0, %s160
      %s162 = sphi 0, %s160
      %s163 = sphi 0, %s162
      %s177 = sphi 0, %s163
      %s181 = sphi 0, %s181
      %s183 = sphi 0, %s181
      %s184 = sphi 0, %s183
      %s198 = sphi 0, %s184
      %s202 = sphi 0, %s202
      %s204 = sphi 0, %s202
      %s205 = sphi 0, %s204
      %s219 = sphi 0, %s205
      %s223 = sphi 0, %s223
      %s225 = sphi 0, %s223
      %s226 = sphi 0, %s225
      %s240 = sphi 0, %s226
      %s244 = sphi 0, %s244
      %s246 = sphi 0, %s244
      %s247 = sphi 0, %s246
      %s261 = sphi 0, %s247
      %s265 = sphi 0, %s265
      %s267 = sphi 0, %s265
      %s268 = sphi 0, %s267
      %s282 = sphi 0, %s268
      %s286 = sphi 0, %s286
      %s288 = sphi 0, %s286
      %s289 = sphi 0, %s288
      %s303 = sphi 0, %s289
      %s307 = sphi 0, %s307
      %s309 = sphi 0, %s307
      %s310 = sphi 0, %s309
      %s324 = sphi 0, %s310
      %s328 = sphi 0, %s328
      %s330 = sphi 0, %s328
      %s331 = sphi 0, %s330
      %s345 = sphi 0, %s331
      %s349 = sphi 0, %s349
      %s351 = sphi 0, %s349
      %s352 = sphi 0, %s351
      %s366 = sphi 0, %s352
      %s370 = sphi 0, %s370
      %s372 = sphi 0, %s370
      %s373 = sphi 0, %s372
      %s387 = sphi 0, %s373
      %s391 = sphi 0, %s391
      %s393 = sphi 0, %s391
      %s394 = sphi 0, %s393
      %s408 = sphi 0, %s394
      %s412 = sphi 0, %s412
      %s414 = sphi 0, %s412
      %s415 = sphi 0, %s414
      %s429 = sphi 0, %s415
      %s433 = sphi 0, %s433
      %s435 = sphi 0, %s433
      %s436 = sphi 0, %s435
      %s450 = sphi 0, %s436
      %s454 = sphi 0, %s454
      %s456 = sphi 0, %s454
      %s457 = sphi 0, %s456
      %s471 = sphi 0, %s457
      %s477 = sphi 0, %s479
      %s480 = sphi 0, %s477
      %s481 = sphi 0, %s480
      %s497 = sphi 0, %s481
      %s503 = sphi 0, %s505
      %s506 = sphi 0, %s503
      %s507 = sphi 0, %s506
      %s523 = sphi 0, %s507
    $region4: #{tpu_custom_call.1} parent=1 // loop_header_branch
      %45 = sbr.rel (%p43) target = $region8
    $region5: #{tpu_custom_call.1} parent=1 // loop_body
      %s47 = ssub.s32 %s42, 1
      %s48 = ssub.s32 %s42, 2
      %s49 = sadd.s32 %s42, 1
      %s50 = ssub.s32 %s42, %s49
      %p51 = scmp.eq.s32.totalorder %s50, 0
      %s53 = sadd.s32 %s52, 1
      %s54 = scalar_select %p51, %s52, %s53
      %p57 = pneg %p51
      %p58 = scmp.eq.s32.totalorder %s42, 1
      %p59 = por %p57, %p58
      %p60 = scmp.ne.s32.totalorder %s52, %s55
      %p61 = scmp.eq.s32.totalorder %s42, 0
      %p62 = por %p60, %p61
      %p63 = scmp.ne.s32.totalorder %s52, %s55
      %p64 = scmp.eq.s32.totalorder %s47, 1
      %p65 = por %p63, %p64
      %p66 = scmp.ne.s32.totalorder %s55, %s56
      %p67 = scmp.eq.s32.totalorder %s47, 0
      %p68 = por %p66, %p67
      %p69 = scmp.ne.s32.totalorder %s55, %s56
      %p70 = scmp.eq.s32.totalorder %s48, 1
      %p71 = por %p69, %p70
      %p73 = scmp.ne.s32.totalorder %s56, %s72
      %p74 = scmp.eq.s32.totalorder %s48, 0
      %p75 = por %p73, %p74
      %s77 = sadd.s32 %s76, 1
      %p80 = scmp.eq.s32.totalorder %s42, 1
      %p81 = scmp.ne.s32.totalorder %s76, %s78
      %p82 = scmp.eq.s32.totalorder %s42, 0
      %p83 = por %p81, %p82
      %p84 = scmp.ne.s32.totalorder %s76, %s78
      %p85 = scmp.eq.s32.totalorder %s47, 1
      %p86 = por %p84, %p85
      %p87 = scmp.ne.s32.totalorder %s78, %s79
      %p88 = scmp.eq.s32.totalorder %s47, 0
      %p89 = por %p87, %p88
      %p90 = scmp.ne.s32.totalorder %s78, %s79
      %p91 = scmp.eq.s32.totalorder %s48, 1
      %p92 = por %p90, %p91
      %p94 = scmp.ne.s32.totalorder %s79, %s93
      %p95 = scmp.eq.s32.totalorder %s48, 0
      %p96 = por %p94, %p95
      %s98 = sadd.s32 %s97, 1
      %p101 = scmp.eq.s32.totalorder %s42, 1
      %p102 = scmp.ne.s32.totalorder %s97, %s99
      %p103 = scmp.eq.s32.totalorder %s42, 0
      %p104 = por %p102, %p103
      %p105 = scmp.ne.s32.totalorder %s97, %s99
      %p106 = scmp.eq.s32.totalorder %s47, 1
      %p107 = por %p105, %p106
      %p108 = scmp.ne.s32.totalorder %s99, %s100
      %p109 = scmp.eq.s32.totalorder %s47, 0
      %p110 = por %p108, %p109
      %p111 = scmp.ne.s32.totalorder %s99, %s100
      %p112 = scmp.eq.s32.totalorder %s48, 1
      %p113 = por %p111, %p112
      %p115 = scmp.ne.s32.totalorder %s100, %s114
      %p116 = scmp.eq.s32.totalorder %s48, 0
      %p117 = por %p115, %p116
      %s119 = sadd.s32 %s118, 1
      %p122 = scmp.eq.s32.totalorder %s42, 1
      %p123 = scmp.ne.s32.totalorder %s118, %s120
      %p124 = scmp.eq.s32.totalorder %s42, 0
      %p125 = por %p123, %p124
      %p126 = scmp.ne.s32.totalorder %s118, %s120
      %p127 = scmp.eq.s32.totalorder %s47, 1
      %p128 = por %p126, %p127
      %p129 = scmp.ne.s32.totalorder %s120, %s121
      %p130 = scmp.eq.s32.totalorder %s47, 0
      %p131 = por %p129, %p130
      %p132 = scmp.ne.s32.totalorder %s120, %s121
      %p133 = scmp.eq.s32.totalorder %s48, 1
      %p134 = por %p132, %p133
      %p136 = scmp.ne.s32.totalorder %s121, %s135
      %p137 = scmp.eq.s32.totalorder %s48, 0
      %p138 = por %p136, %p137
      %s140 = sadd.s32 %s139, 1
      %p143 = scmp.eq.s32.totalorder %s42, 1
      %p144 = scmp.ne.s32.totalorder %s139, %s141
      %p145 = scmp.eq.s32.totalorder %s42, 0
      %p146 = por %p144, %p145
      %p147 = scmp.ne.s32.totalorder %s139, %s141
      %p148 = scmp.eq.s32.totalorder %s47, 1
      %p149 = por %p147, %p148
      %p150 = scmp.ne.s32.totalorder %s141, %s142
      %p151 = scmp.eq.s32.totalorder %s47, 0
      %p152 = por %p150, %p151
      %p153 = scmp.ne.s32.totalorder %s141, %s142
      %p154 = scmp.eq.s32.totalorder %s48, 1
      %p155 = por %p153, %p154
      %p157 = scmp.ne.s32.totalorder %s142, %s156
      %p158 = scmp.eq.s32.totalorder %s48, 0
      %p159 = por %p157, %p158
      %s161 = sadd.s32 %s160, 1
      %p164 = scmp.eq.s32.totalorder %s42, 1
      %p165 = scmp.ne.s32.totalorder %s160, %s162
      %p166 = scmp.eq.s32.totalorder %s42, 0
      %p167 = por %p165, %p166
      %p168 = scmp.ne.s32.totalorder %s160, %s162
      %p169 = scmp.eq.s32.totalorder %s47, 1
      %p170 = por %p168, %p169
      %p171 = scmp.ne.s32.totalorder %s162, %s163
      %p172 = scmp.eq.s32.totalorder %s47, 0
      %p173 = por %p171, %p172
      %p174 = scmp.ne.s32.totalorder %s162, %s163
      %p175 = scmp.eq.s32.totalorder %s48, 1
      %p176 = por %p174, %p175
      %p178 = scmp.ne.s32.totalorder %s163, %s177
      %p179 = scmp.eq.s32.totalorder %s48, 0
      %p180 = por %p178, %p179
      %s182 = sadd.s32 %s181, 1
      %p185 = scmp.eq.s32.totalorder %s42, 1
      %p186 = scmp.ne.s32.totalorder %s181, %s183
      %p187 = scmp.eq.s32.totalorder %s42, 0
      %p188 = por %p186, %p187
      %p189 = scmp.ne.s32.totalorder %s181, %s183
      %p190 = scmp.eq.s32.totalorder %s47, 1
      %p191 = por %p189, %p190
      %p192 = scmp.ne.s32.totalorder %s183, %s184
      %p193 = scmp.eq.s32.totalorder %s47, 0
      %p194 = por %p192, %p193
      %p195 = scmp.ne.s32.totalorder %s183, %s184
      %p196 = scmp.eq.s32.totalorder %s48, 1
      %p197 = por %p195, %p196
      %p199 = scmp.ne.s32.totalorder %s184, %s198
      %p200 = scmp.eq.s32.totalorder %s48, 0
      %p201 = por %p199, %p200
      %s203 = sadd.s32 %s202, 1
      %p206 = scmp.eq.s32.totalorder %s42, 1
      %p207 = scmp.ne.s32.totalorder %s202, %s204
      %p208 = scmp.eq.s32.totalorder %s42, 0
      %p209 = por %p207, %p208
      %p210 = scmp.ne.s32.totalorder %s202, %s204
      %p211 = scmp.eq.s32.totalorder %s47, 1
      %p212 = por %p210, %p211
      %p213 = scmp.ne.s32.totalorder %s204, %s205
      %p214 = scmp.eq.s32.totalorder %s47, 0
      %p215 = por %p213, %p214
      %p216 = scmp.ne.s32.totalorder %s204, %s205
      %p217 = scmp.eq.s32.totalorder %s48, 1
      %p218 = por %p216, %p217
      %p220 = scmp.ne.s32.totalorder %s205, %s219
      %p221 = scmp.eq.s32.totalorder %s48, 0
      %p222 = por %p220, %p221
      %s224 = sadd.s32 %s223, 1
      %p227 = scmp.eq.s32.totalorder %s42, 1
      %p228 = scmp.ne.s32.totalorder %s223, %s225
      %p229 = scmp.eq.s32.totalorder %s42, 0
      %p230 = por %p228, %p229
      %p231 = scmp.ne.s32.totalorder %s223, %s225
      %p232 = scmp.eq.s32.totalorder %s47, 1
      %p233 = por %p231, %p232
      %p234 = scmp.ne.s32.totalorder %s225, %s226
      %p235 = scmp.eq.s32.totalorder %s47, 0
      %p236 = por %p234, %p235
      %p237 = scmp.ne.s32.totalorder %s225, %s226
      %p238 = scmp.eq.s32.totalorder %s48, 1
      %p239 = por %p237, %p238
      %p241 = scmp.ne.s32.totalorder %s226, %s240
      %p242 = scmp.eq.s32.totalorder %s48, 0
      %p243 = por %p241, %p242
      %s245 = sadd.s32 %s244, 1
      %p248 = scmp.eq.s32.totalorder %s42, 1
      %p249 = scmp.ne.s32.totalorder %s244, %s246
      %p250 = scmp.eq.s32.totalorder %s42, 0
      %p251 = por %p249, %p250
      %p252 = scmp.ne.s32.totalorder %s244, %s246
      %p253 = scmp.eq.s32.totalorder %s47, 1
      %p254 = por %p252, %p253
      %p255 = scmp.ne.s32.totalorder %s246, %s247
      %p256 = scmp.eq.s32.totalorder %s47, 0
      %p257 = por %p255, %p256
      %p258 = scmp.ne.s32.totalorder %s246, %s247
      %p259 = scmp.eq.s32.totalorder %s48, 1
      %p260 = por %p258, %p259
      %p262 = scmp.ne.s32.totalorder %s247, %s261
      %p263 = scmp.eq.s32.totalorder %s48, 0
      %p264 = por %p262, %p263
      %s266 = sadd.s32 %s265, 1
      %p269 = scmp.eq.s32.totalorder %s42, 1
      %p270 = scmp.ne.s32.totalorder %s265, %s267
      %p271 = scmp.eq.s32.totalorder %s42, 0
      %p272 = por %p270, %p271
      %p273 = scmp.ne.s32.totalorder %s265, %s267
      %p274 = scmp.eq.s32.totalorder %s47, 1
      %p275 = por %p273, %p274
      %p276 = scmp.ne.s32.totalorder %s267, %s268
      %p277 = scmp.eq.s32.totalorder %s47, 0
      %p278 = por %p276, %p277
      %p279 = scmp.ne.s32.totalorder %s267, %s268
      %p280 = scmp.eq.s32.totalorder %s48, 1
      %p281 = por %p279, %p280
      %p283 = scmp.ne.s32.totalorder %s268, %s282
      %p284 = scmp.eq.s32.totalorder %s48, 0
      %p285 = por %p283, %p284
      %s287 = sadd.s32 %s286, 1
      %p290 = scmp.eq.s32.totalorder %s42, 1
      %p291 = scmp.ne.s32.totalorder %s286, %s288
      %p292 = scmp.eq.s32.totalorder %s42, 0
      %p293 = por %p291, %p292
      %p294 = scmp.ne.s32.totalorder %s286, %s288
      %p295 = scmp.eq.s32.totalorder %s47, 1
      %p296 = por %p294, %p295
      %p297 = scmp.ne.s32.totalorder %s288, %s289
      %p298 = scmp.eq.s32.totalorder %s47, 0
      %p299 = por %p297, %p298
      %p300 = scmp.ne.s32.totalorder %s288, %s289
      %p301 = scmp.eq.s32.totalorder %s48, 1
      %p302 = por %p300, %p301
      %p304 = scmp.ne.s32.totalorder %s289, %s303
      %p305 = scmp.eq.s32.totalorder %s48, 0
      %p306 = por %p304, %p305
      %s308 = sadd.s32 %s307, 1
      %p311 = scmp.eq.s32.totalorder %s42, 1
      %p312 = scmp.ne.s32.totalorder %s307, %s309
      %p313 = scmp.eq.s32.totalorder %s42, 0
      %p314 = por %p312, %p313
      %p315 = scmp.ne.s32.totalorder %s307, %s309
      %p316 = scmp.eq.s32.totalorder %s47, 1
      %p317 = por %p315, %p316
      %p318 = scmp.ne.s32.totalorder %s309, %s310
      %p319 = scmp.eq.s32.totalorder %s47, 0
      %p320 = por %p318, %p319
      %p321 = scmp.ne.s32.totalorder %s309, %s310
      %p322 = scmp.eq.s32.totalorder %s48, 1
      %p323 = por %p321, %p322
      %p325 = scmp.ne.s32.totalorder %s310, %s324
      %p326 = scmp.eq.s32.totalorder %s48, 0
      %p327 = por %p325, %p326
      %s329 = sadd.s32 %s328, 1
      %p332 = scmp.eq.s32.totalorder %s42, 1
      %p333 = scmp.ne.s32.totalorder %s328, %s330
      %p334 = scmp.eq.s32.totalorder %s42, 0
      %p335 = por %p333, %p334
      %p336 = scmp.ne.s32.totalorder %s328, %s330
      %p337 = scmp.eq.s32.totalorder %s47, 1
      %p338 = por %p336, %p337
      %p339 = scmp.ne.s32.totalorder %s330, %s331
      %p340 = scmp.eq.s32.totalorder %s47, 0
      %p341 = por %p339, %p340
      %p342 = scmp.ne.s32.totalorder %s330, %s331
      %p343 = scmp.eq.s32.totalorder %s48, 1
      %p344 = por %p342, %p343
      %p346 = scmp.ne.s32.totalorder %s331, %s345
      %p347 = scmp.eq.s32.totalorder %s48, 0
      %p348 = por %p346, %p347
      %s350 = sadd.s32 %s349, 1
      %p353 = scmp.eq.s32.totalorder %s42, 1
      %p354 = scmp.ne.s32.totalorder %s349, %s351
      %p355 = scmp.eq.s32.totalorder %s42, 0
      %p356 = por %p354, %p355
      %p357 = scmp.ne.s32.totalorder %s349, %s351
      %p358 = scmp.eq.s32.totalorder %s47, 1
      %p359 = por %p357, %p358
      %p360 = scmp.ne.s32.totalorder %s351, %s352
      %p361 = scmp.eq.s32.totalorder %s47, 0
      %p362 = por %p360, %p361
      %p363 = scmp.ne.s32.totalorder %s351, %s352
      %p364 = scmp.eq.s32.totalorder %s48, 1
      %p365 = por %p363, %p364
      %p367 = scmp.ne.s32.totalorder %s352, %s366
      %p368 = scmp.eq.s32.totalorder %s48, 0
      %p369 = por %p367, %p368
      %s371 = sadd.s32 %s370, 1
      %p374 = scmp.eq.s32.totalorder %s42, 1
      %p375 = scmp.ne.s32.totalorder %s370, %s372
      %p376 = scmp.eq.s32.totalorder %s42, 0
      %p377 = por %p375, %p376
      %p378 = scmp.ne.s32.totalorder %s370, %s372
      %p379 = scmp.eq.s32.totalorder %s47, 1
      %p380 = por %p378, %p379
      %p381 = scmp.ne.s32.totalorder %s372, %s373
      %p382 = scmp.eq.s32.totalorder %s47, 0
      %p383 = por %p381, %p382
      %p384 = scmp.ne.s32.totalorder %s372, %s373
      %p385 = scmp.eq.s32.totalorder %s48, 1
      %p386 = por %p384, %p385
      %p388 = scmp.ne.s32.totalorder %s373, %s387
      %p389 = scmp.eq.s32.totalorder %s48, 0
      %p390 = por %p388, %p389
      %s392 = sadd.s32 %s391, 1
      %p395 = scmp.eq.s32.totalorder %s42, 1
      %p396 = scmp.ne.s32.totalorder %s391, %s393
      %p397 = scmp.eq.s32.totalorder %s42, 0
      %p398 = por %p396, %p397
      %p399 = scmp.ne.s32.totalorder %s391, %s393
      %p400 = scmp.eq.s32.totalorder %s47, 1
      %p401 = por %p399, %p400
      %p402 = scmp.ne.s32.totalorder %s393, %s394
      %p403 = scmp.eq.s32.totalorder %s47, 0
      %p404 = por %p402, %p403
      %p405 = scmp.ne.s32.totalorder %s393, %s394
      %p406 = scmp.eq.s32.totalorder %s48, 1
      %p407 = por %p405, %p406
      %p409 = scmp.ne.s32.totalorder %s394, %s408
      %p410 = scmp.eq.s32.totalorder %s48, 0
      %p411 = por %p409, %p410
      %s413 = sadd.s32 %s412, 1
      %p416 = scmp.eq.s32.totalorder %s42, 1
      %p417 = scmp.ne.s32.totalorder %s412, %s414
      %p418 = scmp.eq.s32.totalorder %s42, 0
      %p419 = por %p417, %p418
      %p420 = scmp.ne.s32.totalorder %s412, %s414
      %p421 = scmp.eq.s32.totalorder %s47, 1
      %p422 = por %p420, %p421
      %p423 = scmp.ne.s32.totalorder %s414, %s415
      %p424 = scmp.eq.s32.totalorder %s47, 0
      %p425 = por %p423, %p424
      %p426 = scmp.ne.s32.totalorder %s414, %s415
      %p427 = scmp.eq.s32.totalorder %s48, 1
      %p428 = por %p426, %p427
      %p430 = scmp.ne.s32.totalorder %s415, %s429
      %p431 = scmp.eq.s32.totalorder %s48, 0
      %p432 = por %p430, %p431
      %s434 = sadd.s32 %s433, 1
      %p437 = scmp.eq.s32.totalorder %s42, 1
      %p438 = scmp.ne.s32.totalorder %s433, %s435
      %p439 = scmp.eq.s32.totalorder %s42, 0
      %p440 = por %p438, %p439
      %p441 = scmp.ne.s32.totalorder %s433, %s435
      %p442 = scmp.eq.s32.totalorder %s47, 1
      %p443 = por %p441, %p442
      %p444 = scmp.ne.s32.totalorder %s435, %s436
      %p445 = scmp.eq.s32.totalorder %s47, 0
      %p446 = por %p444, %p445
      %p447 = scmp.ne.s32.totalorder %s435, %s436
      %p448 = scmp.eq.s32.totalorder %s48, 1
      %p449 = por %p447, %p448
      %p451 = scmp.ne.s32.totalorder %s436, %s450
      %p452 = scmp.eq.s32.totalorder %s48, 0
      %p453 = por %p451, %p452
      %s455 = sadd.s32 %s454, 1
      %p458 = scmp.eq.s32.totalorder %s42, 1
      %p459 = scmp.ne.s32.totalorder %s454, %s456
      %p460 = scmp.eq.s32.totalorder %s42, 0
      %p461 = por %p459, %p460
      %p462 = scmp.ne.s32.totalorder %s454, %s456
      %p463 = scmp.eq.s32.totalorder %s47, 1
      %p464 = por %p462, %p463
      %p465 = scmp.ne.s32.totalorder %s456, %s457
      %p466 = scmp.eq.s32.totalorder %s47, 0
      %p467 = por %p465, %p466
      %p468 = scmp.ne.s32.totalorder %s456, %s457
      %p469 = scmp.eq.s32.totalorder %s48, 1
      %p470 = por %p468, %p469
      %p472 = scmp.ne.s32.totalorder %s457, %s471
      %p473 = scmp.eq.s32.totalorder %s48, 0
      %p474 = por %p472, %p473
      %s475 = ssub.s32 %s42, %s49
      %p476 = scmp.eq.s32.totalorder %s475, 0
      %s478 = sadd.s32 %s477, 1
      %s479 = scalar_select %p476, %s477, %s478
      %p482 = pneg %p476
      %p483 = scmp.eq.s32.totalorder %s42, 1
      %p484 = por %p482, %p483
      %p485 = scmp.ne.s32.totalorder %s477, %s480
      %p486 = scmp.eq.s32.totalorder %s42, 0
      %p487 = por %p485, %p486
      %p488 = scmp.ne.s32.totalorder %s477, %s480
      %p489 = scmp.eq.s32.totalorder %s47, 1
      %p490 = por %p488, %p489
      %p491 = scmp.ne.s32.totalorder %s480, %s481
      %p492 = scmp.eq.s32.totalorder %s47, 0
      %p493 = por %p491, %p492
      %p494 = scmp.ne.s32.totalorder %s480, %s481
      %p495 = scmp.eq.s32.totalorder %s48, 1
      %p496 = por %p494, %p495
      %p498 = scmp.ne.s32.totalorder %s481, %s497
      %p499 = scmp.eq.s32.totalorder %s48, 0
      %p500 = por %p498, %p499
      %s501 = ssub.s32 %s42, %s49
      %p502 = scmp.eq.s32.totalorder %s501, 0
      %s504 = sadd.s32 %s503, 1
      %s505 = scalar_select %p502, %s503, %s504
      %p508 = pneg %p502
      %p509 = scmp.eq.s32.totalorder %s42, 1
      %p510 = por %p508, %p509
      %p511 = scmp.ne.s32.totalorder %s503, %s506
      %p512 = scmp.eq.s32.totalorder %s42, 0
      %p513 = por %p511, %p512
      %p514 = scmp.ne.s32.totalorder %s503, %s506
      %p515 = scmp.eq.s32.totalorder %s47, 1
      %p516 = por %p514, %p515
      %p517 = scmp.ne.s32.totalorder %s506, %s507
      %p518 = scmp.eq.s32.totalorder %s47, 0
      %p519 = por %p517, %p518
      %p520 = scmp.ne.s32.totalorder %s506, %s507
      %p521 = scmp.eq.s32.totalorder %s48, 1
      %p522 = por %p520, %p521
      %p524 = scmp.ne.s32.totalorder %s507, %s523
      %p525 = scmp.eq.s32.totalorder %s48, 0
      %p526 = por %p524, %p525
      %p527 = scmp.le.s32.totalorder 1, %s42
      %p528 = scmp.lt.s32.totalorder %s42, 3
      %p529 = pnand %p527, %p528
      %p530 = pneg %p529
      // Predicated region
      $region9: #{tpu_custom_call.1} parent=5 // pred_check
        _
      $region10: #{tpu_custom_call.1} parent=5 // pred_check_branch
        %532 = sbr.rel (%p529) target = $region12
      $region11: #{tpu_custom_call.1} parent=5 // pred_region
        %s533 = ssub.s32 %s42, 1
        // Predicated region
        $region13: #{tpu_custom_call.1} parent=11 // pred_check
          %p534 = pneg %p89
        $region14: #{tpu_custom_call.1} parent=11 // pred_check_branch
          %536 = sbr.rel (%p534) target = $region16
        $region15: #{tpu_custom_call.1} parent=11 // pred_region
          %538 = vsyncadd [#allocation6], 0
          %s539 = sshll.u32 %s1, 4
          %s540 = int_to_ptr.hbm [resolvable:$true] %s539
          %s541 = sshll.u32 [#allocation5], 4
          %s542 = int_to_ptr.vmem [resolvable:$true] %s541
          %547 = dma.hbm_to_vmem [thread:$0]  %s540, 2048, %s542, [#allocation6], 128, 128, 8
        $region16: #{tpu_custom_call.1} parent=11 // pred_fallthru
          _
        // Predicated region
        $region17: #{tpu_custom_call.1} parent=11 // pred_check
          %p548 = pneg %p110
        $region18: #{tpu_custom_call.1} parent=11 // pred_check_branch
          %550 = sbr.rel (%p548) target = $region20
        $region19: #{tpu_custom_call.1} parent=11 // pred_region
          _
        $region20: #{tpu_custom_call.1} parent=11 // pred_fallthru
          _
        // Predicated region
        $region21: #{tpu_custom_call.1} parent=11 // pred_check
          %p551 = pneg %p131
        $region22: #{tpu_custom_call.1} parent=11 // pred_check_branch
          %553 = sbr.rel (%p551) target = $region24
        $region23: #{tpu_custom_call.1} parent=11 // pred_region
          %555 = vsyncadd [#allocation6], 0
          %s556 = sshll.u32 %s3, 4
          %s557 = int_to_ptr.hbm [resolvable:$true] %s556
          %s558 = sshll.u32 [#allocation7], 4
          %s559 = int_to_ptr.vmem [resolvable:$true] %s558
          %564 = dma.hbm_to_vmem [thread:$0]  %s557, 2048, %s559, [#allocation6], 128, 128, 8
        $region24: #{tpu_custom_call.1} parent=11 // pred_fallthru
          _
        // Predicated region
        $region25: #{tpu_custom_call.1} parent=11 // pred_check
          %p565 = pneg %p152
        $region26: #{tpu_custom_call.1} parent=11 // pred_check_branch
          %567 = sbr.rel (%p565) target = $region28
        $region27: #{tpu_custom_call.1} parent=11 // pred_region
          _
        $region28: #{tpu_custom_call.1} parent=11 // pred_fallthru
          _
        // Predicated region
        $region29: #{tpu_custom_call.1} parent=11 // pred_check
          %p568 = pneg %p173
        $region30: #{tpu_custom_call.1} parent=11 // pred_check_branch
          %570 = sbr.rel (%p568) target = $region32
        $region31: #{tpu_custom_call.1} parent=11 // pred_region
          %572 = vsyncadd [#allocation9], 0
          %s573 = sshll.u32 %s5, 4
          %s574 = int_to_ptr.hbm [resolvable:$true] %s573
          %s575 = sshll.u32 [#allocation8], 4
          %s576 = int_to_ptr.vmem [resolvable:$true] %s575
          %581 = dma.hbm_to_vmem [thread:$0]  %s574, 2048, %s576, [#allocation9], 128, 128, 8
        $region32: #{tpu_custom_call.1} parent=11 // pred_fallthru
          _
        // Predicated region
        $region33: #{tpu_custom_call.1} parent=11 // pred_check
          %p582 = pneg %p194
        $region34: #{tpu_custom_call.1} parent=11 // pred_check_branch
          %584 = sbr.rel (%p582) target = $region36
        $region35: #{tpu_custom_call.1} parent=11 // pred_region
          _
        $region36: #{tpu_custom_call.1} parent=11 // pred_fallthru
          _
        // Predicated region
        $region37: #{tpu_custom_call.1} parent=11 // pred_check
          %p585 = pneg %p215
        $region38: #{tpu_custom_call.1} parent=11 // pred_check_branch
          %587 = sbr.rel (%p585) target = $region40
        $region39: #{tpu_custom_call.1} parent=11 // pred_region
          %589 = vsyncadd [#allocation9], 0
          %s590 = sshll.u32 %s7, 4
          %s591 = int_to_ptr.hbm [resolvable:$true] %s590
          %s592 = sshll.u32 [#allocation10], 4
          %s593 = int_to_ptr.vmem [resolvable:$true] %s592
          %598 = dma.hbm_to_vmem [thread:$0]  %s591, 2048, %s593, [#allocation9], 128, 128, 8
        $region40: #{tpu_custom_call.1} parent=11 // pred_fallthru
          _
        // Predicated region
        $region41: #{tpu_custom_call.1} parent=11 // pred_check
          %p599 = pneg %p236
        $region42: #{tpu_custom_call.1} parent=11 // pred_check_branch
          %601 = sbr.rel (%p599) target = $region44
        $region43: #{tpu_custom_call.1} parent=11 // pred_region
          _
        $region44: #{tpu_custom_call.1} parent=11 // pred_fallthru
          _
        // Predicated region
        $region45: #{tpu_custom_call.1} parent=11 // pred_check
          %p602 = pneg %p257
        $region46: #{tpu_custom_call.1} parent=11 // pred_check_branch
          %604 = sbr.rel (%p602) target = $region48
        $region47: #{tpu_custom_call.1} parent=11 // pred_region
          %606 = vsyncadd [#allocation12], 0
          %s607 = sshll.u32 %s9, 4
          %s608 = int_to_ptr.hbm [resolvable:$true] %s607
          %s609 = sshll.u32 [#allocation11], 4
          %s610 = int_to_ptr.vmem [resolvable:$true] %s609
          %615 = dma.hbm_to_vmem [thread:$0]  %s608, 2048, %s610, [#allocation12], 128, 128, 8
        $region48: #{tpu_custom_call.1} parent=11 // pred_fallthru
          _
        // Predicated region
        $region49: #{tpu_custom_call.1} parent=11 // pred_check
          %p616 = pneg %p278
        $region50: #{tpu_custom_call.1} parent=11 // pred_check_branch
          %618 = sbr.rel (%p616) target = $region52
        $region51: #{tpu_custom_call.1} parent=11 // pred_region
          _
        $region52: #{tpu_custom_call.1} parent=11 // pred_fallthru
          _
        // Predicated region
        $region53: #{tpu_custom_call.1} parent=11 // pred_check
          %p619 = pneg %p299
        $region54: #{tpu_custom_call.1} parent=11 // pred_check_branch
          %621 = sbr.rel (%p619) target = $region56
        $region55: #{tpu_custom_call.1} parent=11 // pred_region
          %623 = vsyncadd [#allocation12], 0
          %s624 = sshll.u32 %s11, 4
          %s625 = int_to_ptr.hbm [resolvable:$true] %s624
          %s626 = sshll.u32 [#allocation13], 4
          %s627 = int_to_ptr.vmem [resolvable:$true] %s626
          %632 = dma.hbm_to_vmem [thread:$0]  %s625, 2048, %s627, [#allocation12], 128, 128, 8
        $region56: #{tpu_custom_call.1} parent=11 // pred_fallthru
          _
        // Predicated region
        $region57: #{tpu_custom_call.1} parent=11 // pred_check
          %p633 = pneg %p320
        $region58: #{tpu_custom_call.1} parent=11 // pred_check_branch
          %635 = sbr.rel (%p633) target = $region60
        $region59: #{tpu_custom_call.1} parent=11 // pred_region
          _
        $region60: #{tpu_custom_call.1} parent=11 // pred_fallthru
          _
        // Predicated region
        $region61: #{tpu_custom_call.1} parent=11 // pred_check
          %p636 = pneg %p341
        $region62: #{tpu_custom_call.1} parent=11 // pred_check_branch
          %638 = sbr.rel (%p636) target = $region64
        $region63: #{tpu_custom_call.1} parent=11 // pred_region
          %640 = vsyncadd [#allocation15], 0
          %s641 = sshll.u32 %s13, 4
          %s642 = int_to_ptr.hbm [resolvable:$true] %s641
          %s643 = sshll.u32 [#allocation14], 4
          %s644 = int_to_ptr.vmem [resolvable:$true] %s643
          %649 = dma.hbm_to_vmem [thread:$0]  %s642, 2048, %s644, [#allocation15], 128, 128, 8
        $region64: #{tpu_custom_call.1} parent=11 // pred_fallthru
          _
        // Predicated region
        $region65: #{tpu_custom_call.1} parent=11 // pred_check
          %p650 = pneg %p362
        $region66: #{tpu_custom_call.1} parent=11 // pred_check_branch
          %652 = sbr.rel (%p650) target = $region68
        $region67: #{tpu_custom_call.1} parent=11 // pred_region
          %654 = vsyncadd [#allocation15], 0
          %s655 = sshll.u32 %s14, 4
          %s656 = int_to_ptr.hbm [resolvable:$true] %s655
          %s657 = sshll.u32 [#allocation16], 4
          %s658 = int_to_ptr.vmem [resolvable:$true] %s657
          %663 = dma.hbm_to_vmem [thread:$0]  %s656, 2048, %s658, [#allocation15], 128, 128, 8
        $region68: #{tpu_custom_call.1} parent=11 // pred_fallthru
          _
        // Predicated region
        $region69: #{tpu_custom_call.1} parent=11 // pred_check
          %p664 = pneg %p383
        $region70: #{tpu_custom_call.1} parent=11 // pred_check_branch
          %666 = sbr.rel (%p664) target = $region72
        $region71: #{tpu_custom_call.1} parent=11 // pred_region
          _
        $region72: #{tpu_custom_call.1} parent=11 // pred_fallthru
          _
        // Predicated region
        $region73: #{tpu_custom_call.1} parent=11 // pred_check
          %p667 = pneg %p404
        $region74: #{tpu_custom_call.1} parent=11 // pred_check_branch
          %669 = sbr.rel (%p667) target = $region76
        $region75: #{tpu_custom_call.1} parent=11 // pred_region
          %671 = vsyncadd [#allocation18], 0
          %s672 = sshll.u32 %s16, 4
          %s673 = int_to_ptr.hbm [resolvable:$true] %s672
          %s674 = sshll.u32 [#allocation17], 4
          %s675 = int_to_ptr.vmem [resolvable:$true] %s674
          %680 = dma.hbm_to_vmem [thread:$0]  %s673, 2048, %s675, [#allocation18], 128, 128, 8
        $region76: #{tpu_custom_call.1} parent=11 // pred_fallthru
          _
        // Predicated region
        $region77: #{tpu_custom_call.1} parent=11 // pred_check
          %p681 = pneg %p425
        $region78: #{tpu_custom_call.1} parent=11 // pred_check_branch
          %683 = sbr.rel (%p681) target = $region80
        $region79: #{tpu_custom_call.1} parent=11 // pred_region
          _
        $region80: #{tpu_custom_call.1} parent=11 // pred_fallthru
          _
        // Predicated region
        $region81: #{tpu_custom_call.1} parent=11 // pred_check
          %p684 = pneg %p446
        $region82: #{tpu_custom_call.1} parent=11 // pred_check_branch
          %686 = sbr.rel (%p684) target = $region84
        $region83: #{tpu_custom_call.1} parent=11 // pred_region
          %688 = vsyncadd [#allocation18], 0
          %s689 = sshll.u32 %s18, 4
          %s690 = int_to_ptr.hbm [resolvable:$true] %s689
          %s691 = sshll.u32 [#allocation19], 4
          %s692 = int_to_ptr.vmem [resolvable:$true] %s691
          %697 = dma.hbm_to_vmem [thread:$0]  %s690, 2048, %s692, [#allocation18], 128, 128, 8
        $region84: #{tpu_custom_call.1} parent=11 // pred_fallthru
          _
        // Predicated region
        $region85: #{tpu_custom_call.1} parent=11 // pred_check
          %p698 = pneg %p467
        $region86: #{tpu_custom_call.1} parent=11 // pred_check_branch
          %700 = sbr.rel (%p698) target = $region88
        $region87: #{tpu_custom_call.1} parent=11 // pred_region
          _
        $region88: #{tpu_custom_call.1} parent=11 // pred_fallthru
          _
      $region12: #{tpu_custom_call.1} parent=5 // pred_fallthru
        _
      %p701 = scmp.lt.s32.totalorder %s42, 2
      // Predicated region
      $region89: #{tpu_custom_call.1} parent=5 // pred_check
        %p702 = pneg %p701
      $region90: #{tpu_custom_call.1} parent=5 // pred_check_branch
        %704 = sbr.rel (%p702) target = $region92
      $region91: #{tpu_custom_call.1} parent=5 // pred_region
        // Predicated region
        $region93: #{tpu_custom_call.1} parent=91 // pred_check
          %p705 = pneg %p62
        $region94: #{tpu_custom_call.1} parent=91 // pred_check_branch
          %707 = sbr.rel (%p705) target = $region96
        $region95: #{tpu_custom_call.1} parent=91 // pred_region
          %s708 = sand.u32 %s52, 1
          %s709 = scalar_lea.sflag [#allocation3], %s708
          %s710 = sand.u32 %s52, 1
          %s711 = smul.addr %s710, 24
          %s712 = scalar_lea.vmem [#allocation2], %s711
          %s713 = smul.u32 3, %s42
          %715 = vsyncadd %s709, 0
          %s716 = smul.addr %s713, 8
          %s717 = scalar_lea.hbm %s0, %s716
          %s718 = sshll.u32 %s717, 4
          %s719 = int_to_ptr.hbm [resolvable:$true] %s718
          %s720 = sshll.u32 %s712, 4
          %s721 = int_to_ptr.vmem [resolvable:$true] %s720
          %726 = dma.hbm_to_vmem [thread:$0]  %s719, 384, %s721, %s709, 128, 128, 8
        $region96: #{tpu_custom_call.1} parent=91 // pred_fallthru
          _
      $region92: #{tpu_custom_call.1} parent=5 // pred_fallthru
        _
      %p727 = scmp.le.s32.totalorder 1, %s42
      %p728 = scmp.lt.s32.totalorder %s42, 3
      %p729 = pnand %p727, %p728
      %p730 = pneg %p729
      // Predicated region
      $region97: #{tpu_custom_call.1} parent=5 // pred_check
        _
      $region98: #{tpu_custom_call.1} parent=5 // pred_check_branch
        %732 = sbr.rel (%p729) target = $region100
      $region99: #{tpu_custom_call.1} parent=5 // pred_region
        %s733 = ssub.s32 %s42, 1
        %s734 = sand.u32 %s55, 1
        %s735 = scalar_lea.sflag [#allocation3], %s734
        %s736 = sand.u32 %s55, 1
        %s737 = smul.addr %s736, 24
        %s738 = scalar_lea.vmem [#allocation2], %s737
        // Predicated region
        $region101: #{tpu_custom_call.1} parent=99 // pred_check
          %p739 = pneg %p68
        $region102: #{tpu_custom_call.1} parent=99 // pred_check_branch
          %741 = sbr.rel (%p739) target = $region104
        $region103: #{tpu_custom_call.1} parent=99 // pred_region
          %743 = dma.done %s735, 384
        $region104: #{tpu_custom_call.1} parent=99 // pred_fallthru
          _
        // Predicated region
        $region105: #{tpu_custom_call.1} parent=99 // pred_check
          %p744 = pneg %p89
        $region106: #{tpu_custom_call.1} parent=99 // pred_check_branch
          %746 = sbr.rel (%p744) target = $region108
        $region107: #{tpu_custom_call.1} parent=99 // pred_region
          %748 = dma.done [#allocation6], 2048
        $region108: #{tpu_custom_call.1} parent=99 // pred_fallthru
          _
        // Predicated region
        $region109: #{tpu_custom_call.1} parent=99 // pred_check
          %p749 = pneg %p131
        $region110: #{tpu_custom_call.1} parent=99 // pred_check_branch
          %751 = sbr.rel (%p749) target = $region112
        $region111: #{tpu_custom_call.1} parent=99 // pred_region
          %753 = dma.done [#allocation6], 2048
        $region112: #{tpu_custom_call.1} parent=99 // pred_fallthru
          _
        // Predicated region
        $region113: #{tpu_custom_call.1} parent=99 // pred_check
          %p754 = pneg %p173
        $region114: #{tpu_custom_call.1} parent=99 // pred_check_branch
          %756 = sbr.rel (%p754) target = $region116
        $region115: #{tpu_custom_call.1} parent=99 // pred_region
          %758 = dma.done [#allocation9], 2048
        $region116: #{tpu_custom_call.1} parent=99 // pred_fallthru
          _
        // Predicated region
        $region117: #{tpu_custom_call.1} parent=99 // pred_check
          %p759 = pneg %p215
        $region118: #{tpu_custom_call.1} parent=99 // pred_check_branch
          %761 = sbr.rel (%p759) target = $region120
        $region119: #{tpu_custom_call.1} parent=99 // pred_region
          %763 = dma.done [#allocation9], 2048
        $region120: #{tpu_custom_call.1} parent=99 // pred_fallthru
          _
        // Predicated region
        $region121: #{tpu_custom_call.1} parent=99 // pred_check
          %p764 = pneg %p257
        $region122: #{tpu_custom_call.1} parent=99 // pred_check_branch
          %766 = sbr.rel (%p764) target = $region124
        $region123: #{tpu_custom_call.1} parent=99 // pred_region
          %768 = dma.done [#allocation12], 2048
        $region124: #{tpu_custom_call.1} parent=99 // pred_fallthru
          _
        // Predicated region
        $region125: #{tpu_custom_call.1} parent=99 // pred_check
          %p769 = pneg %p299
        $region126: #{tpu_custom_call.1} parent=99 // pred_check_branch
          %771 = sbr.rel (%p769) target = $region128
        $region127: #{tpu_custom_call.1} parent=99 // pred_region
          %773 = dma.done [#allocation12], 2048
        $region128: #{tpu_custom_call.1} parent=99 // pred_fallthru
          _
        // Predicated region
        $region129: #{tpu_custom_call.1} parent=99 // pred_check
          %p774 = pneg %p341
        $region130: #{tpu_custom_call.1} parent=99 // pred_check_branch
          %776 = sbr.rel (%p774) target = $region132
        $region131: #{tpu_custom_call.1} parent=99 // pred_region
          %778 = dma.done [#allocation15], 2048
        $region132: #{tpu_custom_call.1} parent=99 // pred_fallthru
          _
        // Predicated region
        $region133: #{tpu_custom_call.1} parent=99 // pred_check
          %p779 = pneg %p362
        $region134: #{tpu_custom_call.1} parent=99 // pred_check_branch
          %781 = sbr.rel (%p779) target = $region136
        $region135: #{tpu_custom_call.1} parent=99 // pred_region
          %783 = dma.done [#allocation15], 2048
        $region136: #{tpu_custom_call.1} parent=99 // pred_fallthru
          _
        // Predicated region
        $region137: #{tpu_custom_call.1} parent=99 // pred_check
          %p784 = pneg %p404
        $region138: #{tpu_custom_call.1} parent=99 // pred_check_branch
          %786 = sbr.rel (%p784) target = $region140
        $region139: #{tpu_custom_call.1} parent=99 // pred_region
          %788 = dma.done [#allocation18], 2048
        $region140: #{tpu_custom_call.1} parent=99 // pred_fallthru
          _
        // Predicated region
        $region141: #{tpu_custom_call.1} parent=99 // pred_check
          %p789 = pneg %p446
        $region142: #{tpu_custom_call.1} parent=99 // pred_check_branch
          %791 = sbr.rel (%p789) target = $region144
        $region143: #{tpu_custom_call.1} parent=99 // pred_region
          %793 = dma.done [#allocation18], 2048
        $region144: #{tpu_custom_call.1} parent=99 // pred_fallthru
          _
        %s794 = sand.u32 %s55, 1
        %s795 = scalar_lea.sflag [#allocation3], %s794
        %s796 = sand.u32 %s55, 1
        %s797 = smul.addr %s796, 24
        %s798 = scalar_lea.vmem [#allocation2], %s797
        %p799 = pneg %p68
        %p800 = pneg %p65
        %p801 = pneg %p89
        %p802 = pneg %p86
        %p803 = pneg %p110
        %p804 = pneg %p107
        %p805 = pneg %p131
        %p806 = pneg %p128
        %p807 = pneg %p152
        %p808 = pneg %p149
        %p809 = pneg %p173
        %p810 = pneg %p170
        %p811 = pneg %p194
        %p812 = pneg %p191
        %p813 = pneg %p215
        %p814 = pneg %p212
        %p815 = pneg %p236
        %p816 = pneg %p233
        %p817 = pneg %p257
        %p818 = pneg %p254
        %p819 = pneg %p278
        %p820 = pneg %p275
        %p821 = pneg %p299
        %p822 = pneg %p296
        %p823 = pneg %p320
        %p824 = pneg %p317
        %p825 = pneg %p341
        %p826 = pneg %p338
        %p827 = pneg %p362
        %p828 = pneg %p359
        %p829 = pneg %p383
        %p830 = pneg %p380
        %p831 = pneg %p404
        %p832 = pneg %p401
        %p833 = pneg %p425
        %p834 = pneg %p422
        %p835 = pneg %p446
        %p836 = pneg %p443
        %p837 = pneg %p467
        %p838 = pneg %p464
        %p839 = pneg %p493
        %p840 = pneg %p490
        %s841 = sand.u32 %s480, 1
        %s842 = scalar_lea.sflag [#allocation4], %s841
        %s843 = sand.u32 %s480, 1
        %s844 = smul.addr %s843, 24
        %s845 = scalar_lea.vmem [#allocation20], %s844
        %p846 = pneg %p519
        %p847 = pneg %p516
        %s848 = sand.u32 %s506, 1
        %s849 = scalar_lea.sflag [#allocation22], %s848
        %s850 = sand.u32 %s506, 1
        %s851 = smul.addr %s850, 24
        %s852 = scalar_lea.vmem [#allocation21], %s851
        %s853 = smul.u32 3, %s47
        %s854 = smul.u32 3, %s47
        %s855 = smul.u32 3, %s47
        %v856 = vld [vmem:[%s738] sm:$0xff]
        %v857 = vld [vmem:[%s738 + $0x8] sm:$0xff]
        %v858 = vld [vmem:[%s738 + $0x10] sm:$0xff]
        %v859 = vld [vmem:[#allocation5] sm:$0xff]
        %v860 = vld [vmem:[#allocation5 + $0x8] sm:$0xff]
        %v861 = vld [vmem:[#allocation5 + $0x10] sm:$0xff]
        %v862 = vld [vmem:[#allocation5 + $0x18] sm:$0xff]
        %v863 = vld [vmem:[#allocation5 + $0x20] sm:$0xff]
        %v864 = vld [vmem:[#allocation5 + $0x28] sm:$0xff]
        %v865 = vld [vmem:[#allocation5 + $0x30] sm:$0xff]
        %v866 = vld [vmem:[#allocation5 + $0x38] sm:$0xff]
        %v867 = vld [vmem:[#allocation5 + $0x40] sm:$0xff]
        %v868 = vld [vmem:[#allocation5 + $0x48] sm:$0xff]
        %v869 = vld [vmem:[#allocation5 + $0x50] sm:$0xff]
        %v870 = vld [vmem:[#allocation5 + $0x58] sm:$0xff]
        %v871 = vld [vmem:[#allocation5 + $0x60] sm:$0xff]
        %v872 = vld [vmem:[#allocation5 + $0x68] sm:$0xff]
        %v873 = vld [vmem:[#allocation5 + $0x70] sm:$0xff]
        %v874 = vld [vmem:[#allocation5 + $0x78] sm:$0xff]
        %v875 = vld [vmem:[%s2] sm:$0x1]
        %v877 = vperm.slane %v875, 0
        %v879 = vand.u32 %v874, 4294901760
        %880 = vmatpush.msra.mxu0 %v879
        %v881 = vand.u32 %v873, 4294901760
        %882 = vmatpush.msra.mxu0 %v881
        %v883 = vand.u32 %v872, 4294901760
        %884 = vmatpush.msra.mxu0 %v883
        %v885 = vand.u32 %v871, 4294901760
        %886 = vmatpush.msra.mxu0 %v885
        %v887 = vand.u32 %v870, 4294901760
        %888 = vmatpush.msra.mxu0 %v887
        %v889 = vand.u32 %v869, 4294901760
        %890 = vmatpush.msra.mxu0 %v889
        %v891 = vand.u32 %v868, 4294901760
        %892 = vmatpush.msra.mxu0 %v891
        %v893 = vand.u32 %v867, 4294901760
        %894 = vmatpush.msra.mxu0 %v893
        %v895 = vand.u32 %v866, 4294901760
        %896 = vmatpush.msra.mxu0 %v895
        %v897 = vand.u32 %v865, 4294901760
        %898 = vmatpush.msra.mxu0 %v897
        %v899 = vand.u32 %v864, 4294901760
        %900 = vmatpush.msra.mxu0 %v899
        %v901 = vand.u32 %v863, 4294901760
        %902 = vmatpush.msra.mxu0 %v901
        %v903 = vand.u32 %v862, 4294901760
        %904 = vmatpush.msra.mxu0 %v903
        %v905 = vand.u32 %v861, 4294901760
        %906 = vmatpush.msra.mxu0 %v905
        %v907 = vand.u32 %v860, 4294901760
        %908 = vmatpush.msra.mxu0 %v907
        %v909 = vand.u32 %v859, 4294901760
        %910 = vmatpush.msra.mxu0 %v909
        %v911 = vand.u32 %v856, 4294901760
        %v912 = vsub.f32 %v856, %v911
        %v913 = vand.u32 %v912, 4294901760
        %v914 = vsub.f32 %v912, %v913
        %v915 = vand.u32 %v914, 4294901760
        %916 = vmatmul.f32.gmra.mxu0 %v915
        %v917 = vpop.f32.mrf.mxu0
        %v918 = vadd.f32 %v877, %v917
        %v919 = vand.u32 %v857, 4294901760
        %v920 = vsub.f32 %v857, %v919
        %v921 = vand.u32 %v920, 4294901760
        %v922 = vsub.f32 %v920, %v921
        %v923 = vand.u32 %v922, 4294901760
        %924 = vmatmul.f32.gmra.mxu0 %v923
        %v925 = vpop.f32.mrf.mxu0
        %v926 = vadd.f32 %v877, %v925
        %v927 = vand.u32 %v858, 4294901760
        %v928 = vsub.f32 %v858, %v927
        %v929 = vand.u32 %v928, 4294901760
        %v930 = vsub.f32 %v928, %v929
        %v931 = vand.u32 %v930, 4294901760
        %932 = vmatmul.f32.gmra.mxu0 %v931
        %v933 = vpop.f32.mrf.mxu0
        %v934 = vadd.f32 %v877, %v933
        %935 = vdwg.mxu0
        %v936 = vand.u32 %v874, 4294901760
        %v937 = vsub.f32 %v874, %v936
        %v938 = vand.u32 %v937, 4294901760
        %v939 = vsub.f32 %v937, %v938
        %v940 = vand.u32 %v939, 4294901760
        %941 = vmatpush.msra.mxu0 %v940
        %v942 = vand.u32 %v873, 4294901760
        %v943 = vsub.f32 %v873, %v942
        %v944 = vand.u32 %v943, 4294901760
        %v945 = vsub.f32 %v943, %v944
        %v946 = vand.u32 %v945, 4294901760
        %947 = vmatpush.msra.mxu0 %v946
        %v948 = vand.u32 %v872, 4294901760
        %v949 = vsub.f32 %v872, %v948
        %v950 = vand.u32 %v949, 4294901760
        %v951 = vsub.f32 %v949, %v950
        %v952 = vand.u32 %v951, 4294901760
        %953 = vmatpush.msra.mxu0 %v952
        %v954 = vand.u32 %v871, 4294901760
        %v955 = vsub.f32 %v871, %v954
        %v956 = vand.u32 %v955, 4294901760
        %v957 = vsub.f32 %v955, %v956
        %v958 = vand.u32 %v957, 4294901760
        %959 = vmatpush.msra.mxu0 %v958
        %v960 = vand.u32 %v870, 4294901760
        %v961 = vsub.f32 %v870, %v960
        %v962 = vand.u32 %v961, 4294901760
        %v963 = vsub.f32 %v961, %v962
        %v964 = vand.u32 %v963, 4294901760
        %965 = vmatpush.msra.mxu0 %v964
        %v966 = vand.u32 %v869, 4294901760
        %v967 = vsub.f32 %v869, %v966
        %v968 = vand.u32 %v967, 4294901760
        %v969 = vsub.f32 %v967, %v968
        %v970 = vand.u32 %v969, 4294901760
        %971 = vmatpush.msra.mxu0 %v970
        %v972 = vand.u32 %v868, 4294901760
        %v973 = vsub.f32 %v868, %v972
        %v974 = vand.u32 %v973, 4294901760
        %v975 = vsub.f32 %v973, %v974
        %v976 = vand.u32 %v975, 4294901760
        %977 = vmatpush.msra.mxu0 %v976
        %v978 = vand.u32 %v867, 4294901760
        %v979 = vsub.f32 %v867, %v978
        %v980 = vand.u32 %v979, 4294901760
        %v981 = vsub.f32 %v979, %v980
        %v982 = vand.u32 %v981, 4294901760
        %983 = vmatpush.msra.mxu0 %v982
        %v984 = vand.u32 %v866, 4294901760
        %v985 = vsub.f32 %v866, %v984
        %v986 = vand.u32 %v985, 4294901760
        %v987 = vsub.f32 %v985, %v986
        %v988 = vand.u32 %v987, 4294901760
        %989 = vmatpush.msra.mxu0 %v988
        %v990 = vand.u32 %v865, 4294901760
        %v991 = vsub.f32 %v865, %v990
        %v992 = vand.u32 %v991, 4294901760
        %v993 = vsub.f32 %v991, %v992
        %v994 = vand.u32 %v993, 4294901760
        %995 = vmatpush.msra.mxu0 %v994
        %v996 = vand.u32 %v864, 4294901760
        %v997 = vsub.f32 %v864, %v996
        %v998 = vand.u32 %v997, 4294901760
        %v999 = vsub.f32 %v997, %v998
        %v1000 = vand.u32 %v999, 4294901760
        %1001 = vmatpush.msra.mxu0 %v1000
        %v1002 = vand.u32 %v863, 4294901760
        %v1003 = vsub.f32 %v863, %v1002
        %v1004 = vand.u32 %v1003, 4294901760
        %v1005 = vsub.f32 %v1003, %v1004
        %v1006 = vand.u32 %v1005, 4294901760
        %1007 = vmatpush.msra.mxu0 %v1006
        %v1008 = vand.u32 %v862, 4294901760
        %v1009 = vsub.f32 %v862, %v1008
        %v1010 = vand.u32 %v1009, 4294901760
        %v1011 = vsub.f32 %v1009, %v1010
        %v1012 = vand.u32 %v1011, 4294901760
        %1013 = vmatpush.msra.mxu0 %v1012
        %v1014 = vand.u32 %v861, 4294901760
        %v1015 = vsub.f32 %v861, %v1014
        %v1016 = vand.u32 %v1015, 4294901760
        %v1017 = vsub.f32 %v1015, %v1016
        %v1018 = vand.u32 %v1017, 4294901760
        %1019 = vmatpush.msra.mxu0 %v1018
        %v1020 = vand.u32 %v860, 4294901760
        %v1021 = vsub.f32 %v860, %v1020
        %v1022 = vand.u32 %v1021, 4294901760
        %v1023 = vsub.f32 %v1021, %v1022
        %v1024 = vand.u32 %v1023, 4294901760
        %1025 = vmatpush.msra.mxu0 %v1024
        %v1026 = vand.u32 %v859, 4294901760
        %v1027 = vsub.f32 %v859, %v1026
        %v1028 = vand.u32 %v1027, 4294901760
        %v1029 = vsub.f32 %v1027, %v1028
        %v1030 = vand.u32 %v1029, 4294901760
        %1031 = vmatpush.msra.mxu0 %v1030
        %v1032 = vand.u32 %v856, 4294901760
        %1033 = vmatmul.f32.gmra.mxu0 %v1032
        %v1034 = vpop.f32.mrf.mxu0
        %v1035 = vadd.f32 %v918, %v1034
        %v1036 = vand.u32 %v857, 4294901760
        %1037 = vmatmul.f32.gmra.mxu0 %v1036
        %v1038 = vpop.f32.mrf.mxu0
        %v1039 = vadd.f32 %v926, %v1038
        %v1040 = vand.u32 %v858, 4294901760
        %1041 = vmatmul.f32.gmra.mxu0 %v1040
        %v1042 = vpop.f32.mrf.mxu0
        %v1043 = vadd.f32 %v934, %v1042
        %1044 = vdwg.mxu0
        %v1045 = vand.u32 %v874, 4294901760
        %v1046 = vsub.f32 %v874, %v1045
        %1047 = vmatpush.msra.mxu0 %v1046
        %v1048 = vand.u32 %v873, 4294901760
        %v1049 = vsub.f32 %v873, %v1048
        %1050 = vmatpush.msra.mxu0 %v1049
        %v1051 = vand.u32 %v872, 4294901760
        %v1052 = vsub.f32 %v872, %v1051
        %1053 = vmatpush.msra.mxu0 %v1052
        %v1054 = vand.u32 %v871, 4294901760
        %v1055 = vsub.f32 %v871, %v1054
        %1056 = vmatpush.msra.mxu0 %v1055
        %v1057 = vand.u32 %v870, 4294901760
        %v1058 = vsub.f32 %v870, %v1057
        %1059 = vmatpush.msra.mxu0 %v1058
        %v1060 = vand.u32 %v869, 4294901760
        %v1061 = vsub.f32 %v869, %v1060
        %1062 = vmatpush.msra.mxu0 %v1061
        %v1063 = vand.u32 %v868, 4294901760
        %v1064 = vsub.f32 %v868, %v1063
        %1065 = vmatpush.msra.mxu0 %v1064
        %v1066 = vand.u32 %v867, 4294901760
        %v1067 = vsub.f32 %v867, %v1066
        %1068 = vmatpush.msra.mxu0 %v1067
        %v1069 = vand.u32 %v866, 4294901760
        %v1070 = vsub.f32 %v866, %v1069
        %1071 = vmatpush.msra.mxu0 %v1070
        %v1072 = vand.u32 %v865, 4294901760
        %v1073 = vsub.f32 %v865, %v1072
        %1074 = vmatpush.msra.mxu0 %v1073
        %v1075 = vand.u32 %v864, 4294901760
        %v1076 = vsub.f32 %v864, %v1075
        %1077 = vmatpush.msra.mxu0 %v1076
        %v1078 = vand.u32 %v863, 4294901760
        %v1079 = vsub.f32 %v863, %v1078
        %1080 = vmatpush.msra.mxu0 %v1079
        %v1081 = vand.u32 %v862, 4294901760
        %v1082 = vsub.f32 %v862, %v1081
        %1083 = vmatpush.msra.mxu0 %v1082
        %v1084 = vand.u32 %v861, 4294901760
        %v1085 = vsub.f32 %v861, %v1084
        %1086 = vmatpush.msra.mxu0 %v1085
        %v1087 = vand.u32 %v860, 4294901760
        %v1088 = vsub.f32 %v860, %v1087
        %1089 = vmatpush.msra.mxu0 %v1088
        %v1090 = vand.u32 %v859, 4294901760
        %v1091 = vsub.f32 %v859, %v1090
        %1092 = vmatpush.msra.mxu0 %v1091
        %v1093 = vand.u32 %v856, 4294901760
        %v1094 = vsub.f32 %v856, %v1093
        %1095 = vmatmul.f32.gmra.mxu0 %v1094
        %v1096 = vpop.f32.mrf.mxu0
        %v1097 = vadd.f32 %v1035, %v1096
        %v1098 = vand.u32 %v857, 4294901760
        %v1099 = vsub.f32 %v857, %v1098
        %1100 = vmatmul.f32.gmra.mxu0 %v1099
        %v1101 = vpop.f32.mrf.mxu0
        %v1102 = vadd.f32 %v1039, %v1101
        %v1103 = vand.u32 %v858, 4294901760
        %v1104 = vsub.f32 %v858, %v1103
        %1105 = vmatmul.f32.gmra.mxu0 %v1104
        %v1106 = vpop.f32.mrf.mxu0
        %v1107 = vadd.f32 %v1043, %v1106
        %1108 = vdwg.mxu0
        %v1109 = vand.u32 %v874, 4294901760
        %1110 = vmatpush.msra.mxu0 %v1109
        %v1111 = vand.u32 %v873, 4294901760
        %1112 = vmatpush.msra.mxu0 %v1111
        %v1113 = vand.u32 %v872, 4294901760
        %1114 = vmatpush.msra.mxu0 %v1113
        %v1115 = vand.u32 %v871, 4294901760
        %1116 = vmatpush.msra.mxu0 %v1115
        %v1117 = vand.u32 %v870, 4294901760
        %1118 = vmatpush.msra.mxu0 %v1117
        %v1119 = vand.u32 %v869, 4294901760
        %1120 = vmatpush.msra.mxu0 %v1119
        %v1121 = vand.u32 %v868, 4294901760
        %1122 = vmatpush.msra.mxu0 %v1121
        %v1123 = vand.u32 %v867, 4294901760
        %1124 = vmatpush.msra.mxu0 %v1123
        %v1125 = vand.u32 %v866, 4294901760
        %1126 = vmatpush.msra.mxu0 %v1125
        %v1127 = vand.u32 %v865, 4294901760
        %1128 = vmatpush.msra.mxu0 %v1127
        %v1129 = vand.u32 %v864, 4294901760
        %1130 = vmatpush.msra.mxu0 %v1129
        %v1131 = vand.u32 %v863, 4294901760
        %1132 = vmatpush.msra.mxu0 %v1131
        %v1133 = vand.u32 %v862, 4294901760
        %1134 = vmatpush.msra.mxu0 %v1133
        %v1135 = vand.u32 %v861, 4294901760
        %1136 = vmatpush.msra.mxu0 %v1135
        %v1137 = vand.u32 %v860, 4294901760
        %1138 = vmatpush.msra.mxu0 %v1137
        %v1139 = vand.u32 %v859, 4294901760
        %1140 = vmatpush.msra.mxu0 %v1139
        %v1141 = vand.u32 %v856, 4294901760
        %v1142 = vsub.f32 %v856, %v1141
        %v1143 = vand.u32 %v1142, 4294901760
        %1144 = vmatmul.f32.gmra.mxu0 %v1143
        %v1145 = vpop.f32.mrf.mxu0
        %v1146 = vadd.f32 %v1097, %v1145
        %v1147 = vand.u32 %v857, 4294901760
        %v1148 = vsub.f32 %v857, %v1147
        %v1149 = vand.u32 %v1148, 4294901760
        %1150 = vmatmul.f32.gmra.mxu0 %v1149
        %v1151 = vpop.f32.mrf.mxu0
        %v1152 = vadd.f32 %v1102, %v1151
        %v1153 = vand.u32 %v858, 4294901760
        %v1154 = vsub.f32 %v858, %v1153
        %v1155 = vand.u32 %v1154, 4294901760
        %1156 = vmatmul.f32.gmra.mxu0 %v1155
        %v1157 = vpop.f32.mrf.mxu0
        %v1158 = vadd.f32 %v1107, %v1157
        %1159 = vdwg.mxu0
        %v1160 = vand.u32 %v874, 4294901760
        %v1161 = vsub.f32 %v874, %v1160
        %v1162 = vand.u32 %v1161, 4294901760
        %1163 = vmatpush.msra.mxu0 %v1162
        %v1164 = vand.u32 %v873, 4294901760
        %v1165 = vsub.f32 %v873, %v1164
        %v1166 = vand.u32 %v1165, 4294901760
        %1167 = vmatpush.msra.mxu0 %v1166
        %v1168 = vand.u32 %v872, 4294901760
        %v1169 = vsub.f32 %v872, %v1168
        %v1170 = vand.u32 %v1169, 4294901760
        %1171 = vmatpush.msra.mxu0 %v1170
        %v1172 = vand.u32 %v871, 4294901760
        %v1173 = vsub.f32 %v871, %v1172
        %v1174 = vand.u32 %v1173, 4294901760
        %1175 = vmatpush.msra.mxu0 %v1174
        %v1176 = vand.u32 %v870, 4294901760
        %v1177 = vsub.f32 %v870, %v1176
        %v1178 = vand.u32 %v1177, 4294901760
        %1179 = vmatpush.msra.mxu0 %v1178
        %v1180 = vand.u32 %v869, 4294901760
        %v1181 = vsub.f32 %v869, %v1180
        %v1182 = vand.u32 %v1181, 4294901760
        %1183 = vmatpush.msra.mxu0 %v1182
        %v1184 = vand.u32 %v868, 4294901760
        %v1185 = vsub.f32 %v868, %v1184
        %v1186 = vand.u32 %v1185, 4294901760
        %1187 = vmatpush.msra.mxu0 %v1186
        %v1188 = vand.u32 %v867, 4294901760
        %v1189 = vsub.f32 %v867, %v1188
        %v1190 = vand.u32 %v1189, 4294901760
        %1191 = vmatpush.msra.mxu0 %v1190
        %v1192 = vand.u32 %v866, 4294901760
        %v1193 = vsub.f32 %v866, %v1192
        %v1194 = vand.u32 %v1193, 4294901760
        %1195 = vmatpush.msra.mxu0 %v1194
        %v1196 = vand.u32 %v865, 4294901760
        %v1197 = vsub.f32 %v865, %v1196
        %v1198 = vand.u32 %v1197, 4294901760
        %1199 = vmatpush.msra.mxu0 %v1198
        %v1200 = vand.u32 %v864, 4294901760
        %v1201 = vsub.f32 %v864, %v1200
        %v1202 = vand.u32 %v1201, 4294901760
        %1203 = vmatpush.msra.mxu0 %v1202
        %v1204 = vand.u32 %v863, 4294901760
        %v1205 = vsub.f32 %v863, %v1204
        %v1206 = vand.u32 %v1205, 4294901760
        %1207 = vmatpush.msra.mxu0 %v1206
        %v1208 = vand.u32 %v862, 4294901760
        %v1209 = vsub.f32 %v862, %v1208
        %v1210 = vand.u32 %v1209, 4294901760
        %1211 = vmatpush.msra.mxu0 %v1210
        %v1212 = vand.u32 %v861, 4294901760
        %v1213 = vsub.f32 %v861, %v1212
        %v1214 = vand.u32 %v1213, 4294901760
        %1215 = vmatpush.msra.mxu0 %v1214
        %v1216 = vand.u32 %v860, 4294901760
        %v1217 = vsub.f32 %v860, %v1216
        %v1218 = vand.u32 %v1217, 4294901760
        %1219 = vmatpush.msra.mxu0 %v1218
        %v1220 = vand.u32 %v859, 4294901760
        %v1221 = vsub.f32 %v859, %v1220
        %v1222 = vand.u32 %v1221, 4294901760
        %1223 = vmatpush.msra.mxu0 %v1222
        %v1224 = vand.u32 %v856, 4294901760
        %1225 = vmatmul.f32.gmra.mxu0 %v1224
        %v1226 = vpop.f32.mrf.mxu0
        %v1227 = vadd.f32 %v1146, %v1226
        %v1228 = vand.u32 %v857, 4294901760
        %1229 = vmatmul.f32.gmra.mxu0 %v1228
        %v1230 = vpop.f32.mrf.mxu0
        %v1231 = vadd.f32 %v1152, %v1230
        %v1232 = vand.u32 %v858, 4294901760
        %1233 = vmatmul.f32.gmra.mxu0 %v1232
        %v1234 = vpop.f32.mrf.mxu0
        %v1235 = vadd.f32 %v1158, %v1234
        %1236 = vdwg.mxu0
        %v1237 = vand.u32 %v874, 4294901760
        %1238 = vmatpush.msra.mxu0 %v1237
        %v1239 = vand.u32 %v873, 4294901760
        %1240 = vmatpush.msra.mxu0 %v1239
        %v1241 = vand.u32 %v872, 4294901760
        %1242 = vmatpush.msra.mxu0 %v1241
        %v1243 = vand.u32 %v871, 4294901760
        %1244 = vmatpush.msra.mxu0 %v1243
        %v1245 = vand.u32 %v870, 4294901760
        %1246 = vmatpush.msra.mxu0 %v1245
        %v1247 = vand.u32 %v869, 4294901760
        %1248 = vmatpush.msra.mxu0 %v1247
        %v1249 = vand.u32 %v868, 4294901760
        %1250 = vmatpush.msra.mxu0 %v1249
        %v1251 = vand.u32 %v867, 4294901760
        %1252 = vmatpush.msra.mxu0 %v1251
        %v1253 = vand.u32 %v866, 4294901760
        %1254 = vmatpush.msra.mxu0 %v1253
        %v1255 = vand.u32 %v865, 4294901760
        %1256 = vmatpush.msra.mxu0 %v1255
        %v1257 = vand.u32 %v864, 4294901760
        %1258 = vmatpush.msra.mxu0 %v1257
        %v1259 = vand.u32 %v863, 4294901760
        %1260 = vmatpush.msra.mxu0 %v1259
        %v1261 = vand.u32 %v862, 4294901760
        %1262 = vmatpush.msra.mxu0 %v1261
        %v1263 = vand.u32 %v861, 4294901760
        %1264 = vmatpush.msra.mxu0 %v1263
        %v1265 = vand.u32 %v860, 4294901760
        %1266 = vmatpush.msra.mxu0 %v1265
        %v1267 = vand.u32 %v859, 4294901760
        %1268 = vmatpush.msra.mxu0 %v1267
        %v1269 = vand.u32 %v856, 4294901760
        %1270 = vmatmul.f32.gmra.mxu0 %v1269
        %v1271 = vpop.f32.mrf.mxu0
        %v1272 = vadd.f32 %v1227, %v1271
        %v1273 = vand.u32 %v857, 4294901760
        %1274 = vmatmul.f32.gmra.mxu0 %v1273
        %v1275 = vpop.f32.mrf.mxu0
        %v1276 = vadd.f32 %v1231, %v1275
        %v1277 = vand.u32 %v858, 4294901760
        %1278 = vmatmul.f32.gmra.mxu0 %v1277
        %v1279 = vpop.f32.mrf.mxu0
        %v1280 = vadd.f32 %v1235, %v1279
        %1281 = vdwg.mxu0
        %v1282 = vmax.f32 %v1272, 0.0
        %v1283 = vmax.f32 %v1276, 0.0
        %v1284 = vmax.f32 %v1280, 0.0
        %v1285 = vld [vmem:[#allocation7] sm:$0xff]
        %v1286 = vld [vmem:[#allocation7 + $0x8] sm:$0xff]
        %v1287 = vld [vmem:[#allocation7 + $0x10] sm:$0xff]
        %v1288 = vld [vmem:[#allocation7 + $0x18] sm:$0xff]
        %v1289 = vld [vmem:[#allocation7 + $0x20] sm:$0xff]
        %v1290 = vld [vmem:[#allocation7 + $0x28] sm:$0xff]
        %v1291 = vld [vmem:[#allocation7 + $0x30] sm:$0xff]
        %v1292 = vld [vmem:[#allocation7 + $0x38] sm:$0xff]
        %v1293 = vld [vmem:[#allocation7 + $0x40] sm:$0xff]
        %v1294 = vld [vmem:[#allocation7 + $0x48] sm:$0xff]
        %v1295 = vld [vmem:[#allocation7 + $0x50] sm:$0xff]
        %v1296 = vld [vmem:[#allocation7 + $0x58] sm:$0xff]
        %v1297 = vld [vmem:[#allocation7 + $0x60] sm:$0xff]
        %v1298 = vld [vmem:[#allocation7 + $0x68] sm:$0xff]
        %v1299 = vld [vmem:[#allocation7 + $0x70] sm:$0xff]
        %v1300 = vld [vmem:[#allocation7 + $0x78] sm:$0xff]
        %v1301 = vld [vmem:[%s4] sm:$0x1]
        %v1303 = vperm.slane %v1301, 0
        %v1305 = vand.u32 %v1300, 4294901760
        %1306 = vmatpush.msra.mxu0 %v1305
        %v1307 = vand.u32 %v1299, 4294901760
        %1308 = vmatpush.msra.mxu0 %v1307
        %v1309 = vand.u32 %v1298, 4294901760
        %1310 = vmatpush.msra.mxu0 %v1309
        %v1311 = vand.u32 %v1297, 4294901760
        %1312 = vmatpush.msra.mxu0 %v1311
        %v1313 = vand.u32 %v1296, 4294901760
        %1314 = vmatpush.msra.mxu0 %v1313
        %v1315 = vand.u32 %v1295, 4294901760
        %1316 = vmatpush.msra.mxu0 %v1315
        %v1317 = vand.u32 %v1294, 4294901760
        %1318 = vmatpush.msra.mxu0 %v1317
        %v1319 = vand.u32 %v1293, 4294901760
        %1320 = vmatpush.msra.mxu0 %v1319
        %v1321 = vand.u32 %v1292, 4294901760
        %1322 = vmatpush.msra.mxu0 %v1321
        %v1323 = vand.u32 %v1291, 4294901760
        %1324 = vmatpush.msra.mxu0 %v1323
        %v1325 = vand.u32 %v1290, 4294901760
        %1326 = vmatpush.msra.mxu0 %v1325
        %v1327 = vand.u32 %v1289, 4294901760
        %1328 = vmatpush.msra.mxu0 %v1327
        %v1329 = vand.u32 %v1288, 4294901760
        %1330 = vmatpush.msra.mxu0 %v1329
        %v1331 = vand.u32 %v1287, 4294901760
        %1332 = vmatpush.msra.mxu0 %v1331
        %v1333 = vand.u32 %v1286, 4294901760
        %1334 = vmatpush.msra.mxu0 %v1333
        %v1335 = vand.u32 %v1285, 4294901760
        %1336 = vmatpush.msra.mxu0 %v1335
        %v1337 = vand.u32 %v1282, 4294901760
        %v1338 = vsub.f32 %v1282, %v1337
        %v1339 = vand.u32 %v1338, 4294901760
        %v1340 = vsub.f32 %v1338, %v1339
        %v1341 = vand.u32 %v1340, 4294901760
        %1342 = vmatmul.f32.gmra.mxu0 %v1341
        %v1343 = vpop.f32.mrf.mxu0
        %v1344 = vadd.f32 %v1303, %v1343
        %v1345 = vand.u32 %v1283, 4294901760
        %v1346 = vsub.f32 %v1283, %v1345
        %v1347 = vand.u32 %v1346, 4294901760
        %v1348 = vsub.f32 %v1346, %v1347
        %v1349 = vand.u32 %v1348, 4294901760
        %1350 = vmatmul.f32.gmra.mxu0 %v1349
        %v1351 = vpop.f32.mrf.mxu0
        %v1352 = vadd.f32 %v1303, %v1351
        %v1353 = vand.u32 %v1284, 4294901760
        %v1354 = vsub.f32 %v1284, %v1353
        %v1355 = vand.u32 %v1354, 4294901760
        %v1356 = vsub.f32 %v1354, %v1355
        %v1357 = vand.u32 %v1356, 4294901760
        %1358 = vmatmul.f32.gmra.mxu0 %v1357
        %v1359 = vpop.f32.mrf.mxu0
        %v1360 = vadd.f32 %v1303, %v1359
        %1361 = vdwg.mxu0
        %v1362 = vand.u32 %v1300, 4294901760
        %v1363 = vsub.f32 %v1300, %v1362
        %v1364 = vand.u32 %v1363, 4294901760
        %v1365 = vsub.f32 %v1363, %v1364
        %v1366 = vand.u32 %v1365, 4294901760
        %1367 = vmatpush.msra.mxu0 %v1366
        %v1368 = vand.u32 %v1299, 4294901760
        %v1369 = vsub.f32 %v1299, %v1368
        %v1370 = vand.u32 %v1369, 4294901760
        %v1371 = vsub.f32 %v1369, %v1370
        %v1372 = vand.u32 %v1371, 4294901760
        %1373 = vmatpush.msra.mxu0 %v1372
        %v1374 = vand.u32 %v1298, 4294901760
        %v1375 = vsub.f32 %v1298, %v1374
        %v1376 = vand.u32 %v1375, 4294901760
        %v1377 = vsub.f32 %v1375, %v1376
        %v1378 = vand.u32 %v1377, 4294901760
        %1379 = vmatpush.msra.mxu0 %v1378
        %v1380 = vand.u32 %v1297, 4294901760
        %v1381 = vsub.f32 %v1297, %v1380
        %v1382 = vand.u32 %v1381, 4294901760
        %v1383 = vsub.f32 %v1381, %v1382
        %v1384 = vand.u32 %v1383, 4294901760
        %1385 = vmatpush.msra.mxu0 %v1384
        %v1386 = vand.u32 %v1296, 4294901760
        %v1387 = vsub.f32 %v1296, %v1386
        %v1388 = vand.u32 %v1387, 4294901760
        %v1389 = vsub.f32 %v1387, %v1388
        %v1390 = vand.u32 %v1389, 4294901760
        %1391 = vmatpush.msra.mxu0 %v1390
        %v1392 = vand.u32 %v1295, 4294901760
        %v1393 = vsub.f32 %v1295, %v1392
        %v1394 = vand.u32 %v1393, 4294901760
        %v1395 = vsub.f32 %v1393, %v1394
        %v1396 = vand.u32 %v1395, 4294901760
        %1397 = vmatpush.msra.mxu0 %v1396
        %v1398 = vand.u32 %v1294, 4294901760
        %v1399 = vsub.f32 %v1294, %v1398
        %v1400 = vand.u32 %v1399, 4294901760
        %v1401 = vsub.f32 %v1399, %v1400
        %v1402 = vand.u32 %v1401, 4294901760
        %1403 = vmatpush.msra.mxu0 %v1402
        %v1404 = vand.u32 %v1293, 4294901760
        %v1405 = vsub.f32 %v1293, %v1404
        %v1406 = vand.u32 %v1405, 4294901760
        %v1407 = vsub.f32 %v1405, %v1406
        %v1408 = vand.u32 %v1407, 4294901760
        %1409 = vmatpush.msra.mxu0 %v1408
        %v1410 = vand.u32 %v1292, 4294901760
        %v1411 = vsub.f32 %v1292, %v1410
        %v1412 = vand.u32 %v1411, 4294901760
        %v1413 = vsub.f32 %v1411, %v1412
        %v1414 = vand.u32 %v1413, 4294901760
        %1415 = vmatpush.msra.mxu0 %v1414
        %v1416 = vand.u32 %v1291, 4294901760
        %v1417 = vsub.f32 %v1291, %v1416
        %v1418 = vand.u32 %v1417, 4294901760
        %v1419 = vsub.f32 %v1417, %v1418
        %v1420 = vand.u32 %v1419, 4294901760
        %1421 = vmatpush.msra.mxu0 %v1420
        %v1422 = vand.u32 %v1290, 4294901760
        %v1423 = vsub.f32 %v1290, %v1422
        %v1424 = vand.u32 %v1423, 4294901760
        %v1425 = vsub.f32 %v1423, %v1424
        %v1426 = vand.u32 %v1425, 4294901760
        %1427 = vmatpush.msra.mxu0 %v1426
        %v1428 = vand.u32 %v1289, 4294901760
        %v1429 = vsub.f32 %v1289, %v1428
        %v1430 = vand.u32 %v1429, 4294901760
        %v1431 = vsub.f32 %v1429, %v1430
        %v1432 = vand.u32 %v1431, 4294901760
        %1433 = vmatpush.msra.mxu0 %v1432
        %v1434 = vand.u32 %v1288, 4294901760
        %v1435 = vsub.f32 %v1288, %v1434
        %v1436 = vand.u32 %v1435, 4294901760
        %v1437 = vsub.f32 %v1435, %v1436
        %v1438 = vand.u32 %v1437, 4294901760
        %1439 = vmatpush.msra.mxu0 %v1438
        %v1440 = vand.u32 %v1287, 4294901760
        %v1441 = vsub.f32 %v1287, %v1440
        %v1442 = vand.u32 %v1441, 4294901760
        %v1443 = vsub.f32 %v1441, %v1442
        %v1444 = vand.u32 %v1443, 4294901760
        %1445 = vmatpush.msra.mxu0 %v1444
        %v1446 = vand.u32 %v1286, 4294901760
        %v1447 = vsub.f32 %v1286, %v1446
        %v1448 = vand.u32 %v1447, 4294901760
        %v1449 = vsub.f32 %v1447, %v1448
        %v1450 = vand.u32 %v1449, 4294901760
        %1451 = vmatpush.msra.mxu0 %v1450
        %v1452 = vand.u32 %v1285, 4294901760
        %v1453 = vsub.f32 %v1285, %v1452
        %v1454 = vand.u32 %v1453, 4294901760
        %v1455 = vsub.f32 %v1453, %v1454
        %v1456 = vand.u32 %v1455, 4294901760
        %1457 = vmatpush.msra.mxu0 %v1456
        %v1458 = vand.u32 %v1282, 4294901760
        %1459 = vmatmul.f32.gmra.mxu0 %v1458
        %v1460 = vpop.f32.mrf.mxu0
        %v1461 = vadd.f32 %v1344, %v1460
        %v1462 = vand.u32 %v1283, 4294901760
        %1463 = vmatmul.f32.gmra.mxu0 %v1462
        %v1464 = vpop.f32.mrf.mxu0
        %v1465 = vadd.f32 %v1352, %v1464
        %v1466 = vand.u32 %v1284, 4294901760
        %1467 = vmatmul.f32.gmra.mxu0 %v1466
        %v1468 = vpop.f32.mrf.mxu0
        %v1469 = vadd.f32 %v1360, %v1468
        %1470 = vdwg.mxu0
        %v1471 = vand.u32 %v1300, 4294901760
        %v1472 = vsub.f32 %v1300, %v1471
        %1473 = vmatpush.msra.mxu0 %v1472
        %v1474 = vand.u32 %v1299, 4294901760
        %v1475 = vsub.f32 %v1299, %v1474
        %1476 = vmatpush.msra.mxu0 %v1475
        %v1477 = vand.u32 %v1298, 4294901760
        %v1478 = vsub.f32 %v1298, %v1477
        %1479 = vmatpush.msra.mxu0 %v1478
        %v1480 = vand.u32 %v1297, 4294901760
        %v1481 = vsub.f32 %v1297, %v1480
        %1482 = vmatpush.msra.mxu0 %v1481
        %v1483 = vand.u32 %v1296, 4294901760
        %v1484 = vsub.f32 %v1296, %v1483
        %1485 = vmatpush.msra.mxu0 %v1484
        %v1486 = vand.u32 %v1295, 4294901760
        %v1487 = vsub.f32 %v1295, %v1486
        %1488 = vmatpush.msra.mxu0 %v1487
        %v1489 = vand.u32 %v1294, 4294901760
        %v1490 = vsub.f32 %v1294, %v1489
        %1491 = vmatpush.msra.mxu0 %v1490
        %v1492 = vand.u32 %v1293, 4294901760
        %v1493 = vsub.f32 %v1293, %v1492
        %1494 = vmatpush.msra.mxu0 %v1493
        %v1495 = vand.u32 %v1292, 4294901760
        %v1496 = vsub.f32 %v1292, %v1495
        %1497 = vmatpush.msra.mxu0 %v1496
        %v1498 = vand.u32 %v1291, 4294901760
        %v1499 = vsub.f32 %v1291, %v1498
        %1500 = vmatpush.msra.mxu0 %v1499
        %v1501 = vand.u32 %v1290, 4294901760
        %v1502 = vsub.f32 %v1290, %v1501
        %1503 = vmatpush.msra.mxu0 %v1502
        %v1504 = vand.u32 %v1289, 4294901760
        %v1505 = vsub.f32 %v1289, %v1504
        %1506 = vmatpush.msra.mxu0 %v1505
        %v1507 = vand.u32 %v1288, 4294901760
        %v1508 = vsub.f32 %v1288, %v1507
        %1509 = vmatpush.msra.mxu0 %v1508
        %v1510 = vand.u32 %v1287, 4294901760
        %v1511 = vsub.f32 %v1287, %v1510
        %1512 = vmatpush.msra.mxu0 %v1511
        %v1513 = vand.u32 %v1286, 4294901760
        %v1514 = vsub.f32 %v1286, %v1513
        %1515 = vmatpush.msra.mxu0 %v1514
        %v1516 = vand.u32 %v1285, 4294901760
        %v1517 = vsub.f32 %v1285, %v1516
        %1518 = vmatpush.msra.mxu0 %v1517
        %v1519 = vand.u32 %v1282, 4294901760
        %v1520 = vsub.f32 %v1282, %v1519
        %1521 = vmatmul.f32.gmra.mxu0 %v1520
        %v1522 = vpop.f32.mrf.mxu0
        %v1523 = vadd.f32 %v1461, %v1522
        %v1524 = vand.u32 %v1283, 4294901760
        %v1525 = vsub.f32 %v1283, %v1524
        %1526 = vmatmul.f32.gmra.mxu0 %v1525
        %v1527 = vpop.f32.mrf.mxu0
        %v1528 = vadd.f32 %v1465, %v1527
        %v1529 = vand.u32 %v1284, 4294901760
        %v1530 = vsub.f32 %v1284, %v1529
        %1531 = vmatmul.f32.gmra.mxu0 %v1530
        %v1532 = vpop.f32.mrf.mxu0
        %v1533 = vadd.f32 %v1469, %v1532
        %1534 = vdwg.mxu0
        %v1535 = vand.u32 %v1300, 4294901760
        %1536 = vmatpush.msra.mxu0 %v1535
        %v1537 = vand.u32 %v1299, 4294901760
        %1538 = vmatpush.msra.mxu0 %v1537
        %v1539 = vand.u32 %v1298, 4294901760
        %1540 = vmatpush.msra.mxu0 %v1539
        %v1541 = vand.u32 %v1297, 4294901760
        %1542 = vmatpush.msra.mxu0 %v1541
        %v1543 = vand.u32 %v1296, 4294901760
        %1544 = vmatpush.msra.mxu0 %v1543
        %v1545 = vand.u32 %v1295, 4294901760
        %1546 = vmatpush.msra.mxu0 %v1545
        %v1547 = vand.u32 %v1294, 4294901760
        %1548 = vmatpush.msra.mxu0 %v1547
        %v1549 = vand.u32 %v1293, 4294901760
        %1550 = vmatpush.msra.mxu0 %v1549
        %v1551 = vand.u32 %v1292, 4294901760
        %1552 = vmatpush.msra.mxu0 %v1551
        %v1553 = vand.u32 %v1291, 4294901760
        %1554 = vmatpush.msra.mxu0 %v1553
        %v1555 = vand.u32 %v1290, 4294901760
        %1556 = vmatpush.msra.mxu0 %v1555
        %v1557 = vand.u32 %v1289, 4294901760
        %1558 = vmatpush.msra.mxu0 %v1557
        %v1559 = vand.u32 %v1288, 4294901760
        %1560 = vmatpush.msra.mxu0 %v1559
        %v1561 = vand.u32 %v1287, 4294901760
        %1562 = vmatpush.msra.mxu0 %v1561
        %v1563 = vand.u32 %v1286, 4294901760
        %1564 = vmatpush.msra.mxu0 %v1563
        %v1565 = vand.u32 %v1285, 4294901760
        %1566 = vmatpush.msra.mxu0 %v1565
        %v1567 = vand.u32 %v1282, 4294901760
        %v1568 = vsub.f32 %v1282, %v1567
        %v1569 = vand.u32 %v1568, 4294901760
        %1570 = vmatmul.f32.gmra.mxu0 %v1569
        %v1571 = vpop.f32.mrf.mxu0
        %v1572 = vadd.f32 %v1523, %v1571
        %v1573 = vand.u32 %v1283, 4294901760
        %v1574 = vsub.f32 %v1283, %v1573
        %v1575 = vand.u32 %v1574, 4294901760
        %1576 = vmatmul.f32.gmra.mxu0 %v1575
        %v1577 = vpop.f32.mrf.mxu0
        %v1578 = vadd.f32 %v1528, %v1577
        %v1579 = vand.u32 %v1284, 4294901760
        %v1580 = vsub.f32 %v1284, %v1579
        %v1581 = vand.u32 %v1580, 4294901760
        %1582 = vmatmul.f32.gmra.mxu0 %v1581
        %v1583 = vpop.f32.mrf.mxu0
        %v1584 = vadd.f32 %v1533, %v1583
        %1585 = vdwg.mxu0
        %v1586 = vand.u32 %v1300, 4294901760
        %v1587 = vsub.f32 %v1300, %v1586
        %v1588 = vand.u32 %v1587, 4294901760
        %1589 = vmatpush.msra.mxu0 %v1588
        %v1590 = vand.u32 %v1299, 4294901760
        %v1591 = vsub.f32 %v1299, %v1590
        %v1592 = vand.u32 %v1591, 4294901760
        %1593 = vmatpush.msra.mxu0 %v1592
        %v1594 = vand.u32 %v1298, 4294901760
        %v1595 = vsub.f32 %v1298, %v1594
        %v1596 = vand.u32 %v1595, 4294901760
        %1597 = vmatpush.msra.mxu0 %v1596
        %v1598 = vand.u32 %v1297, 4294901760
        %v1599 = vsub.f32 %v1297, %v1598
        %v1600 = vand.u32 %v1599, 4294901760
        %1601 = vmatpush.msra.mxu0 %v1600
        %v1602 = vand.u32 %v1296, 4294901760
        %v1603 = vsub.f32 %v1296, %v1602
        %v1604 = vand.u32 %v1603, 4294901760
        %1605 = vmatpush.msra.mxu0 %v1604
        %v1606 = vand.u32 %v1295, 4294901760
        %v1607 = vsub.f32 %v1295, %v1606
        %v1608 = vand.u32 %v1607, 4294901760
        %1609 = vmatpush.msra.mxu0 %v1608
        %v1610 = vand.u32 %v1294, 4294901760
        %v1611 = vsub.f32 %v1294, %v1610
        %v1612 = vand.u32 %v1611, 4294901760
        %1613 = vmatpush.msra.mxu0 %v1612
        %v1614 = vand.u32 %v1293, 4294901760
        %v1615 = vsub.f32 %v1293, %v1614
        %v1616 = vand.u32 %v1615, 4294901760
        %1617 = vmatpush.msra.mxu0 %v1616
        %v1618 = vand.u32 %v1292, 4294901760
        %v1619 = vsub.f32 %v1292, %v1618
        %v1620 = vand.u32 %v1619, 4294901760
        %1621 = vmatpush.msra.mxu0 %v1620
        %v1622 = vand.u32 %v1291, 4294901760
        %v1623 = vsub.f32 %v1291, %v1622
        %v1624 = vand.u32 %v1623, 4294901760
        %1625 = vmatpush.msra.mxu0 %v1624
        %v1626 = vand.u32 %v1290, 4294901760
        %v1627 = vsub.f32 %v1290, %v1626
        %v1628 = vand.u32 %v1627, 4294901760
        %1629 = vmatpush.msra.mxu0 %v1628
        %v1630 = vand.u32 %v1289, 4294901760
        %v1631 = vsub.f32 %v1289, %v1630
        %v1632 = vand.u32 %v1631, 4294901760
        %1633 = vmatpush.msra.mxu0 %v1632
        %v1634 = vand.u32 %v1288, 4294901760
        %v1635 = vsub.f32 %v1288, %v1634
        %v1636 = vand.u32 %v1635, 4294901760
        %1637 = vmatpush.msra.mxu0 %v1636
        %v1638 = vand.u32 %v1287, 4294901760
        %v1639 = vsub.f32 %v1287, %v1638
        %v1640 = vand.u32 %v1639, 4294901760
        %1641 = vmatpush.msra.mxu0 %v1640
        %v1642 = vand.u32 %v1286, 4294901760
        %v1643 = vsub.f32 %v1286, %v1642
        %v1644 = vand.u32 %v1643, 4294901760
        %1645 = vmatpush.msra.mxu0 %v1644
        %v1646 = vand.u32 %v1285, 4294901760
        %v1647 = vsub.f32 %v1285, %v1646
        %v1648 = vand.u32 %v1647, 4294901760
        %1649 = vmatpush.msra.mxu0 %v1648
        %v1650 = vand.u32 %v1282, 4294901760
        %1651 = vmatmul.f32.gmra.mxu0 %v1650
        %v1652 = vpop.f32.mrf.mxu0
        %v1653 = vadd.f32 %v1572, %v1652
        %v1654 = vand.u32 %v1283, 4294901760
        %1655 = vmatmul.f32.gmra.mxu0 %v1654
        %v1656 = vpop.f32.mrf.mxu0
        %v1657 = vadd.f32 %v1578, %v1656
        %v1658 = vand.u32 %v1284, 4294901760
        %1659 = vmatmul.f32.gmra.mxu0 %v1658
        %v1660 = vpop.f32.mrf.mxu0
        %v1661 = vadd.f32 %v1584, %v1660
        %1662 = vdwg.mxu0
        %v1663 = vand.u32 %v1300, 4294901760
        %1664 = vmatpush.msra.mxu0 %v1663
        %v1665 = vand.u32 %v1299, 4294901760
        %1666 = vmatpush.msra.mxu0 %v1665
        %v1667 = vand.u32 %v1298, 4294901760
        %1668 = vmatpush.msra.mxu0 %v1667
        %v1669 = vand.u32 %v1297, 4294901760
        %1670 = vmatpush.msra.mxu0 %v1669
        %v1671 = vand.u32 %v1296, 4294901760
        %1672 = vmatpush.msra.mxu0 %v1671
        %v1673 = vand.u32 %v1295, 4294901760
        %1674 = vmatpush.msra.mxu0 %v1673
        %v1675 = vand.u32 %v1294, 4294901760
        %1676 = vmatpush.msra.mxu0 %v1675
        %v1677 = vand.u32 %v1293, 4294901760
        %1678 = vmatpush.msra.mxu0 %v1677
        %v1679 = vand.u32 %v1292, 4294901760
        %1680 = vmatpush.msra.mxu0 %v1679
        %v1681 = vand.u32 %v1291, 4294901760
        %1682 = vmatpush.msra.mxu0 %v1681
        %v1683 = vand.u32 %v1290, 4294901760
        %1684 = vmatpush.msra.mxu0 %v1683
        %v1685 = vand.u32 %v1289, 4294901760
        %1686 = vmatpush.msra.mxu0 %v1685
        %v1687 = vand.u32 %v1288, 4294901760
        %1688 = vmatpush.msra.mxu0 %v1687
        %v1689 = vand.u32 %v1287, 4294901760
        %1690 = vmatpush.msra.mxu0 %v1689
        %v1691 = vand.u32 %v1286, 4294901760
        %1692 = vmatpush.msra.mxu0 %v1691
        %v1693 = vand.u32 %v1285, 4294901760
        %1694 = vmatpush.msra.mxu0 %v1693
        %v1695 = vand.u32 %v1282, 4294901760
        %1696 = vmatmul.f32.gmra.mxu0 %v1695
        %v1697 = vpop.f32.mrf.mxu0
        %v1698 = vadd.f32 %v1653, %v1697
        %v1699 = vand.u32 %v1283, 4294901760
        %1700 = vmatmul.f32.gmra.mxu0 %v1699
        %v1701 = vpop.f32.mrf.mxu0
        %v1702 = vadd.f32 %v1657, %v1701
        %v1703 = vand.u32 %v1284, 4294901760
        %1704 = vmatmul.f32.gmra.mxu0 %v1703
        %v1705 = vpop.f32.mrf.mxu0
        %v1706 = vadd.f32 %v1661, %v1705
        %1707 = vdwg.mxu0
        %v1708 = vmax.f32 %v1698, 0.0
        %v1709 = vmax.f32 %v1702, 0.0
        %v1710 = vmax.f32 %v1706, 0.0
        %v1711 = vld [vmem:[#allocation8] sm:$0xff]
        %v1712 = vld [vmem:[#allocation8 + $0x8] sm:$0xff]
        %v1713 = vld [vmem:[#allocation8 + $0x10] sm:$0xff]
        %v1714 = vld [vmem:[#allocation8 + $0x18] sm:$0xff]
        %v1715 = vld [vmem:[#allocation8 + $0x20] sm:$0xff]
        %v1716 = vld [vmem:[#allocation8 + $0x28] sm:$0xff]
        %v1717 = vld [vmem:[#allocation8 + $0x30] sm:$0xff]
        %v1718 = vld [vmem:[#allocation8 + $0x38] sm:$0xff]
        %v1719 = vld [vmem:[#allocation8 + $0x40] sm:$0xff]
        %v1720 = vld [vmem:[#allocation8 + $0x48] sm:$0xff]
        %v1721 = vld [vmem:[#allocation8 + $0x50] sm:$0xff]
        %v1722 = vld [vmem:[#allocation8 + $0x58] sm:$0xff]
        %v1723 = vld [vmem:[#allocation8 + $0x60] sm:$0xff]
        %v1724 = vld [vmem:[#allocation8 + $0x68] sm:$0xff]
        %v1725 = vld [vmem:[#allocation8 + $0x70] sm:$0xff]
        %v1726 = vld [vmem:[#allocation8 + $0x78] sm:$0xff]
        %v1727 = vld [vmem:[%s6] sm:$0x1]
        %v1729 = vperm.slane %v1727, 0
        %v1731 = vand.u32 %v1726, 4294901760
        %1732 = vmatpush.msra.mxu0 %v1731
        %v1733 = vand.u32 %v1725, 4294901760
        %1734 = vmatpush.msra.mxu0 %v1733
        %v1735 = vand.u32 %v1724, 4294901760
        %1736 = vmatpush.msra.mxu0 %v1735
        %v1737 = vand.u32 %v1723, 4294901760
        %1738 = vmatpush.msra.mxu0 %v1737
        %v1739 = vand.u32 %v1722, 4294901760
        %1740 = vmatpush.msra.mxu0 %v1739
        %v1741 = vand.u32 %v1721, 4294901760
        %1742 = vmatpush.msra.mxu0 %v1741
        %v1743 = vand.u32 %v1720, 4294901760
        %1744 = vmatpush.msra.mxu0 %v1743
        %v1745 = vand.u32 %v1719, 4294901760
        %1746 = vmatpush.msra.mxu0 %v1745
        %v1747 = vand.u32 %v1718, 4294901760
        %1748 = vmatpush.msra.mxu0 %v1747
        %v1749 = vand.u32 %v1717, 4294901760
        %1750 = vmatpush.msra.mxu0 %v1749
        %v1751 = vand.u32 %v1716, 4294901760
        %1752 = vmatpush.msra.mxu0 %v1751
        %v1753 = vand.u32 %v1715, 4294901760
        %1754 = vmatpush.msra.mxu0 %v1753
        %v1755 = vand.u32 %v1714, 4294901760
        %1756 = vmatpush.msra.mxu0 %v1755
        %v1757 = vand.u32 %v1713, 4294901760
        %1758 = vmatpush.msra.mxu0 %v1757
        %v1759 = vand.u32 %v1712, 4294901760
        %1760 = vmatpush.msra.mxu0 %v1759
        %v1761 = vand.u32 %v1711, 4294901760
        %1762 = vmatpush.msra.mxu0 %v1761
        %v1763 = vand.u32 %v1708, 4294901760
        %v1764 = vsub.f32 %v1708, %v1763
        %v1765 = vand.u32 %v1764, 4294901760
        %v1766 = vsub.f32 %v1764, %v1765
        %v1767 = vand.u32 %v1766, 4294901760
        %1768 = vmatmul.f32.gmra.mxu0 %v1767
        %v1769 = vpop.f32.mrf.mxu0
        %v1770 = vadd.f32 %v1729, %v1769
        %v1771 = vand.u32 %v1709, 4294901760
        %v1772 = vsub.f32 %v1709, %v1771
        %v1773 = vand.u32 %v1772, 4294901760
        %v1774 = vsub.f32 %v1772, %v1773
        %v1775 = vand.u32 %v1774, 4294901760
        %1776 = vmatmul.f32.gmra.mxu0 %v1775
        %v1777 = vpop.f32.mrf.mxu0
        %v1778 = vadd.f32 %v1729, %v1777
        %v1779 = vand.u32 %v1710, 4294901760
        %v1780 = vsub.f32 %v1710, %v1779
        %v1781 = vand.u32 %v1780, 4294901760
        %v1782 = vsub.f32 %v1780, %v1781
        %v1783 = vand.u32 %v1782, 4294901760
        %1784 = vmatmul.f32.gmra.mxu0 %v1783
        %v1785 = vpop.f32.mrf.mxu0
        %v1786 = vadd.f32 %v1729, %v1785
        %1787 = vdwg.mxu0
        %v1788 = vand.u32 %v1726, 4294901760
        %v1789 = vsub.f32 %v1726, %v1788
        %v1790 = vand.u32 %v1789, 4294901760
        %v1791 = vsub.f32 %v1789, %v1790
        %v1792 = vand.u32 %v1791, 4294901760
        %1793 = vmatpush.msra.mxu0 %v1792
        %v1794 = vand.u32 %v1725, 4294901760
        %v1795 = vsub.f32 %v1725, %v1794
        %v1796 = vand.u32 %v1795, 4294901760
        %v1797 = vsub.f32 %v1795, %v1796
        %v1798 = vand.u32 %v1797, 4294901760
        %1799 = vmatpush.msra.mxu0 %v1798
        %v1800 = vand.u32 %v1724, 4294901760
        %v1801 = vsub.f32 %v1724, %v1800
        %v1802 = vand.u32 %v1801, 4294901760
        %v1803 = vsub.f32 %v1801, %v1802
        %v1804 = vand.u32 %v1803, 4294901760
        %1805 = vmatpush.msra.mxu0 %v1804
        %v1806 = vand.u32 %v1723, 4294901760
        %v1807 = vsub.f32 %v1723, %v1806
        %v1808 = vand.u32 %v1807, 4294901760
        %v1809 = vsub.f32 %v1807, %v1808
        %v1810 = vand.u32 %v1809, 4294901760
        %1811 = vmatpush.msra.mxu0 %v1810
        %v1812 = vand.u32 %v1722, 4294901760
        %v1813 = vsub.f32 %v1722, %v1812
        %v1814 = vand.u32 %v1813, 4294901760
        %v1815 = vsub.f32 %v1813, %v1814
        %v1816 = vand.u32 %v1815, 4294901760
        %1817 = vmatpush.msra.mxu0 %v1816
        %v1818 = vand.u32 %v1721, 4294901760
        %v1819 = vsub.f32 %v1721, %v1818
        %v1820 = vand.u32 %v1819, 4294901760
        %v1821 = vsub.f32 %v1819, %v1820
        %v1822 = vand.u32 %v1821, 4294901760
        %1823 = vmatpush.msra.mxu0 %v1822
        %v1824 = vand.u32 %v1720, 4294901760
        %v1825 = vsub.f32 %v1720, %v1824
        %v1826 = vand.u32 %v1825, 4294901760
        %v1827 = vsub.f32 %v1825, %v1826
        %v1828 = vand.u32 %v1827, 4294901760
        %1829 = vmatpush.msra.mxu0 %v1828
        %v1830 = vand.u32 %v1719, 4294901760
        %v1831 = vsub.f32 %v1719, %v1830
        %v1832 = vand.u32 %v1831, 4294901760
        %v1833 = vsub.f32 %v1831, %v1832
        %v1834 = vand.u32 %v1833, 4294901760
        %1835 = vmatpush.msra.mxu0 %v1834
        %v1836 = vand.u32 %v1718, 4294901760
        %v1837 = vsub.f32 %v1718, %v1836
        %v1838 = vand.u32 %v1837, 4294901760
        %v1839 = vsub.f32 %v1837, %v1838
        %v1840 = vand.u32 %v1839, 4294901760
        %1841 = vmatpush.msra.mxu0 %v1840
        %v1842 = vand.u32 %v1717, 4294901760
        %v1843 = vsub.f32 %v1717, %v1842
        %v1844 = vand.u32 %v1843, 4294901760
        %v1845 = vsub.f32 %v1843, %v1844
        %v1846 = vand.u32 %v1845, 4294901760
        %1847 = vmatpush.msra.mxu0 %v1846
        %v1848 = vand.u32 %v1716, 4294901760
        %v1849 = vsub.f32 %v1716, %v1848
        %v1850 = vand.u32 %v1849, 4294901760
        %v1851 = vsub.f32 %v1849, %v1850
        %v1852 = vand.u32 %v1851, 4294901760
        %1853 = vmatpush.msra.mxu0 %v1852
        %v1854 = vand.u32 %v1715, 4294901760
        %v1855 = vsub.f32 %v1715, %v1854
        %v1856 = vand.u32 %v1855, 4294901760
        %v1857 = vsub.f32 %v1855, %v1856
        %v1858 = vand.u32 %v1857, 4294901760
        %1859 = vmatpush.msra.mxu0 %v1858
        %v1860 = vand.u32 %v1714, 4294901760
        %v1861 = vsub.f32 %v1714, %v1860
        %v1862 = vand.u32 %v1861, 4294901760
        %v1863 = vsub.f32 %v1861, %v1862
        %v1864 = vand.u32 %v1863, 4294901760
        %1865 = vmatpush.msra.mxu0 %v1864
        %v1866 = vand.u32 %v1713, 4294901760
        %v1867 = vsub.f32 %v1713, %v1866
        %v1868 = vand.u32 %v1867, 4294901760
        %v1869 = vsub.f32 %v1867, %v1868
        %v1870 = vand.u32 %v1869, 4294901760
        %1871 = vmatpush.msra.mxu0 %v1870
        %v1872 = vand.u32 %v1712, 4294901760
        %v1873 = vsub.f32 %v1712, %v1872
        %v1874 = vand.u32 %v1873, 4294901760
        %v1875 = vsub.f32 %v1873, %v1874
        %v1876 = vand.u32 %v1875, 4294901760
        %1877 = vmatpush.msra.mxu0 %v1876
        %v1878 = vand.u32 %v1711, 4294901760
        %v1879 = vsub.f32 %v1711, %v1878
        %v1880 = vand.u32 %v1879, 4294901760
        %v1881 = vsub.f32 %v1879, %v1880
        %v1882 = vand.u32 %v1881, 4294901760
        %1883 = vmatpush.msra.mxu0 %v1882
        %v1884 = vand.u32 %v1708, 4294901760
        %1885 = vmatmul.f32.gmra.mxu0 %v1884
        %v1886 = vpop.f32.mrf.mxu0
        %v1887 = vadd.f32 %v1770, %v1886
        %v1888 = vand.u32 %v1709, 4294901760
        %1889 = vmatmul.f32.gmra.mxu0 %v1888
        %v1890 = vpop.f32.mrf.mxu0
        %v1891 = vadd.f32 %v1778, %v1890
        %v1892 = vand.u32 %v1710, 4294901760
        %1893 = vmatmul.f32.gmra.mxu0 %v1892
        %v1894 = vpop.f32.mrf.mxu0
        %v1895 = vadd.f32 %v1786, %v1894
        %1896 = vdwg.mxu0
        %v1897 = vand.u32 %v1726, 4294901760
        %v1898 = vsub.f32 %v1726, %v1897
        %1899 = vmatpush.msra.mxu0 %v1898
        %v1900 = vand.u32 %v1725, 4294901760
        %v1901 = vsub.f32 %v1725, %v1900
        %1902 = vmatpush.msra.mxu0 %v1901
        %v1903 = vand.u32 %v1724, 4294901760
        %v1904 = vsub.f32 %v1724, %v1903
        %1905 = vmatpush.msra.mxu0 %v1904
        %v1906 = vand.u32 %v1723, 4294901760
        %v1907 = vsub.f32 %v1723, %v1906
        %1908 = vmatpush.msra.mxu0 %v1907
        %v1909 = vand.u32 %v1722, 4294901760
        %v1910 = vsub.f32 %v1722, %v1909
        %1911 = vmatpush.msra.mxu0 %v1910
        %v1912 = vand.u32 %v1721, 4294901760
        %v1913 = vsub.f32 %v1721, %v1912
        %1914 = vmatpush.msra.mxu0 %v1913
        %v1915 = vand.u32 %v1720, 4294901760
        %v1916 = vsub.f32 %v1720, %v1915
        %1917 = vmatpush.msra.mxu0 %v1916
        %v1918 = vand.u32 %v1719, 4294901760
        %v1919 = vsub.f32 %v1719, %v1918
        %1920 = vmatpush.msra.mxu0 %v1919
        %v1921 = vand.u32 %v1718, 4294901760
        %v1922 = vsub.f32 %v1718, %v1921
        %1923 = vmatpush.msra.mxu0 %v1922
        %v1924 = vand.u32 %v1717, 4294901760
        %v1925 = vsub.f32 %v1717, %v1924
        %1926 = vmatpush.msra.mxu0 %v1925
        %v1927 = vand.u32 %v1716, 4294901760
        %v1928 = vsub.f32 %v1716, %v1927
        %1929 = vmatpush.msra.mxu0 %v1928
        %v1930 = vand.u32 %v1715, 4294901760
        %v1931 = vsub.f32 %v1715, %v1930
        %1932 = vmatpush.msra.mxu0 %v1931
        %v1933 = vand.u32 %v1714, 4294901760
        %v1934 = vsub.f32 %v1714, %v1933
        %1935 = vmatpush.msra.mxu0 %v1934
        %v1936 = vand.u32 %v1713, 4294901760
        %v1937 = vsub.f32 %v1713, %v1936
        %1938 = vmatpush.msra.mxu0 %v1937
        %v1939 = vand.u32 %v1712, 4294901760
        %v1940 = vsub.f32 %v1712, %v1939
        %1941 = vmatpush.msra.mxu0 %v1940
        %v1942 = vand.u32 %v1711, 4294901760
        %v1943 = vsub.f32 %v1711, %v1942
        %1944 = vmatpush.msra.mxu0 %v1943
        %v1945 = vand.u32 %v1708, 4294901760
        %v1946 = vsub.f32 %v1708, %v1945
        %1947 = vmatmul.f32.gmra.mxu0 %v1946
        %v1948 = vpop.f32.mrf.mxu0
        %v1949 = vadd.f32 %v1887, %v1948
        %v1950 = vand.u32 %v1709, 4294901760
        %v1951 = vsub.f32 %v1709, %v1950
        %1952 = vmatmul.f32.gmra.mxu0 %v1951
        %v1953 = vpop.f32.mrf.mxu0
        %v1954 = vadd.f32 %v1891, %v1953
        %v1955 = vand.u32 %v1710, 4294901760
        %v1956 = vsub.f32 %v1710, %v1955
        %1957 = vmatmul.f32.gmra.mxu0 %v1956
        %v1958 = vpop.f32.mrf.mxu0
        %v1959 = vadd.f32 %v1895, %v1958
        %1960 = vdwg.mxu0
        %v1961 = vand.u32 %v1726, 4294901760
        %1962 = vmatpush.msra.mxu0 %v1961
        %v1963 = vand.u32 %v1725, 4294901760
        %1964 = vmatpush.msra.mxu0 %v1963
        %v1965 = vand.u32 %v1724, 4294901760
        %1966 = vmatpush.msra.mxu0 %v1965
        %v1967 = vand.u32 %v1723, 4294901760
        %1968 = vmatpush.msra.mxu0 %v1967
        %v1969 = vand.u32 %v1722, 4294901760
        %1970 = vmatpush.msra.mxu0 %v1969
        %v1971 = vand.u32 %v1721, 4294901760
        %1972 = vmatpush.msra.mxu0 %v1971
        %v1973 = vand.u32 %v1720, 4294901760
        %1974 = vmatpush.msra.mxu0 %v1973
        %v1975 = vand.u32 %v1719, 4294901760
        %1976 = vmatpush.msra.mxu0 %v1975
        %v1977 = vand.u32 %v1718, 4294901760
        %1978 = vmatpush.msra.mxu0 %v1977
        %v1979 = vand.u32 %v1717, 4294901760
        %1980 = vmatpush.msra.mxu0 %v1979
        %v1981 = vand.u32 %v1716, 4294901760
        %1982 = vmatpush.msra.mxu0 %v1981
        %v1983 = vand.u32 %v1715, 4294901760
        %1984 = vmatpush.msra.mxu0 %v1983
        %v1985 = vand.u32 %v1714, 4294901760
        %1986 = vmatpush.msra.mxu0 %v1985
        %v1987 = vand.u32 %v1713, 4294901760
        %1988 = vmatpush.msra.mxu0 %v1987
        %v1989 = vand.u32 %v1712, 4294901760
        %1990 = vmatpush.msra.mxu0 %v1989
        %v1991 = vand.u32 %v1711, 4294901760
        %1992 = vmatpush.msra.mxu0 %v1991
        %v1993 = vand.u32 %v1708, 4294901760
        %v1994 = vsub.f32 %v1708, %v1993
        %v1995 = vand.u32 %v1994, 4294901760
        %1996 = vmatmul.f32.gmra.mxu0 %v1995
        %v1997 = vpop.f32.mrf.mxu0
        %v1998 = vadd.f32 %v1949, %v1997
        %v1999 = vand.u32 %v1709, 4294901760
        %v2000 = vsub.f32 %v1709, %v1999
        %v2001 = vand.u32 %v2000, 4294901760
        %2002 = vmatmul.f32.gmra.mxu0 %v2001
        %v2003 = vpop.f32.mrf.mxu0
        %v2004 = vadd.f32 %v1954, %v2003
        %v2005 = vand.u32 %v1710, 4294901760
        %v2006 = vsub.f32 %v1710, %v2005
        %v2007 = vand.u32 %v2006, 4294901760
        %2008 = vmatmul.f32.gmra.mxu0 %v2007
        %v2009 = vpop.f32.mrf.mxu0
        %v2010 = vadd.f32 %v1959, %v2009
        %2011 = vdwg.mxu0
        %v2012 = vand.u32 %v1726, 4294901760
        %v2013 = vsub.f32 %v1726, %v2012
        %v2014 = vand.u32 %v2013, 4294901760
        %2015 = vmatpush.msra.mxu0 %v2014
        %v2016 = vand.u32 %v1725, 4294901760
        %v2017 = vsub.f32 %v1725, %v2016
        %v2018 = vand.u32 %v2017, 4294901760
        %2019 = vmatpush.msra.mxu0 %v2018
        %v2020 = vand.u32 %v1724, 4294901760
        %v2021 = vsub.f32 %v1724, %v2020
        %v2022 = vand.u32 %v2021, 4294901760
        %2023 = vmatpush.msra.mxu0 %v2022
        %v2024 = vand.u32 %v1723, 4294901760
        %v2025 = vsub.f32 %v1723, %v2024
        %v2026 = vand.u32 %v2025, 4294901760
        %2027 = vmatpush.msra.mxu0 %v2026
        %v2028 = vand.u32 %v1722, 4294901760
        %v2029 = vsub.f32 %v1722, %v2028
        %v2030 = vand.u32 %v2029, 4294901760
        %2031 = vmatpush.msra.mxu0 %v2030
        %v2032 = vand.u32 %v1721, 4294901760
        %v2033 = vsub.f32 %v1721, %v2032
        %v2034 = vand.u32 %v2033, 4294901760
        %2035 = vmatpush.msra.mxu0 %v2034
        %v2036 = vand.u32 %v1720, 4294901760
        %v2037 = vsub.f32 %v1720, %v2036
        %v2038 = vand.u32 %v2037, 4294901760
        %2039 = vmatpush.msra.mxu0 %v2038
        %v2040 = vand.u32 %v1719, 4294901760
        %v2041 = vsub.f32 %v1719, %v2040
        %v2042 = vand.u32 %v2041, 4294901760
        %2043 = vmatpush.msra.mxu0 %v2042
        %v2044 = vand.u32 %v1718, 4294901760
        %v2045 = vsub.f32 %v1718, %v2044
        %v2046 = vand.u32 %v2045, 4294901760
        %2047 = vmatpush.msra.mxu0 %v2046
        %v2048 = vand.u32 %v1717, 4294901760
        %v2049 = vsub.f32 %v1717, %v2048
        %v2050 = vand.u32 %v2049, 4294901760
        %2051 = vmatpush.msra.mxu0 %v2050
        %v2052 = vand.u32 %v1716, 4294901760
        %v2053 = vsub.f32 %v1716, %v2052
        %v2054 = vand.u32 %v2053, 4294901760
        %2055 = vmatpush.msra.mxu0 %v2054
        %v2056 = vand.u32 %v1715, 4294901760
        %v2057 = vsub.f32 %v1715, %v2056
        %v2058 = vand.u32 %v2057, 4294901760
        %2059 = vmatpush.msra.mxu0 %v2058
        %v2060 = vand.u32 %v1714, 4294901760
        %v2061 = vsub.f32 %v1714, %v2060
        %v2062 = vand.u32 %v2061, 4294901760
        %2063 = vmatpush.msra.mxu0 %v2062
        %v2064 = vand.u32 %v1713, 4294901760
        %v2065 = vsub.f32 %v1713, %v2064
        %v2066 = vand.u32 %v2065, 4294901760
        %2067 = vmatpush.msra.mxu0 %v2066
        %v2068 = vand.u32 %v1712, 4294901760
        %v2069 = vsub.f32 %v1712, %v2068
        %v2070 = vand.u32 %v2069, 4294901760
        %2071 = vmatpush.msra.mxu0 %v2070
        %v2072 = vand.u32 %v1711, 4294901760
        %v2073 = vsub.f32 %v1711, %v2072
        %v2074 = vand.u32 %v2073, 4294901760
        %2075 = vmatpush.msra.mxu0 %v2074
        %v2076 = vand.u32 %v1708, 4294901760
        %2077 = vmatmul.f32.gmra.mxu0 %v2076
        %v2078 = vpop.f32.mrf.mxu0
        %v2079 = vadd.f32 %v1998, %v2078
        %v2080 = vand.u32 %v1709, 4294901760
        %2081 = vmatmul.f32.gmra.mxu0 %v2080
        %v2082 = vpop.f32.mrf.mxu0
        %v2083 = vadd.f32 %v2004, %v2082
        %v2084 = vand.u32 %v1710, 4294901760
        %2085 = vmatmul.f32.gmra.mxu0 %v2084
        %v2086 = vpop.f32.mrf.mxu0
        %v2087 = vadd.f32 %v2010, %v2086
        %2088 = vdwg.mxu0
        %v2089 = vand.u32 %v1726, 4294901760
        %2090 = vmatpush.msra.mxu0 %v2089
        %v2091 = vand.u32 %v1725, 4294901760
        %2092 = vmatpush.msra.mxu0 %v2091
        %v2093 = vand.u32 %v1724, 4294901760
        %2094 = vmatpush.msra.mxu0 %v2093
        %v2095 = vand.u32 %v1723, 4294901760
        %2096 = vmatpush.msra.mxu0 %v2095
        %v2097 = vand.u32 %v1722, 4294901760
        %2098 = vmatpush.msra.mxu0 %v2097
        %v2099 = vand.u32 %v1721, 4294901760
        %2100 = vmatpush.msra.mxu0 %v2099
        %v2101 = vand.u32 %v1720, 4294901760
        %2102 = vmatpush.msra.mxu0 %v2101
        %v2103 = vand.u32 %v1719, 4294901760
        %2104 = vmatpush.msra.mxu0 %v2103
        %v2105 = vand.u32 %v1718, 4294901760
        %2106 = vmatpush.msra.mxu0 %v2105
        %v2107 = vand.u32 %v1717, 4294901760
        %2108 = vmatpush.msra.mxu0 %v2107
        %v2109 = vand.u32 %v1716, 4294901760
        %2110 = vmatpush.msra.mxu0 %v2109
        %v2111 = vand.u32 %v1715, 4294901760
        %2112 = vmatpush.msra.mxu0 %v2111
        %v2113 = vand.u32 %v1714, 4294901760
        %2114 = vmatpush.msra.mxu0 %v2113
        %v2115 = vand.u32 %v1713, 4294901760
        %2116 = vmatpush.msra.mxu0 %v2115
        %v2117 = vand.u32 %v1712, 4294901760
        %2118 = vmatpush.msra.mxu0 %v2117
        %v2119 = vand.u32 %v1711, 4294901760
        %2120 = vmatpush.msra.mxu0 %v2119
        %v2121 = vand.u32 %v1708, 4294901760
        %2122 = vmatmul.f32.gmra.mxu0 %v2121
        %v2123 = vpop.f32.mrf.mxu0
        %v2124 = vadd.f32 %v2079, %v2123
        %v2125 = vand.u32 %v1709, 4294901760
        %2126 = vmatmul.f32.gmra.mxu0 %v2125
        %v2127 = vpop.f32.mrf.mxu0
        %v2128 = vadd.f32 %v2083, %v2127
        %v2129 = vand.u32 %v1710, 4294901760
        %2130 = vmatmul.f32.gmra.mxu0 %v2129
        %v2131 = vpop.f32.mrf.mxu0
        %v2132 = vadd.f32 %v2087, %v2131
        %2133 = vdwg.mxu0
        %v2134 = vld [vmem:[#allocation10] sm:$0xff]
        %v2135 = vld [vmem:[#allocation10 + $0x8] sm:$0xff]
        %v2136 = vld [vmem:[#allocation10 + $0x10] sm:$0xff]
        %v2137 = vld [vmem:[#allocation10 + $0x18] sm:$0xff]
        %v2138 = vld [vmem:[#allocation10 + $0x20] sm:$0xff]
        %v2139 = vld [vmem:[#allocation10 + $0x28] sm:$0xff]
        %v2140 = vld [vmem:[#allocation10 + $0x30] sm:$0xff]
        %v2141 = vld [vmem:[#allocation10 + $0x38] sm:$0xff]
        %v2142 = vld [vmem:[#allocation10 + $0x40] sm:$0xff]
        %v2143 = vld [vmem:[#allocation10 + $0x48] sm:$0xff]
        %v2144 = vld [vmem:[#allocation10 + $0x50] sm:$0xff]
        %v2145 = vld [vmem:[#allocation10 + $0x58] sm:$0xff]
        %v2146 = vld [vmem:[#allocation10 + $0x60] sm:$0xff]
        %v2147 = vld [vmem:[#allocation10 + $0x68] sm:$0xff]
        %v2148 = vld [vmem:[#allocation10 + $0x70] sm:$0xff]
        %v2149 = vld [vmem:[#allocation10 + $0x78] sm:$0xff]
        %v2150 = vld [vmem:[%s8] sm:$0x1]
        %v2152 = vperm.slane %v2150, 0
        %v2154 = vand.u32 %v2149, 4294901760
        %2155 = vmatpush.msra.mxu0 %v2154
        %v2156 = vand.u32 %v2148, 4294901760
        %2157 = vmatpush.msra.mxu0 %v2156
        %v2158 = vand.u32 %v2147, 4294901760
        %2159 = vmatpush.msra.mxu0 %v2158
        %v2160 = vand.u32 %v2146, 4294901760
        %2161 = vmatpush.msra.mxu0 %v2160
        %v2162 = vand.u32 %v2145, 4294901760
        %2163 = vmatpush.msra.mxu0 %v2162
        %v2164 = vand.u32 %v2144, 4294901760
        %2165 = vmatpush.msra.mxu0 %v2164
        %v2166 = vand.u32 %v2143, 4294901760
        %2167 = vmatpush.msra.mxu0 %v2166
        %v2168 = vand.u32 %v2142, 4294901760
        %2169 = vmatpush.msra.mxu0 %v2168
        %v2170 = vand.u32 %v2141, 4294901760
        %2171 = vmatpush.msra.mxu0 %v2170
        %v2172 = vand.u32 %v2140, 4294901760
        %2173 = vmatpush.msra.mxu0 %v2172
        %v2174 = vand.u32 %v2139, 4294901760
        %2175 = vmatpush.msra.mxu0 %v2174
        %v2176 = vand.u32 %v2138, 4294901760
        %2177 = vmatpush.msra.mxu0 %v2176
        %v2178 = vand.u32 %v2137, 4294901760
        %2179 = vmatpush.msra.mxu0 %v2178
        %v2180 = vand.u32 %v2136, 4294901760
        %2181 = vmatpush.msra.mxu0 %v2180
        %v2182 = vand.u32 %v2135, 4294901760
        %2183 = vmatpush.msra.mxu0 %v2182
        %v2184 = vand.u32 %v2134, 4294901760
        %2185 = vmatpush.msra.mxu0 %v2184
        %v2186 = vand.u32 %v2124, 4294901760
        %v2187 = vsub.f32 %v2124, %v2186
        %v2188 = vand.u32 %v2187, 4294901760
        %v2189 = vsub.f32 %v2187, %v2188
        %v2190 = vand.u32 %v2189, 4294901760
        %2191 = vmatmul.f32.gmra.mxu0 %v2190
        %v2192 = vpop.f32.mrf.mxu0
        %v2193 = vadd.f32 %v2152, %v2192
        %v2194 = vand.u32 %v2128, 4294901760
        %v2195 = vsub.f32 %v2128, %v2194
        %v2196 = vand.u32 %v2195, 4294901760
        %v2197 = vsub.f32 %v2195, %v2196
        %v2198 = vand.u32 %v2197, 4294901760
        %2199 = vmatmul.f32.gmra.mxu0 %v2198
        %v2200 = vpop.f32.mrf.mxu0
        %v2201 = vadd.f32 %v2152, %v2200
        %v2202 = vand.u32 %v2132, 4294901760
        %v2203 = vsub.f32 %v2132, %v2202
        %v2204 = vand.u32 %v2203, 4294901760
        %v2205 = vsub.f32 %v2203, %v2204
        %v2206 = vand.u32 %v2205, 4294901760
        %2207 = vmatmul.f32.gmra.mxu0 %v2206
        %v2208 = vpop.f32.mrf.mxu0
        %v2209 = vadd.f32 %v2152, %v2208
        %2210 = vdwg.mxu0
        %v2211 = vand.u32 %v2149, 4294901760
        %v2212 = vsub.f32 %v2149, %v2211
        %v2213 = vand.u32 %v2212, 4294901760
        %v2214 = vsub.f32 %v2212, %v2213
        %v2215 = vand.u32 %v2214, 4294901760
        %2216 = vmatpush.msra.mxu0 %v2215
        %v2217 = vand.u32 %v2148, 4294901760
        %v2218 = vsub.f32 %v2148, %v2217
        %v2219 = vand.u32 %v2218, 4294901760
        %v2220 = vsub.f32 %v2218, %v2219
        %v2221 = vand.u32 %v2220, 4294901760
        %2222 = vmatpush.msra.mxu0 %v2221
        %v2223 = vand.u32 %v2147, 4294901760
        %v2224 = vsub.f32 %v2147, %v2223
        %v2225 = vand.u32 %v2224, 4294901760
        %v2226 = vsub.f32 %v2224, %v2225
        %v2227 = vand.u32 %v2226, 4294901760
        %2228 = vmatpush.msra.mxu0 %v2227
        %v2229 = vand.u32 %v2146, 4294901760
        %v2230 = vsub.f32 %v2146, %v2229
        %v2231 = vand.u32 %v2230, 4294901760
        %v2232 = vsub.f32 %v2230, %v2231
        %v2233 = vand.u32 %v2232, 4294901760
        %2234 = vmatpush.msra.mxu0 %v2233
        %v2235 = vand.u32 %v2145, 4294901760
        %v2236 = vsub.f32 %v2145, %v2235
        %v2237 = vand.u32 %v2236, 4294901760
        %v2238 = vsub.f32 %v2236, %v2237
        %v2239 = vand.u32 %v2238, 4294901760
        %2240 = vmatpush.msra.mxu0 %v2239
        %v2241 = vand.u32 %v2144, 4294901760
        %v2242 = vsub.f32 %v2144, %v2241
        %v2243 = vand.u32 %v2242, 4294901760
        %v2244 = vsub.f32 %v2242, %v2243
        %v2245 = vand.u32 %v2244, 4294901760
        %2246 = vmatpush.msra.mxu0 %v2245
        %v2247 = vand.u32 %v2143, 4294901760
        %v2248 = vsub.f32 %v2143, %v2247
        %v2249 = vand.u32 %v2248, 4294901760
        %v2250 = vsub.f32 %v2248, %v2249
        %v2251 = vand.u32 %v2250, 4294901760
        %2252 = vmatpush.msra.mxu0 %v2251
        %v2253 = vand.u32 %v2142, 4294901760
        %v2254 = vsub.f32 %v2142, %v2253
        %v2255 = vand.u32 %v2254, 4294901760
        %v2256 = vsub.f32 %v2254, %v2255
        %v2257 = vand.u32 %v2256, 4294901760
        %2258 = vmatpush.msra.mxu0 %v2257
        %v2259 = vand.u32 %v2141, 4294901760
        %v2260 = vsub.f32 %v2141, %v2259
        %v2261 = vand.u32 %v2260, 4294901760
        %v2262 = vsub.f32 %v2260, %v2261
        %v2263 = vand.u32 %v2262, 4294901760
        %2264 = vmatpush.msra.mxu0 %v2263
        %v2265 = vand.u32 %v2140, 4294901760
        %v2266 = vsub.f32 %v2140, %v2265
        %v2267 = vand.u32 %v2266, 4294901760
        %v2268 = vsub.f32 %v2266, %v2267
        %v2269 = vand.u32 %v2268, 4294901760
        %2270 = vmatpush.msra.mxu0 %v2269
        %v2271 = vand.u32 %v2139, 4294901760
        %v2272 = vsub.f32 %v2139, %v2271
        %v2273 = vand.u32 %v2272, 4294901760
        %v2274 = vsub.f32 %v2272, %v2273
        %v2275 = vand.u32 %v2274, 4294901760
        %2276 = vmatpush.msra.mxu0 %v2275
        %v2277 = vand.u32 %v2138, 4294901760
        %v2278 = vsub.f32 %v2138, %v2277
        %v2279 = vand.u32 %v2278, 4294901760
        %v2280 = vsub.f32 %v2278, %v2279
        %v2281 = vand.u32 %v2280, 4294901760
        %2282 = vmatpush.msra.mxu0 %v2281
        %v2283 = vand.u32 %v2137, 4294901760
        %v2284 = vsub.f32 %v2137, %v2283
        %v2285 = vand.u32 %v2284, 4294901760
        %v2286 = vsub.f32 %v2284, %v2285
        %v2287 = vand.u32 %v2286, 4294901760
        %2288 = vmatpush.msra.mxu0 %v2287
        %v2289 = vand.u32 %v2136, 4294901760
        %v2290 = vsub.f32 %v2136, %v2289
        %v2291 = vand.u32 %v2290, 4294901760
        %v2292 = vsub.f32 %v2290, %v2291
        %v2293 = vand.u32 %v2292, 4294901760
        %2294 = vmatpush.msra.mxu0 %v2293
        %v2295 = vand.u32 %v2135, 4294901760
        %v2296 = vsub.f32 %v2135, %v2295
        %v2297 = vand.u32 %v2296, 4294901760
        %v2298 = vsub.f32 %v2296, %v2297
        %v2299 = vand.u32 %v2298, 4294901760
        %2300 = vmatpush.msra.mxu0 %v2299
        %v2301 = vand.u32 %v2134, 4294901760
        %v2302 = vsub.f32 %v2134, %v2301
        %v2303 = vand.u32 %v2302, 4294901760
        %v2304 = vsub.f32 %v2302, %v2303
        %v2305 = vand.u32 %v2304, 4294901760
        %2306 = vmatpush.msra.mxu0 %v2305
        %v2307 = vand.u32 %v2124, 4294901760
        %2308 = vmatmul.f32.gmra.mxu0 %v2307
        %v2309 = vpop.f32.mrf.mxu0
        %v2310 = vadd.f32 %v2193, %v2309
        %v2311 = vand.u32 %v2128, 4294901760
        %2312 = vmatmul.f32.gmra.mxu0 %v2311
        %v2313 = vpop.f32.mrf.mxu0
        %v2314 = vadd.f32 %v2201, %v2313
        %v2315 = vand.u32 %v2132, 4294901760
        %2316 = vmatmul.f32.gmra.mxu0 %v2315
        %v2317 = vpop.f32.mrf.mxu0
        %v2318 = vadd.f32 %v2209, %v2317
        %2319 = vdwg.mxu0
        %v2320 = vand.u32 %v2149, 4294901760
        %v2321 = vsub.f32 %v2149, %v2320
        %2322 = vmatpush.msra.mxu0 %v2321
        %v2323 = vand.u32 %v2148, 4294901760
        %v2324 = vsub.f32 %v2148, %v2323
        %2325 = vmatpush.msra.mxu0 %v2324
        %v2326 = vand.u32 %v2147, 4294901760
        %v2327 = vsub.f32 %v2147, %v2326
        %2328 = vmatpush.msra.mxu0 %v2327
        %v2329 = vand.u32 %v2146, 4294901760
        %v2330 = vsub.f32 %v2146, %v2329
        %2331 = vmatpush.msra.mxu0 %v2330
        %v2332 = vand.u32 %v2145, 4294901760
        %v2333 = vsub.f32 %v2145, %v2332
        %2334 = vmatpush.msra.mxu0 %v2333
        %v2335 = vand.u32 %v2144, 4294901760
        %v2336 = vsub.f32 %v2144, %v2335
        %2337 = vmatpush.msra.mxu0 %v2336
        %v2338 = vand.u32 %v2143, 4294901760
        %v2339 = vsub.f32 %v2143, %v2338
        %2340 = vmatpush.msra.mxu0 %v2339
        %v2341 = vand.u32 %v2142, 4294901760
        %v2342 = vsub.f32 %v2142, %v2341
        %2343 = vmatpush.msra.mxu0 %v2342
        %v2344 = vand.u32 %v2141, 4294901760
        %v2345 = vsub.f32 %v2141, %v2344
        %2346 = vmatpush.msra.mxu0 %v2345
        %v2347 = vand.u32 %v2140, 4294901760
        %v2348 = vsub.f32 %v2140, %v2347
        %2349 = vmatpush.msra.mxu0 %v2348
        %v2350 = vand.u32 %v2139, 4294901760
        %v2351 = vsub.f32 %v2139, %v2350
        %2352 = vmatpush.msra.mxu0 %v2351
        %v2353 = vand.u32 %v2138, 4294901760
        %v2354 = vsub.f32 %v2138, %v2353
        %2355 = vmatpush.msra.mxu0 %v2354
        %v2356 = vand.u32 %v2137, 4294901760
        %v2357 = vsub.f32 %v2137, %v2356
        %2358 = vmatpush.msra.mxu0 %v2357
        %v2359 = vand.u32 %v2136, 4294901760
        %v2360 = vsub.f32 %v2136, %v2359
        %2361 = vmatpush.msra.mxu0 %v2360
        %v2362 = vand.u32 %v2135, 4294901760
        %v2363 = vsub.f32 %v2135, %v2362
        %2364 = vmatpush.msra.mxu0 %v2363
        %v2365 = vand.u32 %v2134, 4294901760
        %v2366 = vsub.f32 %v2134, %v2365
        %2367 = vmatpush.msra.mxu0 %v2366
        %v2368 = vand.u32 %v2124, 4294901760
        %v2369 = vsub.f32 %v2124, %v2368
        %2370 = vmatmul.f32.gmra.mxu0 %v2369
        %v2371 = vpop.f32.mrf.mxu0
        %v2372 = vadd.f32 %v2310, %v2371
        %v2373 = vand.u32 %v2128, 4294901760
        %v2374 = vsub.f32 %v2128, %v2373
        %2375 = vmatmul.f32.gmra.mxu0 %v2374
        %v2376 = vpop.f32.mrf.mxu0
        %v2377 = vadd.f32 %v2314, %v2376
        %v2378 = vand.u32 %v2132, 4294901760
        %v2379 = vsub.f32 %v2132, %v2378
        %2380 = vmatmul.f32.gmra.mxu0 %v2379
        %v2381 = vpop.f32.mrf.mxu0
        %v2382 = vadd.f32 %v2318, %v2381
        %2383 = vdwg.mxu0
        %v2384 = vand.u32 %v2149, 4294901760
        %2385 = vmatpush.msra.mxu0 %v2384
        %v2386 = vand.u32 %v2148, 4294901760
        %2387 = vmatpush.msra.mxu0 %v2386
        %v2388 = vand.u32 %v2147, 4294901760
        %2389 = vmatpush.msra.mxu0 %v2388
        %v2390 = vand.u32 %v2146, 4294901760
        %2391 = vmatpush.msra.mxu0 %v2390
        %v2392 = vand.u32 %v2145, 4294901760
        %2393 = vmatpush.msra.mxu0 %v2392
        %v2394 = vand.u32 %v2144, 4294901760
        %2395 = vmatpush.msra.mxu0 %v2394
        %v2396 = vand.u32 %v2143, 4294901760
        %2397 = vmatpush.msra.mxu0 %v2396
        %v2398 = vand.u32 %v2142, 4294901760
        %2399 = vmatpush.msra.mxu0 %v2398
        %v2400 = vand.u32 %v2141, 4294901760
        %2401 = vmatpush.msra.mxu0 %v2400
        %v2402 = vand.u32 %v2140, 4294901760
        %2403 = vmatpush.msra.mxu0 %v2402
        %v2404 = vand.u32 %v2139, 4294901760
        %2405 = vmatpush.msra.mxu0 %v2404
        %v2406 = vand.u32 %v2138, 4294901760
        %2407 = vmatpush.msra.mxu0 %v2406
        %v2408 = vand.u32 %v2137, 4294901760
        %2409 = vmatpush.msra.mxu0 %v2408
        %v2410 = vand.u32 %v2136, 4294901760
        %2411 = vmatpush.msra.mxu0 %v2410
        %v2412 = vand.u32 %v2135, 4294901760
        %2413 = vmatpush.msra.mxu0 %v2412
        %v2414 = vand.u32 %v2134, 4294901760
        %2415 = vmatpush.msra.mxu0 %v2414
        %v2416 = vand.u32 %v2124, 4294901760
        %v2417 = vsub.f32 %v2124, %v2416
        %v2418 = vand.u32 %v2417, 4294901760
        %2419 = vmatmul.f32.gmra.mxu0 %v2418
        %v2420 = vpop.f32.mrf.mxu0
        %v2421 = vadd.f32 %v2372, %v2420
        %v2422 = vand.u32 %v2128, 4294901760
        %v2423 = vsub.f32 %v2128, %v2422
        %v2424 = vand.u32 %v2423, 4294901760
        %2425 = vmatmul.f32.gmra.mxu0 %v2424
        %v2426 = vpop.f32.mrf.mxu0
        %v2427 = vadd.f32 %v2377, %v2426
        %v2428 = vand.u32 %v2132, 4294901760
        %v2429 = vsub.f32 %v2132, %v2428
        %v2430 = vand.u32 %v2429, 4294901760
        %2431 = vmatmul.f32.gmra.mxu0 %v2430
        %v2432 = vpop.f32.mrf.mxu0
        %v2433 = vadd.f32 %v2382, %v2432
        %2434 = vdwg.mxu0
        %v2435 = vand.u32 %v2149, 4294901760
        %v2436 = vsub.f32 %v2149, %v2435
        %v2437 = vand.u32 %v2436, 4294901760
        %2438 = vmatpush.msra.mxu0 %v2437
        %v2439 = vand.u32 %v2148, 4294901760
        %v2440 = vsub.f32 %v2148, %v2439
        %v2441 = vand.u32 %v2440, 4294901760
        %2442 = vmatpush.msra.mxu0 %v2441
        %v2443 = vand.u32 %v2147, 4294901760
        %v2444 = vsub.f32 %v2147, %v2443
        %v2445 = vand.u32 %v2444, 4294901760
        %2446 = vmatpush.msra.mxu0 %v2445
        %v2447 = vand.u32 %v2146, 4294901760
        %v2448 = vsub.f32 %v2146, %v2447
        %v2449 = vand.u32 %v2448, 4294901760
        %2450 = vmatpush.msra.mxu0 %v2449
        %v2451 = vand.u32 %v2145, 4294901760
        %v2452 = vsub.f32 %v2145, %v2451
        %v2453 = vand.u32 %v2452, 4294901760
        %2454 = vmatpush.msra.mxu0 %v2453
        %v2455 = vand.u32 %v2144, 4294901760
        %v2456 = vsub.f32 %v2144, %v2455
        %v2457 = vand.u32 %v2456, 4294901760
        %2458 = vmatpush.msra.mxu0 %v2457
        %v2459 = vand.u32 %v2143, 4294901760
        %v2460 = vsub.f32 %v2143, %v2459
        %v2461 = vand.u32 %v2460, 4294901760
        %2462 = vmatpush.msra.mxu0 %v2461
        %v2463 = vand.u32 %v2142, 4294901760
        %v2464 = vsub.f32 %v2142, %v2463
        %v2465 = vand.u32 %v2464, 4294901760
        %2466 = vmatpush.msra.mxu0 %v2465
        %v2467 = vand.u32 %v2141, 4294901760
        %v2468 = vsub.f32 %v2141, %v2467
        %v2469 = vand.u32 %v2468, 4294901760
        %2470 = vmatpush.msra.mxu0 %v2469
        %v2471 = vand.u32 %v2140, 4294901760
        %v2472 = vsub.f32 %v2140, %v2471
        %v2473 = vand.u32 %v2472, 4294901760
        %2474 = vmatpush.msra.mxu0 %v2473
        %v2475 = vand.u32 %v2139, 4294901760
        %v2476 = vsub.f32 %v2139, %v2475
        %v2477 = vand.u32 %v2476, 4294901760
        %2478 = vmatpush.msra.mxu0 %v2477
        %v2479 = vand.u32 %v2138, 4294901760
        %v2480 = vsub.f32 %v2138, %v2479
        %v2481 = vand.u32 %v2480, 4294901760
        %2482 = vmatpush.msra.mxu0 %v2481
        %v2483 = vand.u32 %v2137, 4294901760
        %v2484 = vsub.f32 %v2137, %v2483
        %v2485 = vand.u32 %v2484, 4294901760
        %2486 = vmatpush.msra.mxu0 %v2485
        %v2487 = vand.u32 %v2136, 4294901760
        %v2488 = vsub.f32 %v2136, %v2487
        %v2489 = vand.u32 %v2488, 4294901760
        %2490 = vmatpush.msra.mxu0 %v2489
        %v2491 = vand.u32 %v2135, 4294901760
        %v2492 = vsub.f32 %v2135, %v2491
        %v2493 = vand.u32 %v2492, 4294901760
        %2494 = vmatpush.msra.mxu0 %v2493
        %v2495 = vand.u32 %v2134, 4294901760
        %v2496 = vsub.f32 %v2134, %v2495
        %v2497 = vand.u32 %v2496, 4294901760
        %2498 = vmatpush.msra.mxu0 %v2497
        %v2499 = vand.u32 %v2124, 4294901760
        %2500 = vmatmul.f32.gmra.mxu0 %v2499
        %v2501 = vpop.f32.mrf.mxu0
        %v2502 = vadd.f32 %v2421, %v2501
        %v2503 = vand.u32 %v2128, 4294901760
        %2504 = vmatmul.f32.gmra.mxu0 %v2503
        %v2505 = vpop.f32.mrf.mxu0
        %v2506 = vadd.f32 %v2427, %v2505
        %v2507 = vand.u32 %v2132, 4294901760
        %2508 = vmatmul.f32.gmra.mxu0 %v2507
        %v2509 = vpop.f32.mrf.mxu0
        %v2510 = vadd.f32 %v2433, %v2509
        %2511 = vdwg.mxu0
        %v2512 = vand.u32 %v2149, 4294901760
        %2513 = vmatpush.msra.mxu0 %v2512
        %v2514 = vand.u32 %v2148, 4294901760
        %2515 = vmatpush.msra.mxu0 %v2514
        %v2516 = vand.u32 %v2147, 4294901760
        %2517 = vmatpush.msra.mxu0 %v2516
        %v2518 = vand.u32 %v2146, 4294901760
        %2519 = vmatpush.msra.mxu0 %v2518
        %v2520 = vand.u32 %v2145, 4294901760
        %2521 = vmatpush.msra.mxu0 %v2520
        %v2522 = vand.u32 %v2144, 4294901760
        %2523 = vmatpush.msra.mxu0 %v2522
        %v2524 = vand.u32 %v2143, 4294901760
        %2525 = vmatpush.msra.mxu0 %v2524
        %v2526 = vand.u32 %v2142, 4294901760
        %2527 = vmatpush.msra.mxu0 %v2526
        %v2528 = vand.u32 %v2141, 4294901760
        %2529 = vmatpush.msra.mxu0 %v2528
        %v2530 = vand.u32 %v2140, 4294901760
        %2531 = vmatpush.msra.mxu0 %v2530
        %v2532 = vand.u32 %v2139, 4294901760
        %2533 = vmatpush.msra.mxu0 %v2532
        %v2534 = vand.u32 %v2138, 4294901760
        %2535 = vmatpush.msra.mxu0 %v2534
        %v2536 = vand.u32 %v2137, 4294901760
        %2537 = vmatpush.msra.mxu0 %v2536
        %v2538 = vand.u32 %v2136, 4294901760
        %2539 = vmatpush.msra.mxu0 %v2538
        %v2540 = vand.u32 %v2135, 4294901760
        %2541 = vmatpush.msra.mxu0 %v2540
        %v2542 = vand.u32 %v2134, 4294901760
        %2543 = vmatpush.msra.mxu0 %v2542
        %v2544 = vand.u32 %v2124, 4294901760
        %2545 = vmatmul.f32.gmra.mxu0 %v2544
        %v2546 = vpop.f32.mrf.mxu0
        %v2547 = vadd.f32 %v2502, %v2546
        %v2548 = vand.u32 %v2128, 4294901760
        %2549 = vmatmul.f32.gmra.mxu0 %v2548
        %v2550 = vpop.f32.mrf.mxu0
        %v2551 = vadd.f32 %v2506, %v2550
        %v2552 = vand.u32 %v2132, 4294901760
        %2553 = vmatmul.f32.gmra.mxu0 %v2552
        %v2554 = vpop.f32.mrf.mxu0
        %v2555 = vadd.f32 %v2510, %v2554
        %2556 = vdwg.mxu0
        %v2557 = vmax.f32 %v2547, 0.0
        %v2558 = vmax.f32 %v2551, 0.0
        %v2559 = vmax.f32 %v2555, 0.0
        %v2560 = vld [vmem:[#allocation11] sm:$0xff]
        %v2561 = vld [vmem:[#allocation11 + $0x8] sm:$0xff]
        %v2562 = vld [vmem:[#allocation11 + $0x10] sm:$0xff]
        %v2563 = vld [vmem:[#allocation11 + $0x18] sm:$0xff]
        %v2564 = vld [vmem:[#allocation11 + $0x20] sm:$0xff]
        %v2565 = vld [vmem:[#allocation11 + $0x28] sm:$0xff]
        %v2566 = vld [vmem:[#allocation11 + $0x30] sm:$0xff]
        %v2567 = vld [vmem:[#allocation11 + $0x38] sm:$0xff]
        %v2568 = vld [vmem:[#allocation11 + $0x40] sm:$0xff]
        %v2569 = vld [vmem:[#allocation11 + $0x48] sm:$0xff]
        %v2570 = vld [vmem:[#allocation11 + $0x50] sm:$0xff]
        %v2571 = vld [vmem:[#allocation11 + $0x58] sm:$0xff]
        %v2572 = vld [vmem:[#allocation11 + $0x60] sm:$0xff]
        %v2573 = vld [vmem:[#allocation11 + $0x68] sm:$0xff]
        %v2574 = vld [vmem:[#allocation11 + $0x70] sm:$0xff]
        %v2575 = vld [vmem:[#allocation11 + $0x78] sm:$0xff]
        %v2576 = vld [vmem:[%s10] sm:$0x1]
        %v2578 = vperm.slane %v2576, 0
        %v2580 = vand.u32 %v2575, 4294901760
        %2581 = vmatpush.msra.mxu0 %v2580
        %v2582 = vand.u32 %v2574, 4294901760
        %2583 = vmatpush.msra.mxu0 %v2582
        %v2584 = vand.u32 %v2573, 4294901760
        %2585 = vmatpush.msra.mxu0 %v2584
        %v2586 = vand.u32 %v2572, 4294901760
        %2587 = vmatpush.msra.mxu0 %v2586
        %v2588 = vand.u32 %v2571, 4294901760
        %2589 = vmatpush.msra.mxu0 %v2588
        %v2590 = vand.u32 %v2570, 4294901760
        %2591 = vmatpush.msra.mxu0 %v2590
        %v2592 = vand.u32 %v2569, 4294901760
        %2593 = vmatpush.msra.mxu0 %v2592
        %v2594 = vand.u32 %v2568, 4294901760
        %2595 = vmatpush.msra.mxu0 %v2594
        %v2596 = vand.u32 %v2567, 4294901760
        %2597 = vmatpush.msra.mxu0 %v2596
        %v2598 = vand.u32 %v2566, 4294901760
        %2599 = vmatpush.msra.mxu0 %v2598
        %v2600 = vand.u32 %v2565, 4294901760
        %2601 = vmatpush.msra.mxu0 %v2600
        %v2602 = vand.u32 %v2564, 4294901760
        %2603 = vmatpush.msra.mxu0 %v2602
        %v2604 = vand.u32 %v2563, 4294901760
        %2605 = vmatpush.msra.mxu0 %v2604
        %v2606 = vand.u32 %v2562, 4294901760
        %2607 = vmatpush.msra.mxu0 %v2606
        %v2608 = vand.u32 %v2561, 4294901760
        %2609 = vmatpush.msra.mxu0 %v2608
        %v2610 = vand.u32 %v2560, 4294901760
        %2611 = vmatpush.msra.mxu0 %v2610
        %v2612 = vand.u32 %v2557, 4294901760
        %v2613 = vsub.f32 %v2557, %v2612
        %v2614 = vand.u32 %v2613, 4294901760
        %v2615 = vsub.f32 %v2613, %v2614
        %v2616 = vand.u32 %v2615, 4294901760
        %2617 = vmatmul.f32.gmra.mxu0 %v2616
        %v2618 = vpop.f32.mrf.mxu0
        %v2619 = vadd.f32 %v2578, %v2618
        %v2620 = vand.u32 %v2558, 4294901760
        %v2621 = vsub.f32 %v2558, %v2620
        %v2622 = vand.u32 %v2621, 4294901760
        %v2623 = vsub.f32 %v2621, %v2622
        %v2624 = vand.u32 %v2623, 4294901760
        %2625 = vmatmul.f32.gmra.mxu0 %v2624
        %v2626 = vpop.f32.mrf.mxu0
        %v2627 = vadd.f32 %v2578, %v2626
        %v2628 = vand.u32 %v2559, 4294901760
        %v2629 = vsub.f32 %v2559, %v2628
        %v2630 = vand.u32 %v2629, 4294901760
        %v2631 = vsub.f32 %v2629, %v2630
        %v2632 = vand.u32 %v2631, 4294901760
        %2633 = vmatmul.f32.gmra.mxu0 %v2632
        %v2634 = vpop.f32.mrf.mxu0
        %v2635 = vadd.f32 %v2578, %v2634
        %2636 = vdwg.mxu0
        %v2637 = vand.u32 %v2575, 4294901760
        %v2638 = vsub.f32 %v2575, %v2637
        %v2639 = vand.u32 %v2638, 4294901760
        %v2640 = vsub.f32 %v2638, %v2639
        %v2641 = vand.u32 %v2640, 4294901760
        %2642 = vmatpush.msra.mxu0 %v2641
        %v2643 = vand.u32 %v2574, 4294901760
        %v2644 = vsub.f32 %v2574, %v2643
        %v2645 = vand.u32 %v2644, 4294901760
        %v2646 = vsub.f32 %v2644, %v2645
        %v2647 = vand.u32 %v2646, 4294901760
        %2648 = vmatpush.msra.mxu0 %v2647
        %v2649 = vand.u32 %v2573, 4294901760
        %v2650 = vsub.f32 %v2573, %v2649
        %v2651 = vand.u32 %v2650, 4294901760
        %v2652 = vsub.f32 %v2650, %v2651
        %v2653 = vand.u32 %v2652, 4294901760
        %2654 = vmatpush.msra.mxu0 %v2653
        %v2655 = vand.u32 %v2572, 4294901760
        %v2656 = vsub.f32 %v2572, %v2655
        %v2657 = vand.u32 %v2656, 4294901760
        %v2658 = vsub.f32 %v2656, %v2657
        %v2659 = vand.u32 %v2658, 4294901760
        %2660 = vmatpush.msra.mxu0 %v2659
        %v2661 = vand.u32 %v2571, 4294901760
        %v2662 = vsub.f32 %v2571, %v2661
        %v2663 = vand.u32 %v2662, 4294901760
        %v2664 = vsub.f32 %v2662, %v2663
        %v2665 = vand.u32 %v2664, 4294901760
        %2666 = vmatpush.msra.mxu0 %v2665
        %v2667 = vand.u32 %v2570, 4294901760
        %v2668 = vsub.f32 %v2570, %v2667
        %v2669 = vand.u32 %v2668, 4294901760
        %v2670 = vsub.f32 %v2668, %v2669
        %v2671 = vand.u32 %v2670, 4294901760
        %2672 = vmatpush.msra.mxu0 %v2671
        %v2673 = vand.u32 %v2569, 4294901760
        %v2674 = vsub.f32 %v2569, %v2673
        %v2675 = vand.u32 %v2674, 4294901760
        %v2676 = vsub.f32 %v2674, %v2675
        %v2677 = vand.u32 %v2676, 4294901760
        %2678 = vmatpush.msra.mxu0 %v2677
        %v2679 = vand.u32 %v2568, 4294901760
        %v2680 = vsub.f32 %v2568, %v2679
        %v2681 = vand.u32 %v2680, 4294901760
        %v2682 = vsub.f32 %v2680, %v2681
        %v2683 = vand.u32 %v2682, 4294901760
        %2684 = vmatpush.msra.mxu0 %v2683
        %v2685 = vand.u32 %v2567, 4294901760
        %v2686 = vsub.f32 %v2567, %v2685
        %v2687 = vand.u32 %v2686, 4294901760
        %v2688 = vsub.f32 %v2686, %v2687
        %v2689 = vand.u32 %v2688, 4294901760
        %2690 = vmatpush.msra.mxu0 %v2689
        %v2691 = vand.u32 %v2566, 4294901760
        %v2692 = vsub.f32 %v2566, %v2691
        %v2693 = vand.u32 %v2692, 4294901760
        %v2694 = vsub.f32 %v2692, %v2693
        %v2695 = vand.u32 %v2694, 4294901760
        %2696 = vmatpush.msra.mxu0 %v2695
        %v2697 = vand.u32 %v2565, 4294901760
        %v2698 = vsub.f32 %v2565, %v2697
        %v2699 = vand.u32 %v2698, 4294901760
        %v2700 = vsub.f32 %v2698, %v2699
        %v2701 = vand.u32 %v2700, 4294901760
        %2702 = vmatpush.msra.mxu0 %v2701
        %v2703 = vand.u32 %v2564, 4294901760
        %v2704 = vsub.f32 %v2564, %v2703
        %v2705 = vand.u32 %v2704, 4294901760
        %v2706 = vsub.f32 %v2704, %v2705
        %v2707 = vand.u32 %v2706, 4294901760
        %2708 = vmatpush.msra.mxu0 %v2707
        %v2709 = vand.u32 %v2563, 4294901760
        %v2710 = vsub.f32 %v2563, %v2709
        %v2711 = vand.u32 %v2710, 4294901760
        %v2712 = vsub.f32 %v2710, %v2711
        %v2713 = vand.u32 %v2712, 4294901760
        %2714 = vmatpush.msra.mxu0 %v2713
        %v2715 = vand.u32 %v2562, 4294901760
        %v2716 = vsub.f32 %v2562, %v2715
        %v2717 = vand.u32 %v2716, 4294901760
        %v2718 = vsub.f32 %v2716, %v2717
        %v2719 = vand.u32 %v2718, 4294901760
        %2720 = vmatpush.msra.mxu0 %v2719
        %v2721 = vand.u32 %v2561, 4294901760
        %v2722 = vsub.f32 %v2561, %v2721
        %v2723 = vand.u32 %v2722, 4294901760
        %v2724 = vsub.f32 %v2722, %v2723
        %v2725 = vand.u32 %v2724, 4294901760
        %2726 = vmatpush.msra.mxu0 %v2725
        %v2727 = vand.u32 %v2560, 4294901760
        %v2728 = vsub.f32 %v2560, %v2727
        %v2729 = vand.u32 %v2728, 4294901760
        %v2730 = vsub.f32 %v2728, %v2729
        %v2731 = vand.u32 %v2730, 4294901760
        %2732 = vmatpush.msra.mxu0 %v2731
        %v2733 = vand.u32 %v2557, 4294901760
        %2734 = vmatmul.f32.gmra.mxu0 %v2733
        %v2735 = vpop.f32.mrf.mxu0
        %v2736 = vadd.f32 %v2619, %v2735
        %v2737 = vand.u32 %v2558, 4294901760
        %2738 = vmatmul.f32.gmra.mxu0 %v2737
        %v2739 = vpop.f32.mrf.mxu0
        %v2740 = vadd.f32 %v2627, %v2739
        %v2741 = vand.u32 %v2559, 4294901760
        %2742 = vmatmul.f32.gmra.mxu0 %v2741
        %v2743 = vpop.f32.mrf.mxu0
        %v2744 = vadd.f32 %v2635, %v2743
        %2745 = vdwg.mxu0
        %v2746 = vand.u32 %v2575, 4294901760
        %v2747 = vsub.f32 %v2575, %v2746
        %2748 = vmatpush.msra.mxu0 %v2747
        %v2749 = vand.u32 %v2574, 4294901760
        %v2750 = vsub.f32 %v2574, %v2749
        %2751 = vmatpush.msra.mxu0 %v2750
        %v2752 = vand.u32 %v2573, 4294901760
        %v2753 = vsub.f32 %v2573, %v2752
        %2754 = vmatpush.msra.mxu0 %v2753
        %v2755 = vand.u32 %v2572, 4294901760
        %v2756 = vsub.f32 %v2572, %v2755
        %2757 = vmatpush.msra.mxu0 %v2756
        %v2758 = vand.u32 %v2571, 4294901760
        %v2759 = vsub.f32 %v2571, %v2758
        %2760 = vmatpush.msra.mxu0 %v2759
        %v2761 = vand.u32 %v2570, 4294901760
        %v2762 = vsub.f32 %v2570, %v2761
        %2763 = vmatpush.msra.mxu0 %v2762
        %v2764 = vand.u32 %v2569, 4294901760
        %v2765 = vsub.f32 %v2569, %v2764
        %2766 = vmatpush.msra.mxu0 %v2765
        %v2767 = vand.u32 %v2568, 4294901760
        %v2768 = vsub.f32 %v2568, %v2767
        %2769 = vmatpush.msra.mxu0 %v2768
        %v2770 = vand.u32 %v2567, 4294901760
        %v2771 = vsub.f32 %v2567, %v2770
        %2772 = vmatpush.msra.mxu0 %v2771
        %v2773 = vand.u32 %v2566, 4294901760
        %v2774 = vsub.f32 %v2566, %v2773
        %2775 = vmatpush.msra.mxu0 %v2774
        %v2776 = vand.u32 %v2565, 4294901760
        %v2777 = vsub.f32 %v2565, %v2776
        %2778 = vmatpush.msra.mxu0 %v2777
        %v2779 = vand.u32 %v2564, 4294901760
        %v2780 = vsub.f32 %v2564, %v2779
        %2781 = vmatpush.msra.mxu0 %v2780
        %v2782 = vand.u32 %v2563, 4294901760
        %v2783 = vsub.f32 %v2563, %v2782
        %2784 = vmatpush.msra.mxu0 %v2783
        %v2785 = vand.u32 %v2562, 4294901760
        %v2786 = vsub.f32 %v2562, %v2785
        %2787 = vmatpush.msra.mxu0 %v2786
        %v2788 = vand.u32 %v2561, 4294901760
        %v2789 = vsub.f32 %v2561, %v2788
        %2790 = vmatpush.msra.mxu0 %v2789
        %v2791 = vand.u32 %v2560, 4294901760
        %v2792 = vsub.f32 %v2560, %v2791
        %2793 = vmatpush.msra.mxu0 %v2792
        %v2794 = vand.u32 %v2557, 4294901760
        %v2795 = vsub.f32 %v2557, %v2794
        %2796 = vmatmul.f32.gmra.mxu0 %v2795
        %v2797 = vpop.f32.mrf.mxu0
        %v2798 = vadd.f32 %v2736, %v2797
        %v2799 = vand.u32 %v2558, 4294901760
        %v2800 = vsub.f32 %v2558, %v2799
        %2801 = vmatmul.f32.gmra.mxu0 %v2800
        %v2802 = vpop.f32.mrf.mxu0
        %v2803 = vadd.f32 %v2740, %v2802
        %v2804 = vand.u32 %v2559, 4294901760
        %v2805 = vsub.f32 %v2559, %v2804
        %2806 = vmatmul.f32.gmra.mxu0 %v2805
        %v2807 = vpop.f32.mrf.mxu0
        %v2808 = vadd.f32 %v2744, %v2807
        %2809 = vdwg.mxu0
        %v2810 = vand.u32 %v2575, 4294901760
        %2811 = vmatpush.msra.mxu0 %v2810
        %v2812 = vand.u32 %v2574, 4294901760
        %2813 = vmatpush.msra.mxu0 %v2812
        %v2814 = vand.u32 %v2573, 4294901760
        %2815 = vmatpush.msra.mxu0 %v2814
        %v2816 = vand.u32 %v2572, 4294901760
        %2817 = vmatpush.msra.mxu0 %v2816
        %v2818 = vand.u32 %v2571, 4294901760
        %2819 = vmatpush.msra.mxu0 %v2818
        %v2820 = vand.u32 %v2570, 4294901760
        %2821 = vmatpush.msra.mxu0 %v2820
        %v2822 = vand.u32 %v2569, 4294901760
        %2823 = vmatpush.msra.mxu0 %v2822
        %v2824 = vand.u32 %v2568, 4294901760
        %2825 = vmatpush.msra.mxu0 %v2824
        %v2826 = vand.u32 %v2567, 4294901760
        %2827 = vmatpush.msra.mxu0 %v2826
        %v2828 = vand.u32 %v2566, 4294901760
        %2829 = vmatpush.msra.mxu0 %v2828
        %v2830 = vand.u32 %v2565, 4294901760
        %2831 = vmatpush.msra.mxu0 %v2830
        %v2832 = vand.u32 %v2564, 4294901760
        %2833 = vmatpush.msra.mxu0 %v2832
        %v2834 = vand.u32 %v2563, 4294901760
        %2835 = vmatpush.msra.mxu0 %v2834
        %v2836 = vand.u32 %v2562, 4294901760
        %2837 = vmatpush.msra.mxu0 %v2836
        %v2838 = vand.u32 %v2561, 4294901760
        %2839 = vmatpush.msra.mxu0 %v2838
        %v2840 = vand.u32 %v2560, 4294901760
        %2841 = vmatpush.msra.mxu0 %v2840
        %v2842 = vand.u32 %v2557, 4294901760
        %v2843 = vsub.f32 %v2557, %v2842
        %v2844 = vand.u32 %v2843, 4294901760
        %2845 = vmatmul.f32.gmra.mxu0 %v2844
        %v2846 = vpop.f32.mrf.mxu0
        %v2847 = vadd.f32 %v2798, %v2846
        %v2848 = vand.u32 %v2558, 4294901760
        %v2849 = vsub.f32 %v2558, %v2848
        %v2850 = vand.u32 %v2849, 4294901760
        %2851 = vmatmul.f32.gmra.mxu0 %v2850
        %v2852 = vpop.f32.mrf.mxu0
        %v2853 = vadd.f32 %v2803, %v2852
        %v2854 = vand.u32 %v2559, 4294901760
        %v2855 = vsub.f32 %v2559, %v2854
        %v2856 = vand.u32 %v2855, 4294901760
        %2857 = vmatmul.f32.gmra.mxu0 %v2856
        %v2858 = vpop.f32.mrf.mxu0
        %v2859 = vadd.f32 %v2808, %v2858
        %2860 = vdwg.mxu0
        %v2861 = vand.u32 %v2575, 4294901760
        %v2862 = vsub.f32 %v2575, %v2861
        %v2863 = vand.u32 %v2862, 4294901760
        %2864 = vmatpush.msra.mxu0 %v2863
        %v2865 = vand.u32 %v2574, 4294901760
        %v2866 = vsub.f32 %v2574, %v2865
        %v2867 = vand.u32 %v2866, 4294901760
        %2868 = vmatpush.msra.mxu0 %v2867
        %v2869 = vand.u32 %v2573, 4294901760
        %v2870 = vsub.f32 %v2573, %v2869
        %v2871 = vand.u32 %v2870, 4294901760
        %2872 = vmatpush.msra.mxu0 %v2871
        %v2873 = vand.u32 %v2572, 4294901760
        %v2874 = vsub.f32 %v2572, %v2873
        %v2875 = vand.u32 %v2874, 4294901760
        %2876 = vmatpush.msra.mxu0 %v2875
        %v2877 = vand.u32 %v2571, 4294901760
        %v2878 = vsub.f32 %v2571, %v2877
        %v2879 = vand.u32 %v2878, 4294901760
        %2880 = vmatpush.msra.mxu0 %v2879
        %v2881 = vand.u32 %v2570, 4294901760
        %v2882 = vsub.f32 %v2570, %v2881
        %v2883 = vand.u32 %v2882, 4294901760
        %2884 = vmatpush.msra.mxu0 %v2883
        %v2885 = vand.u32 %v2569, 4294901760
        %v2886 = vsub.f32 %v2569, %v2885
        %v2887 = vand.u32 %v2886, 4294901760
        %2888 = vmatpush.msra.mxu0 %v2887
        %v2889 = vand.u32 %v2568, 4294901760
        %v2890 = vsub.f32 %v2568, %v2889
        %v2891 = vand.u32 %v2890, 4294901760
        %2892 = vmatpush.msra.mxu0 %v2891
        %v2893 = vand.u32 %v2567, 4294901760
        %v2894 = vsub.f32 %v2567, %v2893
        %v2895 = vand.u32 %v2894, 4294901760
        %2896 = vmatpush.msra.mxu0 %v2895
        %v2897 = vand.u32 %v2566, 4294901760
        %v2898 = vsub.f32 %v2566, %v2897
        %v2899 = vand.u32 %v2898, 4294901760
        %2900 = vmatpush.msra.mxu0 %v2899
        %v2901 = vand.u32 %v2565, 4294901760
        %v2902 = vsub.f32 %v2565, %v2901
        %v2903 = vand.u32 %v2902, 4294901760
        %2904 = vmatpush.msra.mxu0 %v2903
        %v2905 = vand.u32 %v2564, 4294901760
        %v2906 = vsub.f32 %v2564, %v2905
        %v2907 = vand.u32 %v2906, 4294901760
        %2908 = vmatpush.msra.mxu0 %v2907
        %v2909 = vand.u32 %v2563, 4294901760
        %v2910 = vsub.f32 %v2563, %v2909
        %v2911 = vand.u32 %v2910, 4294901760
        %2912 = vmatpush.msra.mxu0 %v2911
        %v2913 = vand.u32 %v2562, 4294901760
        %v2914 = vsub.f32 %v2562, %v2913
        %v2915 = vand.u32 %v2914, 4294901760
        %2916 = vmatpush.msra.mxu0 %v2915
        %v2917 = vand.u32 %v2561, 4294901760
        %v2918 = vsub.f32 %v2561, %v2917
        %v2919 = vand.u32 %v2918, 4294901760
        %2920 = vmatpush.msra.mxu0 %v2919
        %v2921 = vand.u32 %v2560, 4294901760
        %v2922 = vsub.f32 %v2560, %v2921
        %v2923 = vand.u32 %v2922, 4294901760
        %2924 = vmatpush.msra.mxu0 %v2923
        %v2925 = vand.u32 %v2557, 4294901760
        %2926 = vmatmul.f32.gmra.mxu0 %v2925
        %v2927 = vpop.f32.mrf.mxu0
        %v2928 = vadd.f32 %v2847, %v2927
        %v2929 = vand.u32 %v2558, 4294901760
        %2930 = vmatmul.f32.gmra.mxu0 %v2929
        %v2931 = vpop.f32.mrf.mxu0
        %v2932 = vadd.f32 %v2853, %v2931
        %v2933 = vand.u32 %v2559, 4294901760
        %2934 = vmatmul.f32.gmra.mxu0 %v2933
        %v2935 = vpop.f32.mrf.mxu0
        %v2936 = vadd.f32 %v2859, %v2935
        %2937 = vdwg.mxu0
        %v2938 = vand.u32 %v2575, 4294901760
        %2939 = vmatpush.msra.mxu0 %v2938
        %v2940 = vand.u32 %v2574, 4294901760
        %2941 = vmatpush.msra.mxu0 %v2940
        %v2942 = vand.u32 %v2573, 4294901760
        %2943 = vmatpush.msra.mxu0 %v2942
        %v2944 = vand.u32 %v2572, 4294901760
        %2945 = vmatpush.msra.mxu0 %v2944
        %v2946 = vand.u32 %v2571, 4294901760
        %2947 = vmatpush.msra.mxu0 %v2946
        %v2948 = vand.u32 %v2570, 4294901760
        %2949 = vmatpush.msra.mxu0 %v2948
        %v2950 = vand.u32 %v2569, 4294901760
        %2951 = vmatpush.msra.mxu0 %v2950
        %v2952 = vand.u32 %v2568, 4294901760
        %2953 = vmatpush.msra.mxu0 %v2952
        %v2954 = vand.u32 %v2567, 4294901760
        %2955 = vmatpush.msra.mxu0 %v2954
        %v2956 = vand.u32 %v2566, 4294901760
        %2957 = vmatpush.msra.mxu0 %v2956
        %v2958 = vand.u32 %v2565, 4294901760
        %2959 = vmatpush.msra.mxu0 %v2958
        %v2960 = vand.u32 %v2564, 4294901760
        %2961 = vmatpush.msra.mxu0 %v2960
        %v2962 = vand.u32 %v2563, 4294901760
        %2963 = vmatpush.msra.mxu0 %v2962
        %v2964 = vand.u32 %v2562, 4294901760
        %2965 = vmatpush.msra.mxu0 %v2964
        %v2966 = vand.u32 %v2561, 4294901760
        %2967 = vmatpush.msra.mxu0 %v2966
        %v2968 = vand.u32 %v2560, 4294901760
        %2969 = vmatpush.msra.mxu0 %v2968
        %v2970 = vand.u32 %v2557, 4294901760
        %2971 = vmatmul.f32.gmra.mxu0 %v2970
        %v2972 = vpop.f32.mrf.mxu0
        %v2973 = vadd.f32 %v2928, %v2972
        %v2974 = vand.u32 %v2558, 4294901760
        %2975 = vmatmul.f32.gmra.mxu0 %v2974
        %v2976 = vpop.f32.mrf.mxu0
        %v2977 = vadd.f32 %v2932, %v2976
        %v2978 = vand.u32 %v2559, 4294901760
        %2979 = vmatmul.f32.gmra.mxu0 %v2978
        %v2980 = vpop.f32.mrf.mxu0
        %v2981 = vadd.f32 %v2936, %v2980
        %2982 = vdwg.mxu0
        %v2983 = vmax.f32 %v2973, 0.0
        %v2984 = vmax.f32 %v2977, 0.0
        %v2985 = vmax.f32 %v2981, 0.0
        %v2986 = vld [vmem:[#allocation13] sm:$0xff]
        %v2987 = vld [vmem:[#allocation13 + $0x8] sm:$0xff]
        %v2988 = vld [vmem:[#allocation13 + $0x10] sm:$0xff]
        %v2989 = vld [vmem:[#allocation13 + $0x18] sm:$0xff]
        %v2990 = vld [vmem:[#allocation13 + $0x20] sm:$0xff]
        %v2991 = vld [vmem:[#allocation13 + $0x28] sm:$0xff]
        %v2992 = vld [vmem:[#allocation13 + $0x30] sm:$0xff]
        %v2993 = vld [vmem:[#allocation13 + $0x38] sm:$0xff]
        %v2994 = vld [vmem:[#allocation13 + $0x40] sm:$0xff]
        %v2995 = vld [vmem:[#allocation13 + $0x48] sm:$0xff]
        %v2996 = vld [vmem:[#allocation13 + $0x50] sm:$0xff]
        %v2997 = vld [vmem:[#allocation13 + $0x58] sm:$0xff]
        %v2998 = vld [vmem:[#allocation13 + $0x60] sm:$0xff]
        %v2999 = vld [vmem:[#allocation13 + $0x68] sm:$0xff]
        %v3000 = vld [vmem:[#allocation13 + $0x70] sm:$0xff]
        %v3001 = vld [vmem:[#allocation13 + $0x78] sm:$0xff]
        %v3002 = vld [vmem:[%s12] sm:$0x1]
        %v3004 = vperm.slane %v3002, 0
        %v3006 = vand.u32 %v3001, 4294901760
        %3007 = vmatpush.msra.mxu0 %v3006
        %v3008 = vand.u32 %v3000, 4294901760
        %3009 = vmatpush.msra.mxu0 %v3008
        %v3010 = vand.u32 %v2999, 4294901760
        %3011 = vmatpush.msra.mxu0 %v3010
        %v3012 = vand.u32 %v2998, 4294901760
        %3013 = vmatpush.msra.mxu0 %v3012
        %v3014 = vand.u32 %v2997, 4294901760
        %3015 = vmatpush.msra.mxu0 %v3014
        %v3016 = vand.u32 %v2996, 4294901760
        %3017 = vmatpush.msra.mxu0 %v3016
        %v3018 = vand.u32 %v2995, 4294901760
        %3019 = vmatpush.msra.mxu0 %v3018
        %v3020 = vand.u32 %v2994, 4294901760
        %3021 = vmatpush.msra.mxu0 %v3020
        %v3022 = vand.u32 %v2993, 4294901760
        %3023 = vmatpush.msra.mxu0 %v3022
        %v3024 = vand.u32 %v2992, 4294901760
        %3025 = vmatpush.msra.mxu0 %v3024
        %v3026 = vand.u32 %v2991, 4294901760
        %3027 = vmatpush.msra.mxu0 %v3026
        %v3028 = vand.u32 %v2990, 4294901760
        %3029 = vmatpush.msra.mxu0 %v3028
        %v3030 = vand.u32 %v2989, 4294901760
        %3031 = vmatpush.msra.mxu0 %v3030
        %v3032 = vand.u32 %v2988, 4294901760
        %3033 = vmatpush.msra.mxu0 %v3032
        %v3034 = vand.u32 %v2987, 4294901760
        %3035 = vmatpush.msra.mxu0 %v3034
        %v3036 = vand.u32 %v2986, 4294901760
        %3037 = vmatpush.msra.mxu0 %v3036
        %v3038 = vand.u32 %v2983, 4294901760
        %v3039 = vsub.f32 %v2983, %v3038
        %v3040 = vand.u32 %v3039, 4294901760
        %v3041 = vsub.f32 %v3039, %v3040
        %v3042 = vand.u32 %v3041, 4294901760
        %3043 = vmatmul.f32.gmra.mxu0 %v3042
        %v3044 = vpop.f32.mrf.mxu0
        %v3045 = vadd.f32 %v3004, %v3044
        %v3046 = vand.u32 %v2984, 4294901760
        %v3047 = vsub.f32 %v2984, %v3046
        %v3048 = vand.u32 %v3047, 4294901760
        %v3049 = vsub.f32 %v3047, %v3048
        %v3050 = vand.u32 %v3049, 4294901760
        %3051 = vmatmul.f32.gmra.mxu0 %v3050
        %v3052 = vpop.f32.mrf.mxu0
        %v3053 = vadd.f32 %v3004, %v3052
        %v3054 = vand.u32 %v2985, 4294901760
        %v3055 = vsub.f32 %v2985, %v3054
        %v3056 = vand.u32 %v3055, 4294901760
        %v3057 = vsub.f32 %v3055, %v3056
        %v3058 = vand.u32 %v3057, 4294901760
        %3059 = vmatmul.f32.gmra.mxu0 %v3058
        %v3060 = vpop.f32.mrf.mxu0
        %v3061 = vadd.f32 %v3004, %v3060
        %3062 = vdwg.mxu0
        %v3063 = vand.u32 %v3001, 4294901760
        %v3064 = vsub.f32 %v3001, %v3063
        %v3065 = vand.u32 %v3064, 4294901760
        %v3066 = vsub.f32 %v3064, %v3065
        %v3067 = vand.u32 %v3066, 4294901760
        %3068 = vmatpush.msra.mxu0 %v3067
        %v3069 = vand.u32 %v3000, 4294901760
        %v3070 = vsub.f32 %v3000, %v3069
        %v3071 = vand.u32 %v3070, 4294901760
        %v3072 = vsub.f32 %v3070, %v3071
        %v3073 = vand.u32 %v3072, 4294901760
        %3074 = vmatpush.msra.mxu0 %v3073
        %v3075 = vand.u32 %v2999, 4294901760
        %v3076 = vsub.f32 %v2999, %v3075
        %v3077 = vand.u32 %v3076, 4294901760
        %v3078 = vsub.f32 %v3076, %v3077
        %v3079 = vand.u32 %v3078, 4294901760
        %3080 = vmatpush.msra.mxu0 %v3079
        %v3081 = vand.u32 %v2998, 4294901760
        %v3082 = vsub.f32 %v2998, %v3081
        %v3083 = vand.u32 %v3082, 4294901760
        %v3084 = vsub.f32 %v3082, %v3083
        %v3085 = vand.u32 %v3084, 4294901760
        %3086 = vmatpush.msra.mxu0 %v3085
        %v3087 = vand.u32 %v2997, 4294901760
        %v3088 = vsub.f32 %v2997, %v3087
        %v3089 = vand.u32 %v3088, 4294901760
        %v3090 = vsub.f32 %v3088, %v3089
        %v3091 = vand.u32 %v3090, 4294901760
        %3092 = vmatpush.msra.mxu0 %v3091
        %v3093 = vand.u32 %v2996, 4294901760
        %v3094 = vsub.f32 %v2996, %v3093
        %v3095 = vand.u32 %v3094, 4294901760
        %v3096 = vsub.f32 %v3094, %v3095
        %v3097 = vand.u32 %v3096, 4294901760
        %3098 = vmatpush.msra.mxu0 %v3097
        %v3099 = vand.u32 %v2995, 4294901760
        %v3100 = vsub.f32 %v2995, %v3099
        %v3101 = vand.u32 %v3100, 4294901760
        %v3102 = vsub.f32 %v3100, %v3101
        %v3103 = vand.u32 %v3102, 4294901760
        %3104 = vmatpush.msra.mxu0 %v3103
        %v3105 = vand.u32 %v2994, 4294901760
        %v3106 = vsub.f32 %v2994, %v3105
        %v3107 = vand.u32 %v3106, 4294901760
        %v3108 = vsub.f32 %v3106, %v3107
        %v3109 = vand.u32 %v3108, 4294901760
        %3110 = vmatpush.msra.mxu0 %v3109
        %v3111 = vand.u32 %v2993, 4294901760
        %v3112 = vsub.f32 %v2993, %v3111
        %v3113 = vand.u32 %v3112, 4294901760
        %v3114 = vsub.f32 %v3112, %v3113
        %v3115 = vand.u32 %v3114, 4294901760
        %3116 = vmatpush.msra.mxu0 %v3115
        %v3117 = vand.u32 %v2992, 4294901760
        %v3118 = vsub.f32 %v2992, %v3117
        %v3119 = vand.u32 %v3118, 4294901760
        %v3120 = vsub.f32 %v3118, %v3119
        %v3121 = vand.u32 %v3120, 4294901760
        %3122 = vmatpush.msra.mxu0 %v3121
        %v3123 = vand.u32 %v2991, 4294901760
        %v3124 = vsub.f32 %v2991, %v3123
        %v3125 = vand.u32 %v3124, 4294901760
        %v3126 = vsub.f32 %v3124, %v3125
        %v3127 = vand.u32 %v3126, 4294901760
        %3128 = vmatpush.msra.mxu0 %v3127
        %v3129 = vand.u32 %v2990, 4294901760
        %v3130 = vsub.f32 %v2990, %v3129
        %v3131 = vand.u32 %v3130, 4294901760
        %v3132 = vsub.f32 %v3130, %v3131
        %v3133 = vand.u32 %v3132, 4294901760
        %3134 = vmatpush.msra.mxu0 %v3133
        %v3135 = vand.u32 %v2989, 4294901760
        %v3136 = vsub.f32 %v2989, %v3135
        %v3137 = vand.u32 %v3136, 4294901760
        %v3138 = vsub.f32 %v3136, %v3137
        %v3139 = vand.u32 %v3138, 4294901760
        %3140 = vmatpush.msra.mxu0 %v3139
        %v3141 = vand.u32 %v2988, 4294901760
        %v3142 = vsub.f32 %v2988, %v3141
        %v3143 = vand.u32 %v3142, 4294901760
        %v3144 = vsub.f32 %v3142, %v3143
        %v3145 = vand.u32 %v3144, 4294901760
        %3146 = vmatpush.msra.mxu0 %v3145
        %v3147 = vand.u32 %v2987, 4294901760
        %v3148 = vsub.f32 %v2987, %v3147
        %v3149 = vand.u32 %v3148, 4294901760
        %v3150 = vsub.f32 %v3148, %v3149
        %v3151 = vand.u32 %v3150, 4294901760
        %3152 = vmatpush.msra.mxu0 %v3151
        %v3153 = vand.u32 %v2986, 4294901760
        %v3154 = vsub.f32 %v2986, %v3153
        %v3155 = vand.u32 %v3154, 4294901760
        %v3156 = vsub.f32 %v3154, %v3155
        %v3157 = vand.u32 %v3156, 4294901760
        %3158 = vmatpush.msra.mxu0 %v3157
        %v3159 = vand.u32 %v2983, 4294901760
        %3160 = vmatmul.f32.gmra.mxu0 %v3159
        %v3161 = vpop.f32.mrf.mxu0
        %v3162 = vadd.f32 %v3045, %v3161
        %v3163 = vand.u32 %v2984, 4294901760
        %3164 = vmatmul.f32.gmra.mxu0 %v3163
        %v3165 = vpop.f32.mrf.mxu0
        %v3166 = vadd.f32 %v3053, %v3165
        %v3167 = vand.u32 %v2985, 4294901760
        %3168 = vmatmul.f32.gmra.mxu0 %v3167
        %v3169 = vpop.f32.mrf.mxu0
        %v3170 = vadd.f32 %v3061, %v3169
        %3171 = vdwg.mxu0
        %v3172 = vand.u32 %v3001, 4294901760
        %v3173 = vsub.f32 %v3001, %v3172
        %3174 = vmatpush.msra.mxu0 %v3173
        %v3175 = vand.u32 %v3000, 4294901760
        %v3176 = vsub.f32 %v3000, %v3175
        %3177 = vmatpush.msra.mxu0 %v3176
        %v3178 = vand.u32 %v2999, 4294901760
        %v3179 = vsub.f32 %v2999, %v3178
        %3180 = vmatpush.msra.mxu0 %v3179
        %v3181 = vand.u32 %v2998, 4294901760
        %v3182 = vsub.f32 %v2998, %v3181
        %3183 = vmatpush.msra.mxu0 %v3182
        %v3184 = vand.u32 %v2997, 4294901760
        %v3185 = vsub.f32 %v2997, %v3184
        %3186 = vmatpush.msra.mxu0 %v3185
        %v3187 = vand.u32 %v2996, 4294901760
        %v3188 = vsub.f32 %v2996, %v3187
        %3189 = vmatpush.msra.mxu0 %v3188
        %v3190 = vand.u32 %v2995, 4294901760
        %v3191 = vsub.f32 %v2995, %v3190
        %3192 = vmatpush.msra.mxu0 %v3191
        %v3193 = vand.u32 %v2994, 4294901760
        %v3194 = vsub.f32 %v2994, %v3193
        %3195 = vmatpush.msra.mxu0 %v3194
        %v3196 = vand.u32 %v2993, 4294901760
        %v3197 = vsub.f32 %v2993, %v3196
        %3198 = vmatpush.msra.mxu0 %v3197
        %v3199 = vand.u32 %v2992, 4294901760
        %v3200 = vsub.f32 %v2992, %v3199
        %3201 = vmatpush.msra.mxu0 %v3200
        %v3202 = vand.u32 %v2991, 4294901760
        %v3203 = vsub.f32 %v2991, %v3202
        %3204 = vmatpush.msra.mxu0 %v3203
        %v3205 = vand.u32 %v2990, 4294901760
        %v3206 = vsub.f32 %v2990, %v3205
        %3207 = vmatpush.msra.mxu0 %v3206
        %v3208 = vand.u32 %v2989, 4294901760
        %v3209 = vsub.f32 %v2989, %v3208
        %3210 = vmatpush.msra.mxu0 %v3209
        %v3211 = vand.u32 %v2988, 4294901760
        %v3212 = vsub.f32 %v2988, %v3211
        %3213 = vmatpush.msra.mxu0 %v3212
        %v3214 = vand.u32 %v2987, 4294901760
        %v3215 = vsub.f32 %v2987, %v3214
        %3216 = vmatpush.msra.mxu0 %v3215
        %v3217 = vand.u32 %v2986, 4294901760
        %v3218 = vsub.f32 %v2986, %v3217
        %3219 = vmatpush.msra.mxu0 %v3218
        %v3220 = vand.u32 %v2983, 4294901760
        %v3221 = vsub.f32 %v2983, %v3220
        %3222 = vmatmul.f32.gmra.mxu0 %v3221
        %v3223 = vpop.f32.mrf.mxu0
        %v3224 = vadd.f32 %v3162, %v3223
        %v3225 = vand.u32 %v2984, 4294901760
        %v3226 = vsub.f32 %v2984, %v3225
        %3227 = vmatmul.f32.gmra.mxu0 %v3226
        %v3228 = vpop.f32.mrf.mxu0
        %v3229 = vadd.f32 %v3166, %v3228
        %v3230 = vand.u32 %v2985, 4294901760
        %v3231 = vsub.f32 %v2985, %v3230
        %3232 = vmatmul.f32.gmra.mxu0 %v3231
        %v3233 = vpop.f32.mrf.mxu0
        %v3234 = vadd.f32 %v3170, %v3233
        %3235 = vdwg.mxu0
        %v3236 = vand.u32 %v3001, 4294901760
        %3237 = vmatpush.msra.mxu0 %v3236
        %v3238 = vand.u32 %v3000, 4294901760
        %3239 = vmatpush.msra.mxu0 %v3238
        %v3240 = vand.u32 %v2999, 4294901760
        %3241 = vmatpush.msra.mxu0 %v3240
        %v3242 = vand.u32 %v2998, 4294901760
        %3243 = vmatpush.msra.mxu0 %v3242
        %v3244 = vand.u32 %v2997, 4294901760
        %3245 = vmatpush.msra.mxu0 %v3244
        %v3246 = vand.u32 %v2996, 4294901760
        %3247 = vmatpush.msra.mxu0 %v3246
        %v3248 = vand.u32 %v2995, 4294901760
        %3249 = vmatpush.msra.mxu0 %v3248
        %v3250 = vand.u32 %v2994, 4294901760
        %3251 = vmatpush.msra.mxu0 %v3250
        %v3252 = vand.u32 %v2993, 4294901760
        %3253 = vmatpush.msra.mxu0 %v3252
        %v3254 = vand.u32 %v2992, 4294901760
        %3255 = vmatpush.msra.mxu0 %v3254
        %v3256 = vand.u32 %v2991, 4294901760
        %3257 = vmatpush.msra.mxu0 %v3256
        %v3258 = vand.u32 %v2990, 4294901760
        %3259 = vmatpush.msra.mxu0 %v3258
        %v3260 = vand.u32 %v2989, 4294901760
        %3261 = vmatpush.msra.mxu0 %v3260
        %v3262 = vand.u32 %v2988, 4294901760
        %3263 = vmatpush.msra.mxu0 %v3262
        %v3264 = vand.u32 %v2987, 4294901760
        %3265 = vmatpush.msra.mxu0 %v3264
        %v3266 = vand.u32 %v2986, 4294901760
        %3267 = vmatpush.msra.mxu0 %v3266
        %v3268 = vand.u32 %v2983, 4294901760
        %v3269 = vsub.f32 %v2983, %v3268
        %v3270 = vand.u32 %v3269, 4294901760
        %3271 = vmatmul.f32.gmra.mxu0 %v3270
        %v3272 = vpop.f32.mrf.mxu0
        %v3273 = vadd.f32 %v3224, %v3272
        %v3274 = vand.u32 %v2984, 4294901760
        %v3275 = vsub.f32 %v2984, %v3274
        %v3276 = vand.u32 %v3275, 4294901760
        %3277 = vmatmul.f32.gmra.mxu0 %v3276
        %v3278 = vpop.f32.mrf.mxu0
        %v3279 = vadd.f32 %v3229, %v3278
        %v3280 = vand.u32 %v2985, 4294901760
        %v3281 = vsub.f32 %v2985, %v3280
        %v3282 = vand.u32 %v3281, 4294901760
        %3283 = vmatmul.f32.gmra.mxu0 %v3282
        %v3284 = vpop.f32.mrf.mxu0
        %v3285 = vadd.f32 %v3234, %v3284
        %3286 = vdwg.mxu0
        %v3287 = vand.u32 %v3001, 4294901760
        %v3288 = vsub.f32 %v3001, %v3287
        %v3289 = vand.u32 %v3288, 4294901760
        %3290 = vmatpush.msra.mxu0 %v3289
        %v3291 = vand.u32 %v3000, 4294901760
        %v3292 = vsub.f32 %v3000, %v3291
        %v3293 = vand.u32 %v3292, 4294901760
        %3294 = vmatpush.msra.mxu0 %v3293
        %v3295 = vand.u32 %v2999, 4294901760
        %v3296 = vsub.f32 %v2999, %v3295
        %v3297 = vand.u32 %v3296, 4294901760
        %3298 = vmatpush.msra.mxu0 %v3297
        %v3299 = vand.u32 %v2998, 4294901760
        %v3300 = vsub.f32 %v2998, %v3299
        %v3301 = vand.u32 %v3300, 4294901760
        %3302 = vmatpush.msra.mxu0 %v3301
        %v3303 = vand.u32 %v2997, 4294901760
        %v3304 = vsub.f32 %v2997, %v3303
        %v3305 = vand.u32 %v3304, 4294901760
        %3306 = vmatpush.msra.mxu0 %v3305
        %v3307 = vand.u32 %v2996, 4294901760
        %v3308 = vsub.f32 %v2996, %v3307
        %v3309 = vand.u32 %v3308, 4294901760
        %3310 = vmatpush.msra.mxu0 %v3309
        %v3311 = vand.u32 %v2995, 4294901760
        %v3312 = vsub.f32 %v2995, %v3311
        %v3313 = vand.u32 %v3312, 4294901760
        %3314 = vmatpush.msra.mxu0 %v3313
        %v3315 = vand.u32 %v2994, 4294901760
        %v3316 = vsub.f32 %v2994, %v3315
        %v3317 = vand.u32 %v3316, 4294901760
        %3318 = vmatpush.msra.mxu0 %v3317
        %v3319 = vand.u32 %v2993, 4294901760
        %v3320 = vsub.f32 %v2993, %v3319
        %v3321 = vand.u32 %v3320, 4294901760
        %3322 = vmatpush.msra.mxu0 %v3321
        %v3323 = vand.u32 %v2992, 4294901760
        %v3324 = vsub.f32 %v2992, %v3323
        %v3325 = vand.u32 %v3324, 4294901760
        %3326 = vmatpush.msra.mxu0 %v3325
        %v3327 = vand.u32 %v2991, 4294901760
        %v3328 = vsub.f32 %v2991, %v3327
        %v3329 = vand.u32 %v3328, 4294901760
        %3330 = vmatpush.msra.mxu0 %v3329
        %v3331 = vand.u32 %v2990, 4294901760
        %v3332 = vsub.f32 %v2990, %v3331
        %v3333 = vand.u32 %v3332, 4294901760
        %3334 = vmatpush.msra.mxu0 %v3333
        %v3335 = vand.u32 %v2989, 4294901760
        %v3336 = vsub.f32 %v2989, %v3335
        %v3337 = vand.u32 %v3336, 4294901760
        %3338 = vmatpush.msra.mxu0 %v3337
        %v3339 = vand.u32 %v2988, 4294901760
        %v3340 = vsub.f32 %v2988, %v3339
        %v3341 = vand.u32 %v3340, 4294901760
        %3342 = vmatpush.msra.mxu0 %v3341
        %v3343 = vand.u32 %v2987, 4294901760
        %v3344 = vsub.f32 %v2987, %v3343
        %v3345 = vand.u32 %v3344, 4294901760
        %3346 = vmatpush.msra.mxu0 %v3345
        %v3347 = vand.u32 %v2986, 4294901760
        %v3348 = vsub.f32 %v2986, %v3347
        %v3349 = vand.u32 %v3348, 4294901760
        %3350 = vmatpush.msra.mxu0 %v3349
        %v3351 = vand.u32 %v2983, 4294901760
        %3352 = vmatmul.f32.gmra.mxu0 %v3351
        %v3353 = vpop.f32.mrf.mxu0
        %v3354 = vadd.f32 %v3273, %v3353
        %v3355 = vand.u32 %v2984, 4294901760
        %3356 = vmatmul.f32.gmra.mxu0 %v3355
        %v3357 = vpop.f32.mrf.mxu0
        %v3358 = vadd.f32 %v3279, %v3357
        %v3359 = vand.u32 %v2985, 4294901760
        %3360 = vmatmul.f32.gmra.mxu0 %v3359
        %v3361 = vpop.f32.mrf.mxu0
        %v3362 = vadd.f32 %v3285, %v3361
        %3363 = vdwg.mxu0
        %v3364 = vand.u32 %v3001, 4294901760
        %3365 = vmatpush.msra.mxu0 %v3364
        %v3366 = vand.u32 %v3000, 4294901760
        %3367 = vmatpush.msra.mxu0 %v3366
        %v3368 = vand.u32 %v2999, 4294901760
        %3369 = vmatpush.msra.mxu0 %v3368
        %v3370 = vand.u32 %v2998, 4294901760
        %3371 = vmatpush.msra.mxu0 %v3370
        %v3372 = vand.u32 %v2997, 4294901760
        %3373 = vmatpush.msra.mxu0 %v3372
        %v3374 = vand.u32 %v2996, 4294901760
        %3375 = vmatpush.msra.mxu0 %v3374
        %v3376 = vand.u32 %v2995, 4294901760
        %3377 = vmatpush.msra.mxu0 %v3376
        %v3378 = vand.u32 %v2994, 4294901760
        %3379 = vmatpush.msra.mxu0 %v3378
        %v3380 = vand.u32 %v2993, 4294901760
        %3381 = vmatpush.msra.mxu0 %v3380
        %v3382 = vand.u32 %v2992, 4294901760
        %3383 = vmatpush.msra.mxu0 %v3382
        %v3384 = vand.u32 %v2991, 4294901760
        %3385 = vmatpush.msra.mxu0 %v3384
        %v3386 = vand.u32 %v2990, 4294901760
        %3387 = vmatpush.msra.mxu0 %v3386
        %v3388 = vand.u32 %v2989, 4294901760
        %3389 = vmatpush.msra.mxu0 %v3388
        %v3390 = vand.u32 %v2988, 4294901760
        %3391 = vmatpush.msra.mxu0 %v3390
        %v3392 = vand.u32 %v2987, 4294901760
        %3393 = vmatpush.msra.mxu0 %v3392
        %v3394 = vand.u32 %v2986, 4294901760
        %3395 = vmatpush.msra.mxu0 %v3394
        %v3396 = vand.u32 %v2983, 4294901760
        %3397 = vmatmul.f32.gmra.mxu0 %v3396
        %v3398 = vpop.f32.mrf.mxu0
        %v3399 = vadd.f32 %v3354, %v3398
        %v3400 = vand.u32 %v2984, 4294901760
        %3401 = vmatmul.f32.gmra.mxu0 %v3400
        %v3402 = vpop.f32.mrf.mxu0
        %v3403 = vadd.f32 %v3358, %v3402
        %v3404 = vand.u32 %v2985, 4294901760
        %3405 = vmatmul.f32.gmra.mxu0 %v3404
        %v3406 = vpop.f32.mrf.mxu0
        %v3407 = vadd.f32 %v3362, %v3406
        %3408 = vdwg.mxu0
        %v3409 = vld [vmem:[#allocation14] sm:$0xff]
        %v3410 = vld [vmem:[#allocation14 + $0x8] sm:$0xff]
        %v3411 = vld [vmem:[#allocation14 + $0x10] sm:$0xff]
        %v3412 = vld [vmem:[#allocation14 + $0x18] sm:$0xff]
        %v3413 = vld [vmem:[#allocation14 + $0x20] sm:$0xff]
        %v3414 = vld [vmem:[#allocation14 + $0x28] sm:$0xff]
        %v3415 = vld [vmem:[#allocation14 + $0x30] sm:$0xff]
        %v3416 = vld [vmem:[#allocation14 + $0x38] sm:$0xff]
        %v3417 = vld [vmem:[#allocation14 + $0x40] sm:$0xff]
        %v3418 = vld [vmem:[#allocation14 + $0x48] sm:$0xff]
        %v3419 = vld [vmem:[#allocation14 + $0x50] sm:$0xff]
        %v3420 = vld [vmem:[#allocation14 + $0x58] sm:$0xff]
        %v3421 = vld [vmem:[#allocation14 + $0x60] sm:$0xff]
        %v3422 = vld [vmem:[#allocation14 + $0x68] sm:$0xff]
        %v3423 = vld [vmem:[#allocation14 + $0x70] sm:$0xff]
        %v3424 = vld [vmem:[#allocation14 + $0x78] sm:$0xff]
        %v3425 = vld [vmem:[#allocation16] sm:$0xff]
        %v3426 = vld [vmem:[#allocation16 + $0x8] sm:$0xff]
        %v3427 = vld [vmem:[#allocation16 + $0x10] sm:$0xff]
        %v3428 = vld [vmem:[#allocation16 + $0x18] sm:$0xff]
        %v3429 = vld [vmem:[#allocation16 + $0x20] sm:$0xff]
        %v3430 = vld [vmem:[#allocation16 + $0x28] sm:$0xff]
        %v3431 = vld [vmem:[#allocation16 + $0x30] sm:$0xff]
        %v3432 = vld [vmem:[#allocation16 + $0x38] sm:$0xff]
        %v3433 = vld [vmem:[#allocation16 + $0x40] sm:$0xff]
        %v3434 = vld [vmem:[#allocation16 + $0x48] sm:$0xff]
        %v3435 = vld [vmem:[#allocation16 + $0x50] sm:$0xff]
        %v3436 = vld [vmem:[#allocation16 + $0x58] sm:$0xff]
        %v3437 = vld [vmem:[#allocation16 + $0x60] sm:$0xff]
        %v3438 = vld [vmem:[#allocation16 + $0x68] sm:$0xff]
        %v3439 = vld [vmem:[#allocation16 + $0x70] sm:$0xff]
        %v3440 = vld [vmem:[#allocation16 + $0x78] sm:$0xff]
        %v3441 = vand.u32 %v3440, 4294901760
        %3442 = vmatpush.msra.mxu0 %v3441
        %v3443 = vand.u32 %v3439, 4294901760
        %3444 = vmatpush.msra.mxu0 %v3443
        %v3445 = vand.u32 %v3438, 4294901760
        %3446 = vmatpush.msra.mxu0 %v3445
        %v3447 = vand.u32 %v3437, 4294901760
        %3448 = vmatpush.msra.mxu0 %v3447
        %v3449 = vand.u32 %v3436, 4294901760
        %3450 = vmatpush.msra.mxu0 %v3449
        %v3451 = vand.u32 %v3435, 4294901760
        %3452 = vmatpush.msra.mxu0 %v3451
        %v3453 = vand.u32 %v3434, 4294901760
        %3454 = vmatpush.msra.mxu0 %v3453
        %v3455 = vand.u32 %v3433, 4294901760
        %3456 = vmatpush.msra.mxu0 %v3455
        %v3457 = vand.u32 %v3432, 4294901760
        %3458 = vmatpush.msra.mxu0 %v3457
        %v3459 = vand.u32 %v3431, 4294901760
        %3460 = vmatpush.msra.mxu0 %v3459
        %v3461 = vand.u32 %v3430, 4294901760
        %3462 = vmatpush.msra.mxu0 %v3461
        %v3463 = vand.u32 %v3429, 4294901760
        %3464 = vmatpush.msra.mxu0 %v3463
        %v3465 = vand.u32 %v3428, 4294901760
        %3466 = vmatpush.msra.mxu0 %v3465
        %v3467 = vand.u32 %v3427, 4294901760
        %3468 = vmatpush.msra.mxu0 %v3467
        %v3469 = vand.u32 %v3426, 4294901760
        %3470 = vmatpush.msra.mxu0 %v3469
        %v3471 = vand.u32 %v3425, 4294901760
        %3472 = vmatpush.msra.mxu0 %v3471
        %v3473 = vand.u32 %v2124, 4294901760
        %v3474 = vsub.f32 %v2124, %v3473
        %v3475 = vand.u32 %v3474, 4294901760
        %v3476 = vsub.f32 %v3474, %v3475
        %v3477 = vand.u32 %v3476, 4294901760
        %3478 = vmatmul.f32.gmra.mxu0 %v3477
        %v3479 = vpop.f32.mrf.mxu0
        %v3480 = vadd.f32 0.0, %v3479
        %v3481 = vand.u32 %v2128, 4294901760
        %v3482 = vsub.f32 %v2128, %v3481
        %v3483 = vand.u32 %v3482, 4294901760
        %v3484 = vsub.f32 %v3482, %v3483
        %v3485 = vand.u32 %v3484, 4294901760
        %3486 = vmatmul.f32.gmra.mxu0 %v3485
        %v3487 = vpop.f32.mrf.mxu0
        %v3488 = vadd.f32 0.0, %v3487
        %v3489 = vand.u32 %v2132, 4294901760
        %v3490 = vsub.f32 %v2132, %v3489
        %v3491 = vand.u32 %v3490, 4294901760
        %v3492 = vsub.f32 %v3490, %v3491
        %v3493 = vand.u32 %v3492, 4294901760
        %3494 = vmatmul.f32.gmra.mxu0 %v3493
        %v3495 = vpop.f32.mrf.mxu0
        %v3496 = vadd.f32 0.0, %v3495
        %3497 = vdwg.mxu0
        %v3498 = vand.u32 %v3440, 4294901760
        %v3499 = vsub.f32 %v3440, %v3498
        %v3500 = vand.u32 %v3499, 4294901760
        %v3501 = vsub.f32 %v3499, %v3500
        %v3502 = vand.u32 %v3501, 4294901760
        %3503 = vmatpush.msra.mxu0 %v3502
        %v3504 = vand.u32 %v3439, 4294901760
        %v3505 = vsub.f32 %v3439, %v3504
        %v3506 = vand.u32 %v3505, 4294901760
        %v3507 = vsub.f32 %v3505, %v3506
        %v3508 = vand.u32 %v3507, 4294901760
        %3509 = vmatpush.msra.mxu0 %v3508
        %v3510 = vand.u32 %v3438, 4294901760
        %v3511 = vsub.f32 %v3438, %v3510
        %v3512 = vand.u32 %v3511, 4294901760
        %v3513 = vsub.f32 %v3511, %v3512
        %v3514 = vand.u32 %v3513, 4294901760
        %3515 = vmatpush.msra.mxu0 %v3514
        %v3516 = vand.u32 %v3437, 4294901760
        %v3517 = vsub.f32 %v3437, %v3516
        %v3518 = vand.u32 %v3517, 4294901760
        %v3519 = vsub.f32 %v3517, %v3518
        %v3520 = vand.u32 %v3519, 4294901760
        %3521 = vmatpush.msra.mxu0 %v3520
        %v3522 = vand.u32 %v3436, 4294901760
        %v3523 = vsub.f32 %v3436, %v3522
        %v3524 = vand.u32 %v3523, 4294901760
        %v3525 = vsub.f32 %v3523, %v3524
        %v3526 = vand.u32 %v3525, 4294901760
        %3527 = vmatpush.msra.mxu0 %v3526
        %v3528 = vand.u32 %v3435, 4294901760
        %v3529 = vsub.f32 %v3435, %v3528
        %v3530 = vand.u32 %v3529, 4294901760
        %v3531 = vsub.f32 %v3529, %v3530
        %v3532 = vand.u32 %v3531, 4294901760
        %3533 = vmatpush.msra.mxu0 %v3532
        %v3534 = vand.u32 %v3434, 4294901760
        %v3535 = vsub.f32 %v3434, %v3534
        %v3536 = vand.u32 %v3535, 4294901760
        %v3537 = vsub.f32 %v3535, %v3536
        %v3538 = vand.u32 %v3537, 4294901760
        %3539 = vmatpush.msra.mxu0 %v3538
        %v3540 = vand.u32 %v3433, 4294901760
        %v3541 = vsub.f32 %v3433, %v3540
        %v3542 = vand.u32 %v3541, 4294901760
        %v3543 = vsub.f32 %v3541, %v3542
        %v3544 = vand.u32 %v3543, 4294901760
        %3545 = vmatpush.msra.mxu0 %v3544
        %v3546 = vand.u32 %v3432, 4294901760
        %v3547 = vsub.f32 %v3432, %v3546
        %v3548 = vand.u32 %v3547, 4294901760
        %v3549 = vsub.f32 %v3547, %v3548
        %v3550 = vand.u32 %v3549, 4294901760
        %3551 = vmatpush.msra.mxu0 %v3550
        %v3552 = vand.u32 %v3431, 4294901760
        %v3553 = vsub.f32 %v3431, %v3552
        %v3554 = vand.u32 %v3553, 4294901760
        %v3555 = vsub.f32 %v3553, %v3554
        %v3556 = vand.u32 %v3555, 4294901760
        %3557 = vmatpush.msra.mxu0 %v3556
        %v3558 = vand.u32 %v3430, 4294901760
        %v3559 = vsub.f32 %v3430, %v3558
        %v3560 = vand.u32 %v3559, 4294901760
        %v3561 = vsub.f32 %v3559, %v3560
        %v3562 = vand.u32 %v3561, 4294901760
        %3563 = vmatpush.msra.mxu0 %v3562
        %v3564 = vand.u32 %v3429, 4294901760
        %v3565 = vsub.f32 %v3429, %v3564
        %v3566 = vand.u32 %v3565, 4294901760
        %v3567 = vsub.f32 %v3565, %v3566
        %v3568 = vand.u32 %v3567, 4294901760
        %3569 = vmatpush.msra.mxu0 %v3568
        %v3570 = vand.u32 %v3428, 4294901760
        %v3571 = vsub.f32 %v3428, %v3570
        %v3572 = vand.u32 %v3571, 4294901760
        %v3573 = vsub.f32 %v3571, %v3572
        %v3574 = vand.u32 %v3573, 4294901760
        %3575 = vmatpush.msra.mxu0 %v3574
        %v3576 = vand.u32 %v3427, 4294901760
        %v3577 = vsub.f32 %v3427, %v3576
        %v3578 = vand.u32 %v3577, 4294901760
        %v3579 = vsub.f32 %v3577, %v3578
        %v3580 = vand.u32 %v3579, 4294901760
        %3581 = vmatpush.msra.mxu0 %v3580
        %v3582 = vand.u32 %v3426, 4294901760
        %v3583 = vsub.f32 %v3426, %v3582
        %v3584 = vand.u32 %v3583, 4294901760
        %v3585 = vsub.f32 %v3583, %v3584
        %v3586 = vand.u32 %v3585, 4294901760
        %3587 = vmatpush.msra.mxu0 %v3586
        %v3588 = vand.u32 %v3425, 4294901760
        %v3589 = vsub.f32 %v3425, %v3588
        %v3590 = vand.u32 %v3589, 4294901760
        %v3591 = vsub.f32 %v3589, %v3590
        %v3592 = vand.u32 %v3591, 4294901760
        %3593 = vmatpush.msra.mxu0 %v3592
        %v3594 = vand.u32 %v2124, 4294901760
        %3595 = vmatmul.f32.gmra.mxu0 %v3594
        %v3596 = vpop.f32.mrf.mxu0
        %v3597 = vadd.f32 %v3480, %v3596
        %v3598 = vand.u32 %v2128, 4294901760
        %3599 = vmatmul.f32.gmra.mxu0 %v3598
        %v3600 = vpop.f32.mrf.mxu0
        %v3601 = vadd.f32 %v3488, %v3600
        %v3602 = vand.u32 %v2132, 4294901760
        %3603 = vmatmul.f32.gmra.mxu0 %v3602
        %v3604 = vpop.f32.mrf.mxu0
        %v3605 = vadd.f32 %v3496, %v3604
        %3606 = vdwg.mxu0
        %v3607 = vand.u32 %v3440, 4294901760
        %v3608 = vsub.f32 %v3440, %v3607
        %3609 = vmatpush.msra.mxu0 %v3608
        %v3610 = vand.u32 %v3439, 4294901760
        %v3611 = vsub.f32 %v3439, %v3610
        %3612 = vmatpush.msra.mxu0 %v3611
        %v3613 = vand.u32 %v3438, 4294901760
        %v3614 = vsub.f32 %v3438, %v3613
        %3615 = vmatpush.msra.mxu0 %v3614
        %v3616 = vand.u32 %v3437, 4294901760
        %v3617 = vsub.f32 %v3437, %v3616
        %3618 = vmatpush.msra.mxu0 %v3617
        %v3619 = vand.u32 %v3436, 4294901760
        %v3620 = vsub.f32 %v3436, %v3619
        %3621 = vmatpush.msra.mxu0 %v3620
        %v3622 = vand.u32 %v3435, 4294901760
        %v3623 = vsub.f32 %v3435, %v3622
        %3624 = vmatpush.msra.mxu0 %v3623
        %v3625 = vand.u32 %v3434, 4294901760
        %v3626 = vsub.f32 %v3434, %v3625
        %3627 = vmatpush.msra.mxu0 %v3626
        %v3628 = vand.u32 %v3433, 4294901760
        %v3629 = vsub.f32 %v3433, %v3628
        %3630 = vmatpush.msra.mxu0 %v3629
        %v3631 = vand.u32 %v3432, 4294901760
        %v3632 = vsub.f32 %v3432, %v3631
        %3633 = vmatpush.msra.mxu0 %v3632
        %v3634 = vand.u32 %v3431, 4294901760
        %v3635 = vsub.f32 %v3431, %v3634
        %3636 = vmatpush.msra.mxu0 %v3635
        %v3637 = vand.u32 %v3430, 4294901760
        %v3638 = vsub.f32 %v3430, %v3637
        %3639 = vmatpush.msra.mxu0 %v3638
        %v3640 = vand.u32 %v3429, 4294901760
        %v3641 = vsub.f32 %v3429, %v3640
        %3642 = vmatpush.msra.mxu0 %v3641
        %v3643 = vand.u32 %v3428, 4294901760
        %v3644 = vsub.f32 %v3428, %v3643
        %3645 = vmatpush.msra.mxu0 %v3644
        %v3646 = vand.u32 %v3427, 4294901760
        %v3647 = vsub.f32 %v3427, %v3646
        %3648 = vmatpush.msra.mxu0 %v3647
        %v3649 = vand.u32 %v3426, 4294901760
        %v3650 = vsub.f32 %v3426, %v3649
        %3651 = vmatpush.msra.mxu0 %v3650
        %v3652 = vand.u32 %v3425, 4294901760
        %v3653 = vsub.f32 %v3425, %v3652
        %3654 = vmatpush.msra.mxu0 %v3653
        %v3655 = vand.u32 %v2124, 4294901760
        %v3656 = vsub.f32 %v2124, %v3655
        %3657 = vmatmul.f32.gmra.mxu0 %v3656
        %v3658 = vpop.f32.mrf.mxu0
        %v3659 = vadd.f32 %v3597, %v3658
        %v3660 = vand.u32 %v2128, 4294901760
        %v3661 = vsub.f32 %v2128, %v3660
        %3662 = vmatmul.f32.gmra.mxu0 %v3661
        %v3663 = vpop.f32.mrf.mxu0
        %v3664 = vadd.f32 %v3601, %v3663
        %v3665 = vand.u32 %v2132, 4294901760
        %v3666 = vsub.f32 %v2132, %v3665
        %3667 = vmatmul.f32.gmra.mxu0 %v3666
        %v3668 = vpop.f32.mrf.mxu0
        %v3669 = vadd.f32 %v3605, %v3668
        %3670 = vdwg.mxu0
        %v3671 = vand.u32 %v3440, 4294901760
        %3672 = vmatpush.msra.mxu0 %v3671
        %v3673 = vand.u32 %v3439, 4294901760
        %3674 = vmatpush.msra.mxu0 %v3673
        %v3675 = vand.u32 %v3438, 4294901760
        %3676 = vmatpush.msra.mxu0 %v3675
        %v3677 = vand.u32 %v3437, 4294901760
        %3678 = vmatpush.msra.mxu0 %v3677
        %v3679 = vand.u32 %v3436, 4294901760
        %3680 = vmatpush.msra.mxu0 %v3679
        %v3681 = vand.u32 %v3435, 4294901760
        %3682 = vmatpush.msra.mxu0 %v3681
        %v3683 = vand.u32 %v3434, 4294901760
        %3684 = vmatpush.msra.mxu0 %v3683
        %v3685 = vand.u32 %v3433, 4294901760
        %3686 = vmatpush.msra.mxu0 %v3685
        %v3687 = vand.u32 %v3432, 4294901760
        %3688 = vmatpush.msra.mxu0 %v3687
        %v3689 = vand.u32 %v3431, 4294901760
        %3690 = vmatpush.msra.mxu0 %v3689
        %v3691 = vand.u32 %v3430, 4294901760
        %3692 = vmatpush.msra.mxu0 %v3691
        %v3693 = vand.u32 %v3429, 4294901760
        %3694 = vmatpush.msra.mxu0 %v3693
        %v3695 = vand.u32 %v3428, 4294901760
        %3696 = vmatpush.msra.mxu0 %v3695
        %v3697 = vand.u32 %v3427, 4294901760
        %3698 = vmatpush.msra.mxu0 %v3697
        %v3699 = vand.u32 %v3426, 4294901760
        %3700 = vmatpush.msra.mxu0 %v3699
        %v3701 = vand.u32 %v3425, 4294901760
        %3702 = vmatpush.msra.mxu0 %v3701
        %v3703 = vand.u32 %v2124, 4294901760
        %v3704 = vsub.f32 %v2124, %v3703
        %v3705 = vand.u32 %v3704, 4294901760
        %3706 = vmatmul.f32.gmra.mxu0 %v3705
        %v3707 = vpop.f32.mrf.mxu0
        %v3708 = vadd.f32 %v3659, %v3707
        %v3709 = vand.u32 %v2128, 4294901760
        %v3710 = vsub.f32 %v2128, %v3709
        %v3711 = vand.u32 %v3710, 4294901760
        %3712 = vmatmul.f32.gmra.mxu0 %v3711
        %v3713 = vpop.f32.mrf.mxu0
        %v3714 = vadd.f32 %v3664, %v3713
        %v3715 = vand.u32 %v2132, 4294901760
        %v3716 = vsub.f32 %v2132, %v3715
        %v3717 = vand.u32 %v3716, 4294901760
        %3718 = vmatmul.f32.gmra.mxu0 %v3717
        %v3719 = vpop.f32.mrf.mxu0
        %v3720 = vadd.f32 %v3669, %v3719
        %3721 = vdwg.mxu0
        %v3722 = vand.u32 %v3440, 4294901760
        %v3723 = vsub.f32 %v3440, %v3722
        %v3724 = vand.u32 %v3723, 4294901760
        %3725 = vmatpush.msra.mxu0 %v3724
        %v3726 = vand.u32 %v3439, 4294901760
        %v3727 = vsub.f32 %v3439, %v3726
        %v3728 = vand.u32 %v3727, 4294901760
        %3729 = vmatpush.msra.mxu0 %v3728
        %v3730 = vand.u32 %v3438, 4294901760
        %v3731 = vsub.f32 %v3438, %v3730
        %v3732 = vand.u32 %v3731, 4294901760
        %3733 = vmatpush.msra.mxu0 %v3732
        %v3734 = vand.u32 %v3437, 4294901760
        %v3735 = vsub.f32 %v3437, %v3734
        %v3736 = vand.u32 %v3735, 4294901760
        %3737 = vmatpush.msra.mxu0 %v3736
        %v3738 = vand.u32 %v3436, 4294901760
        %v3739 = vsub.f32 %v3436, %v3738
        %v3740 = vand.u32 %v3739, 4294901760
        %3741 = vmatpush.msra.mxu0 %v3740
        %v3742 = vand.u32 %v3435, 4294901760
        %v3743 = vsub.f32 %v3435, %v3742
        %v3744 = vand.u32 %v3743, 4294901760
        %3745 = vmatpush.msra.mxu0 %v3744
        %v3746 = vand.u32 %v3434, 4294901760
        %v3747 = vsub.f32 %v3434, %v3746
        %v3748 = vand.u32 %v3747, 4294901760
        %3749 = vmatpush.msra.mxu0 %v3748
        %v3750 = vand.u32 %v3433, 4294901760
        %v3751 = vsub.f32 %v3433, %v3750
        %v3752 = vand.u32 %v3751, 4294901760
        %3753 = vmatpush.msra.mxu0 %v3752
        %v3754 = vand.u32 %v3432, 4294901760
        %v3755 = vsub.f32 %v3432, %v3754
        %v3756 = vand.u32 %v3755, 4294901760
        %3757 = vmatpush.msra.mxu0 %v3756
        %v3758 = vand.u32 %v3431, 4294901760
        %v3759 = vsub.f32 %v3431, %v3758
        %v3760 = vand.u32 %v3759, 4294901760
        %3761 = vmatpush.msra.mxu0 %v3760
        %v3762 = vand.u32 %v3430, 4294901760
        %v3763 = vsub.f32 %v3430, %v3762
        %v3764 = vand.u32 %v3763, 4294901760
        %3765 = vmatpush.msra.mxu0 %v3764
        %v3766 = vand.u32 %v3429, 4294901760
        %v3767 = vsub.f32 %v3429, %v3766
        %v3768 = vand.u32 %v3767, 4294901760
        %3769 = vmatpush.msra.mxu0 %v3768
        %v3770 = vand.u32 %v3428, 4294901760
        %v3771 = vsub.f32 %v3428, %v3770
        %v3772 = vand.u32 %v3771, 4294901760
        %3773 = vmatpush.msra.mxu0 %v3772
        %v3774 = vand.u32 %v3427, 4294901760
        %v3775 = vsub.f32 %v3427, %v3774
        %v3776 = vand.u32 %v3775, 4294901760
        %3777 = vmatpush.msra.mxu0 %v3776
        %v3778 = vand.u32 %v3426, 4294901760
        %v3779 = vsub.f32 %v3426, %v3778
        %v3780 = vand.u32 %v3779, 4294901760
        %3781 = vmatpush.msra.mxu0 %v3780
        %v3782 = vand.u32 %v3425, 4294901760
        %v3783 = vsub.f32 %v3425, %v3782
        %v3784 = vand.u32 %v3783, 4294901760
        %3785 = vmatpush.msra.mxu0 %v3784
        %v3786 = vand.u32 %v2124, 4294901760
        %3787 = vmatmul.f32.gmra.mxu0 %v3786
        %v3788 = vpop.f32.mrf.mxu0
        %v3789 = vadd.f32 %v3708, %v3788
        %v3790 = vand.u32 %v2128, 4294901760
        %3791 = vmatmul.f32.gmra.mxu0 %v3790
        %v3792 = vpop.f32.mrf.mxu0
        %v3793 = vadd.f32 %v3714, %v3792
        %v3794 = vand.u32 %v2132, 4294901760
        %3795 = vmatmul.f32.gmra.mxu0 %v3794
        %v3796 = vpop.f32.mrf.mxu0
        %v3797 = vadd.f32 %v3720, %v3796
        %3798 = vdwg.mxu0
        %v3799 = vand.u32 %v3440, 4294901760
        %3800 = vmatpush.msra.mxu0 %v3799
        %v3801 = vand.u32 %v3439, 4294901760
        %3802 = vmatpush.msra.mxu0 %v3801
        %v3803 = vand.u32 %v3438, 4294901760
        %3804 = vmatpush.msra.mxu0 %v3803
        %v3805 = vand.u32 %v3437, 4294901760
        %3806 = vmatpush.msra.mxu0 %v3805
        %v3807 = vand.u32 %v3436, 4294901760
        %3808 = vmatpush.msra.mxu0 %v3807
        %v3809 = vand.u32 %v3435, 4294901760
        %3810 = vmatpush.msra.mxu0 %v3809
        %v3811 = vand.u32 %v3434, 4294901760
        %3812 = vmatpush.msra.mxu0 %v3811
        %v3813 = vand.u32 %v3433, 4294901760
        %3814 = vmatpush.msra.mxu0 %v3813
        %v3815 = vand.u32 %v3432, 4294901760
        %3816 = vmatpush.msra.mxu0 %v3815
        %v3817 = vand.u32 %v3431, 4294901760
        %3818 = vmatpush.msra.mxu0 %v3817
        %v3819 = vand.u32 %v3430, 4294901760
        %3820 = vmatpush.msra.mxu0 %v3819
        %v3821 = vand.u32 %v3429, 4294901760
        %3822 = vmatpush.msra.mxu0 %v3821
        %v3823 = vand.u32 %v3428, 4294901760
        %3824 = vmatpush.msra.mxu0 %v3823
        %v3825 = vand.u32 %v3427, 4294901760
        %3826 = vmatpush.msra.mxu0 %v3825
        %v3827 = vand.u32 %v3426, 4294901760
        %3828 = vmatpush.msra.mxu0 %v3827
        %v3829 = vand.u32 %v3425, 4294901760
        %3830 = vmatpush.msra.mxu0 %v3829
        %v3831 = vand.u32 %v2124, 4294901760
        %3832 = vmatmul.f32.gmra.mxu0 %v3831
        %v3833 = vpop.f32.mrf.mxu0
        %v3834 = vadd.f32 %v3789, %v3833
        %v3835 = vand.u32 %v2128, 4294901760
        %3836 = vmatmul.f32.gmra.mxu0 %v3835
        %v3837 = vpop.f32.mrf.mxu0
        %v3838 = vadd.f32 %v3793, %v3837
        %v3839 = vand.u32 %v2132, 4294901760
        %3840 = vmatmul.f32.gmra.mxu0 %v3839
        %v3841 = vpop.f32.mrf.mxu0
        %v3842 = vadd.f32 %v3797, %v3841
        %3843 = vdwg.mxu0
        %v3844 = vand.u32 %v3424, 4294901760
        %3845 = vmatpush.msra.mxu0 %v3844
        %v3846 = vand.u32 %v3423, 4294901760
        %3847 = vmatpush.msra.mxu0 %v3846
        %v3848 = vand.u32 %v3422, 4294901760
        %3849 = vmatpush.msra.mxu0 %v3848
        %v3850 = vand.u32 %v3421, 4294901760
        %3851 = vmatpush.msra.mxu0 %v3850
        %v3852 = vand.u32 %v3420, 4294901760
        %3853 = vmatpush.msra.mxu0 %v3852
        %v3854 = vand.u32 %v3419, 4294901760
        %3855 = vmatpush.msra.mxu0 %v3854
        %v3856 = vand.u32 %v3418, 4294901760
        %3857 = vmatpush.msra.mxu0 %v3856
        %v3858 = vand.u32 %v3417, 4294901760
        %3859 = vmatpush.msra.mxu0 %v3858
        %v3860 = vand.u32 %v3416, 4294901760
        %3861 = vmatpush.msra.mxu0 %v3860
        %v3862 = vand.u32 %v3415, 4294901760
        %3863 = vmatpush.msra.mxu0 %v3862
        %v3864 = vand.u32 %v3414, 4294901760
        %3865 = vmatpush.msra.mxu0 %v3864
        %v3866 = vand.u32 %v3413, 4294901760
        %3867 = vmatpush.msra.mxu0 %v3866
        %v3868 = vand.u32 %v3412, 4294901760
        %3869 = vmatpush.msra.mxu0 %v3868
        %v3870 = vand.u32 %v3411, 4294901760
        %3871 = vmatpush.msra.mxu0 %v3870
        %v3872 = vand.u32 %v3410, 4294901760
        %3873 = vmatpush.msra.mxu0 %v3872
        %v3874 = vand.u32 %v3409, 4294901760
        %3875 = vmatpush.msra.mxu0 %v3874
        %v3876 = vand.u32 %v3399, 4294901760
        %v3877 = vsub.f32 %v3399, %v3876
        %v3878 = vand.u32 %v3877, 4294901760
        %v3879 = vsub.f32 %v3877, %v3878
        %v3880 = vand.u32 %v3879, 4294901760
        %3881 = vmatmul.f32.gmra.mxu0 %v3880
        %v3882 = vpop.f32.mrf.mxu0
        %v3883 = vadd.f32 %v3834, %v3882
        %v3884 = vand.u32 %v3403, 4294901760
        %v3885 = vsub.f32 %v3403, %v3884
        %v3886 = vand.u32 %v3885, 4294901760
        %v3887 = vsub.f32 %v3885, %v3886
        %v3888 = vand.u32 %v3887, 4294901760
        %3889 = vmatmul.f32.gmra.mxu0 %v3888
        %v3890 = vpop.f32.mrf.mxu0
        %v3891 = vadd.f32 %v3838, %v3890
        %v3892 = vand.u32 %v3407, 4294901760
        %v3893 = vsub.f32 %v3407, %v3892
        %v3894 = vand.u32 %v3893, 4294901760
        %v3895 = vsub.f32 %v3893, %v3894
        %v3896 = vand.u32 %v3895, 4294901760
        %3897 = vmatmul.f32.gmra.mxu0 %v3896
        %v3898 = vpop.f32.mrf.mxu0
        %v3899 = vadd.f32 %v3842, %v3898
        %3900 = vdwg.mxu0
        %v3901 = vand.u32 %v3424, 4294901760
        %v3902 = vsub.f32 %v3424, %v3901
        %v3903 = vand.u32 %v3902, 4294901760
        %v3904 = vsub.f32 %v3902, %v3903
        %v3905 = vand.u32 %v3904, 4294901760
        %3906 = vmatpush.msra.mxu0 %v3905
        %v3907 = vand.u32 %v3423, 4294901760
        %v3908 = vsub.f32 %v3423, %v3907
        %v3909 = vand.u32 %v3908, 4294901760
        %v3910 = vsub.f32 %v3908, %v3909
        %v3911 = vand.u32 %v3910, 4294901760
        %3912 = vmatpush.msra.mxu0 %v3911
        %v3913 = vand.u32 %v3422, 4294901760
        %v3914 = vsub.f32 %v3422, %v3913
        %v3915 = vand.u32 %v3914, 4294901760
        %v3916 = vsub.f32 %v3914, %v3915
        %v3917 = vand.u32 %v3916, 4294901760
        %3918 = vmatpush.msra.mxu0 %v3917
        %v3919 = vand.u32 %v3421, 4294901760
        %v3920 = vsub.f32 %v3421, %v3919
        %v3921 = vand.u32 %v3920, 4294901760
        %v3922 = vsub.f32 %v3920, %v3921
        %v3923 = vand.u32 %v3922, 4294901760
        %3924 = vmatpush.msra.mxu0 %v3923
        %v3925 = vand.u32 %v3420, 4294901760
        %v3926 = vsub.f32 %v3420, %v3925
        %v3927 = vand.u32 %v3926, 4294901760
        %v3928 = vsub.f32 %v3926, %v3927
        %v3929 = vand.u32 %v3928, 4294901760
        %3930 = vmatpush.msra.mxu0 %v3929
        %v3931 = vand.u32 %v3419, 4294901760
        %v3932 = vsub.f32 %v3419, %v3931
        %v3933 = vand.u32 %v3932, 4294901760
        %v3934 = vsub.f32 %v3932, %v3933
        %v3935 = vand.u32 %v3934, 4294901760
        %3936 = vmatpush.msra.mxu0 %v3935
        %v3937 = vand.u32 %v3418, 4294901760
        %v3938 = vsub.f32 %v3418, %v3937
        %v3939 = vand.u32 %v3938, 4294901760
        %v3940 = vsub.f32 %v3938, %v3939
        %v3941 = vand.u32 %v3940, 4294901760
        %3942 = vmatpush.msra.mxu0 %v3941
        %v3943 = vand.u32 %v3417, 4294901760
        %v3944 = vsub.f32 %v3417, %v3943
        %v3945 = vand.u32 %v3944, 4294901760
        %v3946 = vsub.f32 %v3944, %v3945
        %v3947 = vand.u32 %v3946, 4294901760
        %3948 = vmatpush.msra.mxu0 %v3947
        %v3949 = vand.u32 %v3416, 4294901760
        %v3950 = vsub.f32 %v3416, %v3949
        %v3951 = vand.u32 %v3950, 4294901760
        %v3952 = vsub.f32 %v3950, %v3951
        %v3953 = vand.u32 %v3952, 4294901760
        %3954 = vmatpush.msra.mxu0 %v3953
        %v3955 = vand.u32 %v3415, 4294901760
        %v3956 = vsub.f32 %v3415, %v3955
        %v3957 = vand.u32 %v3956, 4294901760
        %v3958 = vsub.f32 %v3956, %v3957
        %v3959 = vand.u32 %v3958, 4294901760
        %3960 = vmatpush.msra.mxu0 %v3959
        %v3961 = vand.u32 %v3414, 4294901760
        %v3962 = vsub.f32 %v3414, %v3961
        %v3963 = vand.u32 %v3962, 4294901760
        %v3964 = vsub.f32 %v3962, %v3963
        %v3965 = vand.u32 %v3964, 4294901760
        %3966 = vmatpush.msra.mxu0 %v3965
        %v3967 = vand.u32 %v3413, 4294901760
        %v3968 = vsub.f32 %v3413, %v3967
        %v3969 = vand.u32 %v3968, 4294901760
        %v3970 = vsub.f32 %v3968, %v3969
        %v3971 = vand.u32 %v3970, 4294901760
        %3972 = vmatpush.msra.mxu0 %v3971
        %v3973 = vand.u32 %v3412, 4294901760
        %v3974 = vsub.f32 %v3412, %v3973
        %v3975 = vand.u32 %v3974, 4294901760
        %v3976 = vsub.f32 %v3974, %v3975
        %v3977 = vand.u32 %v3976, 4294901760
        %3978 = vmatpush.msra.mxu0 %v3977
        %v3979 = vand.u32 %v3411, 4294901760
        %v3980 = vsub.f32 %v3411, %v3979
        %v3981 = vand.u32 %v3980, 4294901760
        %v3982 = vsub.f32 %v3980, %v3981
        %v3983 = vand.u32 %v3982, 4294901760
        %3984 = vmatpush.msra.mxu0 %v3983
        %v3985 = vand.u32 %v3410, 4294901760
        %v3986 = vsub.f32 %v3410, %v3985
        %v3987 = vand.u32 %v3986, 4294901760
        %v3988 = vsub.f32 %v3986, %v3987
        %v3989 = vand.u32 %v3988, 4294901760
        %3990 = vmatpush.msra.mxu0 %v3989
        %v3991 = vand.u32 %v3409, 4294901760
        %v3992 = vsub.f32 %v3409, %v3991
        %v3993 = vand.u32 %v3992, 4294901760
        %v3994 = vsub.f32 %v3992, %v3993
        %v3995 = vand.u32 %v3994, 4294901760
        %3996 = vmatpush.msra.mxu0 %v3995
        %v3997 = vand.u32 %v3399, 4294901760
        %3998 = vmatmul.f32.gmra.mxu0 %v3997
        %v3999 = vpop.f32.mrf.mxu0
        %v4000 = vadd.f32 %v3883, %v3999
        %v4001 = vand.u32 %v3403, 4294901760
        %4002 = vmatmul.f32.gmra.mxu0 %v4001
        %v4003 = vpop.f32.mrf.mxu0
        %v4004 = vadd.f32 %v3891, %v4003
        %v4005 = vand.u32 %v3407, 4294901760
        %4006 = vmatmul.f32.gmra.mxu0 %v4005
        %v4007 = vpop.f32.mrf.mxu0
        %v4008 = vadd.f32 %v3899, %v4007
        %4009 = vdwg.mxu0
        %v4010 = vand.u32 %v3424, 4294901760
        %v4011 = vsub.f32 %v3424, %v4010
        %4012 = vmatpush.msra.mxu0 %v4011
        %v4013 = vand.u32 %v3423, 4294901760
        %v4014 = vsub.f32 %v3423, %v4013
        %4015 = vmatpush.msra.mxu0 %v4014
        %v4016 = vand.u32 %v3422, 4294901760
        %v4017 = vsub.f32 %v3422, %v4016
        %4018 = vmatpush.msra.mxu0 %v4017
        %v4019 = vand.u32 %v3421, 4294901760
        %v4020 = vsub.f32 %v3421, %v4019
        %4021 = vmatpush.msra.mxu0 %v4020
        %v4022 = vand.u32 %v3420, 4294901760
        %v4023 = vsub.f32 %v3420, %v4022
        %4024 = vmatpush.msra.mxu0 %v4023
        %v4025 = vand.u32 %v3419, 4294901760
        %v4026 = vsub.f32 %v3419, %v4025
        %4027 = vmatpush.msra.mxu0 %v4026
        %v4028 = vand.u32 %v3418, 4294901760
        %v4029 = vsub.f32 %v3418, %v4028
        %4030 = vmatpush.msra.mxu0 %v4029
        %v4031 = vand.u32 %v3417, 4294901760
        %v4032 = vsub.f32 %v3417, %v4031
        %4033 = vmatpush.msra.mxu0 %v4032
        %v4034 = vand.u32 %v3416, 4294901760
        %v4035 = vsub.f32 %v3416, %v4034
        %4036 = vmatpush.msra.mxu0 %v4035
        %v4037 = vand.u32 %v3415, 4294901760
        %v4038 = vsub.f32 %v3415, %v4037
        %4039 = vmatpush.msra.mxu0 %v4038
        %v4040 = vand.u32 %v3414, 4294901760
        %v4041 = vsub.f32 %v3414, %v4040
        %4042 = vmatpush.msra.mxu0 %v4041
        %v4043 = vand.u32 %v3413, 4294901760
        %v4044 = vsub.f32 %v3413, %v4043
        %4045 = vmatpush.msra.mxu0 %v4044
        %v4046 = vand.u32 %v3412, 4294901760
        %v4047 = vsub.f32 %v3412, %v4046
        %4048 = vmatpush.msra.mxu0 %v4047
        %v4049 = vand.u32 %v3411, 4294901760
        %v4050 = vsub.f32 %v3411, %v4049
        %4051 = vmatpush.msra.mxu0 %v4050
        %v4052 = vand.u32 %v3410, 4294901760
        %v4053 = vsub.f32 %v3410, %v4052
        %4054 = vmatpush.msra.mxu0 %v4053
        %v4055 = vand.u32 %v3409, 4294901760
        %v4056 = vsub.f32 %v3409, %v4055
        %4057 = vmatpush.msra.mxu0 %v4056
        %v4058 = vand.u32 %v3399, 4294901760
        %v4059 = vsub.f32 %v3399, %v4058
        %4060 = vmatmul.f32.gmra.mxu0 %v4059
        %v4061 = vpop.f32.mrf.mxu0
        %v4062 = vadd.f32 %v4000, %v4061
        %v4063 = vand.u32 %v3403, 4294901760
        %v4064 = vsub.f32 %v3403, %v4063
        %4065 = vmatmul.f32.gmra.mxu0 %v4064
        %v4066 = vpop.f32.mrf.mxu0
        %v4067 = vadd.f32 %v4004, %v4066
        %v4068 = vand.u32 %v3407, 4294901760
        %v4069 = vsub.f32 %v3407, %v4068
        %4070 = vmatmul.f32.gmra.mxu0 %v4069
        %v4071 = vpop.f32.mrf.mxu0
        %v4072 = vadd.f32 %v4008, %v4071
        %4073 = vdwg.mxu0
        %v4074 = vand.u32 %v3424, 4294901760
        %4075 = vmatpush.msra.mxu0 %v4074
        %v4076 = vand.u32 %v3423, 4294901760
        %4077 = vmatpush.msra.mxu0 %v4076
        %v4078 = vand.u32 %v3422, 4294901760
        %4079 = vmatpush.msra.mxu0 %v4078
        %v4080 = vand.u32 %v3421, 4294901760
        %4081 = vmatpush.msra.mxu0 %v4080
        %v4082 = vand.u32 %v3420, 4294901760
        %4083 = vmatpush.msra.mxu0 %v4082
        %v4084 = vand.u32 %v3419, 4294901760
        %4085 = vmatpush.msra.mxu0 %v4084
        %v4086 = vand.u32 %v3418, 4294901760
        %4087 = vmatpush.msra.mxu0 %v4086
        %v4088 = vand.u32 %v3417, 4294901760
        %4089 = vmatpush.msra.mxu0 %v4088
        %v4090 = vand.u32 %v3416, 4294901760
        %4091 = vmatpush.msra.mxu0 %v4090
        %v4092 = vand.u32 %v3415, 4294901760
        %4093 = vmatpush.msra.mxu0 %v4092
        %v4094 = vand.u32 %v3414, 4294901760
        %4095 = vmatpush.msra.mxu0 %v4094
        %v4096 = vand.u32 %v3413, 4294901760
        %4097 = vmatpush.msra.mxu0 %v4096
        %v4098 = vand.u32 %v3412, 4294901760
        %4099 = vmatpush.msra.mxu0 %v4098
        %v4100 = vand.u32 %v3411, 4294901760
        %4101 = vmatpush.msra.mxu0 %v4100
        %v4102 = vand.u32 %v3410, 4294901760
        %4103 = vmatpush.msra.mxu0 %v4102
        %v4104 = vand.u32 %v3409, 4294901760
        %4105 = vmatpush.msra.mxu0 %v4104
        %v4106 = vand.u32 %v3399, 4294901760
        %v4107 = vsub.f32 %v3399, %v4106
        %v4108 = vand.u32 %v4107, 4294901760
        %4109 = vmatmul.f32.gmra.mxu0 %v4108
        %v4110 = vpop.f32.mrf.mxu0
        %v4111 = vadd.f32 %v4062, %v4110
        %v4112 = vand.u32 %v3403, 4294901760
        %v4113 = vsub.f32 %v3403, %v4112
        %v4114 = vand.u32 %v4113, 4294901760
        %4115 = vmatmul.f32.gmra.mxu0 %v4114
        %v4116 = vpop.f32.mrf.mxu0
        %v4117 = vadd.f32 %v4067, %v4116
        %v4118 = vand.u32 %v3407, 4294901760
        %v4119 = vsub.f32 %v3407, %v4118
        %v4120 = vand.u32 %v4119, 4294901760
        %4121 = vmatmul.f32.gmra.mxu0 %v4120
        %v4122 = vpop.f32.mrf.mxu0
        %v4123 = vadd.f32 %v4072, %v4122
        %4124 = vdwg.mxu0
        %v4125 = vand.u32 %v3424, 4294901760
        %v4126 = vsub.f32 %v3424, %v4125
        %v4127 = vand.u32 %v4126, 4294901760
        %4128 = vmatpush.msra.mxu0 %v4127
        %v4129 = vand.u32 %v3423, 4294901760
        %v4130 = vsub.f32 %v3423, %v4129
        %v4131 = vand.u32 %v4130, 4294901760
        %4132 = vmatpush.msra.mxu0 %v4131
        %v4133 = vand.u32 %v3422, 4294901760
        %v4134 = vsub.f32 %v3422, %v4133
        %v4135 = vand.u32 %v4134, 4294901760
        %4136 = vmatpush.msra.mxu0 %v4135
        %v4137 = vand.u32 %v3421, 4294901760
        %v4138 = vsub.f32 %v3421, %v4137
        %v4139 = vand.u32 %v4138, 4294901760
        %4140 = vmatpush.msra.mxu0 %v4139
        %v4141 = vand.u32 %v3420, 4294901760
        %v4142 = vsub.f32 %v3420, %v4141
        %v4143 = vand.u32 %v4142, 4294901760
        %4144 = vmatpush.msra.mxu0 %v4143
        %v4145 = vand.u32 %v3419, 4294901760
        %v4146 = vsub.f32 %v3419, %v4145
        %v4147 = vand.u32 %v4146, 4294901760
        %4148 = vmatpush.msra.mxu0 %v4147
        %v4149 = vand.u32 %v3418, 4294901760
        %v4150 = vsub.f32 %v3418, %v4149
        %v4151 = vand.u32 %v4150, 4294901760
        %4152 = vmatpush.msra.mxu0 %v4151
        %v4153 = vand.u32 %v3417, 4294901760
        %v4154 = vsub.f32 %v3417, %v4153
        %v4155 = vand.u32 %v4154, 4294901760
        %4156 = vmatpush.msra.mxu0 %v4155
        %v4157 = vand.u32 %v3416, 4294901760
        %v4158 = vsub.f32 %v3416, %v4157
        %v4159 = vand.u32 %v4158, 4294901760
        %4160 = vmatpush.msra.mxu0 %v4159
        %v4161 = vand.u32 %v3415, 4294901760
        %v4162 = vsub.f32 %v3415, %v4161
        %v4163 = vand.u32 %v4162, 4294901760
        %4164 = vmatpush.msra.mxu0 %v4163
        %v4165 = vand.u32 %v3414, 4294901760
        %v4166 = vsub.f32 %v3414, %v4165
        %v4167 = vand.u32 %v4166, 4294901760
        %4168 = vmatpush.msra.mxu0 %v4167
        %v4169 = vand.u32 %v3413, 4294901760
        %v4170 = vsub.f32 %v3413, %v4169
        %v4171 = vand.u32 %v4170, 4294901760
        %4172 = vmatpush.msra.mxu0 %v4171
        %v4173 = vand.u32 %v3412, 4294901760
        %v4174 = vsub.f32 %v3412, %v4173
        %v4175 = vand.u32 %v4174, 4294901760
        %4176 = vmatpush.msra.mxu0 %v4175
        %v4177 = vand.u32 %v3411, 4294901760
        %v4178 = vsub.f32 %v3411, %v4177
        %v4179 = vand.u32 %v4178, 4294901760
        %4180 = vmatpush.msra.mxu0 %v4179
        %v4181 = vand.u32 %v3410, 4294901760
        %v4182 = vsub.f32 %v3410, %v4181
        %v4183 = vand.u32 %v4182, 4294901760
        %4184 = vmatpush.msra.mxu0 %v4183
        %v4185 = vand.u32 %v3409, 4294901760
        %v4186 = vsub.f32 %v3409, %v4185
        %v4187 = vand.u32 %v4186, 4294901760
        %4188 = vmatpush.msra.mxu0 %v4187
        %v4189 = vand.u32 %v3399, 4294901760
        %4190 = vmatmul.f32.gmra.mxu0 %v4189
        %v4191 = vpop.f32.mrf.mxu0
        %v4192 = vadd.f32 %v4111, %v4191
        %v4193 = vand.u32 %v3403, 4294901760
        %4194 = vmatmul.f32.gmra.mxu0 %v4193
        %v4195 = vpop.f32.mrf.mxu0
        %v4196 = vadd.f32 %v4117, %v4195
        %v4197 = vand.u32 %v3407, 4294901760
        %4198 = vmatmul.f32.gmra.mxu0 %v4197
        %v4199 = vpop.f32.mrf.mxu0
        %v4200 = vadd.f32 %v4123, %v4199
        %4201 = vdwg.mxu0
        %v4202 = vand.u32 %v3424, 4294901760
        %4203 = vmatpush.msra.mxu0 %v4202
        %v4204 = vand.u32 %v3423, 4294901760
        %4205 = vmatpush.msra.mxu0 %v4204
        %v4206 = vand.u32 %v3422, 4294901760
        %4207 = vmatpush.msra.mxu0 %v4206
        %v4208 = vand.u32 %v3421, 4294901760
        %4209 = vmatpush.msra.mxu0 %v4208
        %v4210 = vand.u32 %v3420, 4294901760
        %4211 = vmatpush.msra.mxu0 %v4210
        %v4212 = vand.u32 %v3419, 4294901760
        %4213 = vmatpush.msra.mxu0 %v4212
        %v4214 = vand.u32 %v3418, 4294901760
        %4215 = vmatpush.msra.mxu0 %v4214
        %v4216 = vand.u32 %v3417, 4294901760
        %4217 = vmatpush.msra.mxu0 %v4216
        %v4218 = vand.u32 %v3416, 4294901760
        %4219 = vmatpush.msra.mxu0 %v4218
        %v4220 = vand.u32 %v3415, 4294901760
        %4221 = vmatpush.msra.mxu0 %v4220
        %v4222 = vand.u32 %v3414, 4294901760
        %4223 = vmatpush.msra.mxu0 %v4222
        %v4224 = vand.u32 %v3413, 4294901760
        %4225 = vmatpush.msra.mxu0 %v4224
        %v4226 = vand.u32 %v3412, 4294901760
        %4227 = vmatpush.msra.mxu0 %v4226
        %v4228 = vand.u32 %v3411, 4294901760
        %4229 = vmatpush.msra.mxu0 %v4228
        %v4230 = vand.u32 %v3410, 4294901760
        %4231 = vmatpush.msra.mxu0 %v4230
        %v4232 = vand.u32 %v3409, 4294901760
        %4233 = vmatpush.msra.mxu0 %v4232
        %v4234 = vand.u32 %v3399, 4294901760
        %4235 = vmatmul.f32.gmra.mxu0 %v4234
        %v4236 = vpop.f32.mrf.mxu0
        %v4237 = vadd.f32 %v4192, %v4236
        %v4238 = vand.u32 %v3403, 4294901760
        %4239 = vmatmul.f32.gmra.mxu0 %v4238
        %v4240 = vpop.f32.mrf.mxu0
        %v4241 = vadd.f32 %v4196, %v4240
        %v4242 = vand.u32 %v3407, 4294901760
        %4243 = vmatmul.f32.gmra.mxu0 %v4242
        %v4244 = vpop.f32.mrf.mxu0
        %v4245 = vadd.f32 %v4200, %v4244
        %4246 = vdwg.mxu0
        %v4247 = vld [vmem:[%s15] sm:$0x1]
        %v4249 = vperm.slane %v4247, 0
        %v4251 = vadd.f32 %v4237, %v4249
        %v4252 = vadd.f32 %v4241, %v4249
        %v4253 = vadd.f32 %v4245, %v4249
        %v4254 = vmax.f32 %v4251, 0.0
        %v4255 = vmax.f32 %v4252, 0.0
        %v4256 = vmax.f32 %v4253, 0.0
        %v4257 = vld [vmem:[#allocation17] sm:$0xff]
        %v4258 = vld [vmem:[#allocation17 + $0x8] sm:$0xff]
        %v4259 = vld [vmem:[#allocation17 + $0x10] sm:$0xff]
        %v4260 = vld [vmem:[#allocation17 + $0x18] sm:$0xff]
        %v4261 = vld [vmem:[#allocation17 + $0x20] sm:$0xff]
        %v4262 = vld [vmem:[#allocation17 + $0x28] sm:$0xff]
        %v4263 = vld [vmem:[#allocation17 + $0x30] sm:$0xff]
        %v4264 = vld [vmem:[#allocation17 + $0x38] sm:$0xff]
        %v4265 = vld [vmem:[#allocation17 + $0x40] sm:$0xff]
        %v4266 = vld [vmem:[#allocation17 + $0x48] sm:$0xff]
        %v4267 = vld [vmem:[#allocation17 + $0x50] sm:$0xff]
        %v4268 = vld [vmem:[#allocation17 + $0x58] sm:$0xff]
        %v4269 = vld [vmem:[#allocation17 + $0x60] sm:$0xff]
        %v4270 = vld [vmem:[#allocation17 + $0x68] sm:$0xff]
        %v4271 = vld [vmem:[#allocation17 + $0x70] sm:$0xff]
        %v4272 = vld [vmem:[#allocation17 + $0x78] sm:$0xff]
        %v4273 = vld [vmem:[%s17] sm:$0x1]
        %v4275 = vperm.slane %v4273, 0
        %v4277 = vand.u32 %v4272, 4294901760
        %4278 = vmatpush.msra.mxu0 %v4277
        %v4279 = vand.u32 %v4271, 4294901760
        %4280 = vmatpush.msra.mxu0 %v4279
        %v4281 = vand.u32 %v4270, 4294901760
        %4282 = vmatpush.msra.mxu0 %v4281
        %v4283 = vand.u32 %v4269, 4294901760
        %4284 = vmatpush.msra.mxu0 %v4283
        %v4285 = vand.u32 %v4268, 4294901760
        %4286 = vmatpush.msra.mxu0 %v4285
        %v4287 = vand.u32 %v4267, 4294901760
        %4288 = vmatpush.msra.mxu0 %v4287
        %v4289 = vand.u32 %v4266, 4294901760
        %4290 = vmatpush.msra.mxu0 %v4289
        %v4291 = vand.u32 %v4265, 4294901760
        %4292 = vmatpush.msra.mxu0 %v4291
        %v4293 = vand.u32 %v4264, 4294901760
        %4294 = vmatpush.msra.mxu0 %v4293
        %v4295 = vand.u32 %v4263, 4294901760
        %4296 = vmatpush.msra.mxu0 %v4295
        %v4297 = vand.u32 %v4262, 4294901760
        %4298 = vmatpush.msra.mxu0 %v4297
        %v4299 = vand.u32 %v4261, 4294901760
        %4300 = vmatpush.msra.mxu0 %v4299
        %v4301 = vand.u32 %v4260, 4294901760
        %4302 = vmatpush.msra.mxu0 %v4301
        %v4303 = vand.u32 %v4259, 4294901760
        %4304 = vmatpush.msra.mxu0 %v4303
        %v4305 = vand.u32 %v4258, 4294901760
        %4306 = vmatpush.msra.mxu0 %v4305
        %v4307 = vand.u32 %v4257, 4294901760
        %4308 = vmatpush.msra.mxu0 %v4307
        %v4309 = vand.u32 %v4254, 4294901760
        %v4310 = vsub.f32 %v4254, %v4309
        %v4311 = vand.u32 %v4310, 4294901760
        %v4312 = vsub.f32 %v4310, %v4311
        %v4313 = vand.u32 %v4312, 4294901760
        %4314 = vmatmul.f32.gmra.mxu0 %v4313
        %v4315 = vpop.f32.mrf.mxu0
        %v4316 = vadd.f32 %v4275, %v4315
        %v4317 = vand.u32 %v4255, 4294901760
        %v4318 = vsub.f32 %v4255, %v4317
        %v4319 = vand.u32 %v4318, 4294901760
        %v4320 = vsub.f32 %v4318, %v4319
        %v4321 = vand.u32 %v4320, 4294901760
        %4322 = vmatmul.f32.gmra.mxu0 %v4321
        %v4323 = vpop.f32.mrf.mxu0
        %v4324 = vadd.f32 %v4275, %v4323
        %v4325 = vand.u32 %v4256, 4294901760
        %v4326 = vsub.f32 %v4256, %v4325
        %v4327 = vand.u32 %v4326, 4294901760
        %v4328 = vsub.f32 %v4326, %v4327
        %v4329 = vand.u32 %v4328, 4294901760
        %4330 = vmatmul.f32.gmra.mxu0 %v4329
        %v4331 = vpop.f32.mrf.mxu0
        %v4332 = vadd.f32 %v4275, %v4331
        %4333 = vdwg.mxu0
        %v4334 = vand.u32 %v4272, 4294901760
        %v4335 = vsub.f32 %v4272, %v4334
        %v4336 = vand.u32 %v4335, 4294901760
        %v4337 = vsub.f32 %v4335, %v4336
        %v4338 = vand.u32 %v4337, 4294901760
        %4339 = vmatpush.msra.mxu0 %v4338
        %v4340 = vand.u32 %v4271, 4294901760
        %v4341 = vsub.f32 %v4271, %v4340
        %v4342 = vand.u32 %v4341, 4294901760
        %v4343 = vsub.f32 %v4341, %v4342
        %v4344 = vand.u32 %v4343, 4294901760
        %4345 = vmatpush.msra.mxu0 %v4344
        %v4346 = vand.u32 %v4270, 4294901760
        %v4347 = vsub.f32 %v4270, %v4346
        %v4348 = vand.u32 %v4347, 4294901760
        %v4349 = vsub.f32 %v4347, %v4348
        %v4350 = vand.u32 %v4349, 4294901760
        %4351 = vmatpush.msra.mxu0 %v4350
        %v4352 = vand.u32 %v4269, 4294901760
        %v4353 = vsub.f32 %v4269, %v4352
        %v4354 = vand.u32 %v4353, 4294901760
        %v4355 = vsub.f32 %v4353, %v4354
        %v4356 = vand.u32 %v4355, 4294901760
        %4357 = vmatpush.msra.mxu0 %v4356
        %v4358 = vand.u32 %v4268, 4294901760
        %v4359 = vsub.f32 %v4268, %v4358
        %v4360 = vand.u32 %v4359, 4294901760
        %v4361 = vsub.f32 %v4359, %v4360
        %v4362 = vand.u32 %v4361, 4294901760
        %4363 = vmatpush.msra.mxu0 %v4362
        %v4364 = vand.u32 %v4267, 4294901760
        %v4365 = vsub.f32 %v4267, %v4364
        %v4366 = vand.u32 %v4365, 4294901760
        %v4367 = vsub.f32 %v4365, %v4366
        %v4368 = vand.u32 %v4367, 4294901760
        %4369 = vmatpush.msra.mxu0 %v4368
        %v4370 = vand.u32 %v4266, 4294901760
        %v4371 = vsub.f32 %v4266, %v4370
        %v4372 = vand.u32 %v4371, 4294901760
        %v4373 = vsub.f32 %v4371, %v4372
        %v4374 = vand.u32 %v4373, 4294901760
        %4375 = vmatpush.msra.mxu0 %v4374
        %v4376 = vand.u32 %v4265, 4294901760
        %v4377 = vsub.f32 %v4265, %v4376
        %v4378 = vand.u32 %v4377, 4294901760
        %v4379 = vsub.f32 %v4377, %v4378
        %v4380 = vand.u32 %v4379, 4294901760
        %4381 = vmatpush.msra.mxu0 %v4380
        %v4382 = vand.u32 %v4264, 4294901760
        %v4383 = vsub.f32 %v4264, %v4382
        %v4384 = vand.u32 %v4383, 4294901760
        %v4385 = vsub.f32 %v4383, %v4384
        %v4386 = vand.u32 %v4385, 4294901760
        %4387 = vmatpush.msra.mxu0 %v4386
        %v4388 = vand.u32 %v4263, 4294901760
        %v4389 = vsub.f32 %v4263, %v4388
        %v4390 = vand.u32 %v4389, 4294901760
        %v4391 = vsub.f32 %v4389, %v4390
        %v4392 = vand.u32 %v4391, 4294901760
        %4393 = vmatpush.msra.mxu0 %v4392
        %v4394 = vand.u32 %v4262, 4294901760
        %v4395 = vsub.f32 %v4262, %v4394
        %v4396 = vand.u32 %v4395, 4294901760
        %v4397 = vsub.f32 %v4395, %v4396
        %v4398 = vand.u32 %v4397, 4294901760
        %4399 = vmatpush.msra.mxu0 %v4398
        %v4400 = vand.u32 %v4261, 4294901760
        %v4401 = vsub.f32 %v4261, %v4400
        %v4402 = vand.u32 %v4401, 4294901760
        %v4403 = vsub.f32 %v4401, %v4402
        %v4404 = vand.u32 %v4403, 4294901760
        %4405 = vmatpush.msra.mxu0 %v4404
        %v4406 = vand.u32 %v4260, 4294901760
        %v4407 = vsub.f32 %v4260, %v4406
        %v4408 = vand.u32 %v4407, 4294901760
        %v4409 = vsub.f32 %v4407, %v4408
        %v4410 = vand.u32 %v4409, 4294901760
        %4411 = vmatpush.msra.mxu0 %v4410
        %v4412 = vand.u32 %v4259, 4294901760
        %v4413 = vsub.f32 %v4259, %v4412
        %v4414 = vand.u32 %v4413, 4294901760
        %v4415 = vsub.f32 %v4413, %v4414
        %v4416 = vand.u32 %v4415, 4294901760
        %4417 = vmatpush.msra.mxu0 %v4416
        %v4418 = vand.u32 %v4258, 4294901760
        %v4419 = vsub.f32 %v4258, %v4418
        %v4420 = vand.u32 %v4419, 4294901760
        %v4421 = vsub.f32 %v4419, %v4420
        %v4422 = vand.u32 %v4421, 4294901760
        %4423 = vmatpush.msra.mxu0 %v4422
        %v4424 = vand.u32 %v4257, 4294901760
        %v4425 = vsub.f32 %v4257, %v4424
        %v4426 = vand.u32 %v4425, 4294901760
        %v4427 = vsub.f32 %v4425, %v4426
        %v4428 = vand.u32 %v4427, 4294901760
        %4429 = vmatpush.msra.mxu0 %v4428
        %v4430 = vand.u32 %v4254, 4294901760
        %4431 = vmatmul.f32.gmra.mxu0 %v4430
        %v4432 = vpop.f32.mrf.mxu0
        %v4433 = vadd.f32 %v4316, %v4432
        %v4434 = vand.u32 %v4255, 4294901760
        %4435 = vmatmul.f32.gmra.mxu0 %v4434
        %v4436 = vpop.f32.mrf.mxu0
        %v4437 = vadd.f32 %v4324, %v4436
        %v4438 = vand.u32 %v4256, 4294901760
        %4439 = vmatmul.f32.gmra.mxu0 %v4438
        %v4440 = vpop.f32.mrf.mxu0
        %v4441 = vadd.f32 %v4332, %v4440
        %4442 = vdwg.mxu0
        %v4443 = vand.u32 %v4272, 4294901760
        %v4444 = vsub.f32 %v4272, %v4443
        %4445 = vmatpush.msra.mxu0 %v4444
        %v4446 = vand.u32 %v4271, 4294901760
        %v4447 = vsub.f32 %v4271, %v4446
        %4448 = vmatpush.msra.mxu0 %v4447
        %v4449 = vand.u32 %v4270, 4294901760
        %v4450 = vsub.f32 %v4270, %v4449
        %4451 = vmatpush.msra.mxu0 %v4450
        %v4452 = vand.u32 %v4269, 4294901760
        %v4453 = vsub.f32 %v4269, %v4452
        %4454 = vmatpush.msra.mxu0 %v4453
        %v4455 = vand.u32 %v4268, 4294901760
        %v4456 = vsub.f32 %v4268, %v4455
        %4457 = vmatpush.msra.mxu0 %v4456
        %v4458 = vand.u32 %v4267, 4294901760
        %v4459 = vsub.f32 %v4267, %v4458
        %4460 = vmatpush.msra.mxu0 %v4459
        %v4461 = vand.u32 %v4266, 4294901760
        %v4462 = vsub.f32 %v4266, %v4461
        %4463 = vmatpush.msra.mxu0 %v4462
        %v4464 = vand.u32 %v4265, 4294901760
        %v4465 = vsub.f32 %v4265, %v4464
        %4466 = vmatpush.msra.mxu0 %v4465
        %v4467 = vand.u32 %v4264, 4294901760
        %v4468 = vsub.f32 %v4264, %v4467
        %4469 = vmatpush.msra.mxu0 %v4468
        %v4470 = vand.u32 %v4263, 4294901760
        %v4471 = vsub.f32 %v4263, %v4470
        %4472 = vmatpush.msra.mxu0 %v4471
        %v4473 = vand.u32 %v4262, 4294901760
        %v4474 = vsub.f32 %v4262, %v4473
        %4475 = vmatpush.msra.mxu0 %v4474
        %v4476 = vand.u32 %v4261, 4294901760
        %v4477 = vsub.f32 %v4261, %v4476
        %4478 = vmatpush.msra.mxu0 %v4477
        %v4479 = vand.u32 %v4260, 4294901760
        %v4480 = vsub.f32 %v4260, %v4479
        %4481 = vmatpush.msra.mxu0 %v4480
        %v4482 = vand.u32 %v4259, 4294901760
        %v4483 = vsub.f32 %v4259, %v4482
        %4484 = vmatpush.msra.mxu0 %v4483
        %v4485 = vand.u32 %v4258, 4294901760
        %v4486 = vsub.f32 %v4258, %v4485
        %4487 = vmatpush.msra.mxu0 %v4486
        %v4488 = vand.u32 %v4257, 4294901760
        %v4489 = vsub.f32 %v4257, %v4488
        %4490 = vmatpush.msra.mxu0 %v4489
        %v4491 = vand.u32 %v4254, 4294901760
        %v4492 = vsub.f32 %v4254, %v4491
        %4493 = vmatmul.f32.gmra.mxu0 %v4492
        %v4494 = vpop.f32.mrf.mxu0
        %v4495 = vadd.f32 %v4433, %v4494
        %v4496 = vand.u32 %v4255, 4294901760
        %v4497 = vsub.f32 %v4255, %v4496
        %4498 = vmatmul.f32.gmra.mxu0 %v4497
        %v4499 = vpop.f32.mrf.mxu0
        %v4500 = vadd.f32 %v4437, %v4499
        %v4501 = vand.u32 %v4256, 4294901760
        %v4502 = vsub.f32 %v4256, %v4501
        %4503 = vmatmul.f32.gmra.mxu0 %v4502
        %v4504 = vpop.f32.mrf.mxu0
        %v4505 = vadd.f32 %v4441, %v4504
        %4506 = vdwg.mxu0
        %v4507 = vand.u32 %v4272, 4294901760
        %4508 = vmatpush.msra.mxu0 %v4507
        %v4509 = vand.u32 %v4271, 4294901760
        %4510 = vmatpush.msra.mxu0 %v4509
        %v4511 = vand.u32 %v4270, 4294901760
        %4512 = vmatpush.msra.mxu0 %v4511
        %v4513 = vand.u32 %v4269, 4294901760
        %4514 = vmatpush.msra.mxu0 %v4513
        %v4515 = vand.u32 %v4268, 4294901760
        %4516 = vmatpush.msra.mxu0 %v4515
        %v4517 = vand.u32 %v4267, 4294901760
        %4518 = vmatpush.msra.mxu0 %v4517
        %v4519 = vand.u32 %v4266, 4294901760
        %4520 = vmatpush.msra.mxu0 %v4519
        %v4521 = vand.u32 %v4265, 4294901760
        %4522 = vmatpush.msra.mxu0 %v4521
        %v4523 = vand.u32 %v4264, 4294901760
        %4524 = vmatpush.msra.mxu0 %v4523
        %v4525 = vand.u32 %v4263, 4294901760
        %4526 = vmatpush.msra.mxu0 %v4525
        %v4527 = vand.u32 %v4262, 4294901760
        %4528 = vmatpush.msra.mxu0 %v4527
        %v4529 = vand.u32 %v4261, 4294901760
        %4530 = vmatpush.msra.mxu0 %v4529
        %v4531 = vand.u32 %v4260, 4294901760
        %4532 = vmatpush.msra.mxu0 %v4531
        %v4533 = vand.u32 %v4259, 4294901760
        %4534 = vmatpush.msra.mxu0 %v4533
        %v4535 = vand.u32 %v4258, 4294901760
        %4536 = vmatpush.msra.mxu0 %v4535
        %v4537 = vand.u32 %v4257, 4294901760
        %4538 = vmatpush.msra.mxu0 %v4537
        %v4539 = vand.u32 %v4254, 4294901760
        %v4540 = vsub.f32 %v4254, %v4539
        %v4541 = vand.u32 %v4540, 4294901760
        %4542 = vmatmul.f32.gmra.mxu0 %v4541
        %v4543 = vpop.f32.mrf.mxu0
        %v4544 = vadd.f32 %v4495, %v4543
        %v4545 = vand.u32 %v4255, 4294901760
        %v4546 = vsub.f32 %v4255, %v4545
        %v4547 = vand.u32 %v4546, 4294901760
        %4548 = vmatmul.f32.gmra.mxu0 %v4547
        %v4549 = vpop.f32.mrf.mxu0
        %v4550 = vadd.f32 %v4500, %v4549
        %v4551 = vand.u32 %v4256, 4294901760
        %v4552 = vsub.f32 %v4256, %v4551
        %v4553 = vand.u32 %v4552, 4294901760
        %4554 = vmatmul.f32.gmra.mxu0 %v4553
        %v4555 = vpop.f32.mrf.mxu0
        %v4556 = vadd.f32 %v4505, %v4555
        %4557 = vdwg.mxu0
        %v4558 = vand.u32 %v4272, 4294901760
        %v4559 = vsub.f32 %v4272, %v4558
        %v4560 = vand.u32 %v4559, 4294901760
        %4561 = vmatpush.msra.mxu0 %v4560
        %v4562 = vand.u32 %v4271, 4294901760
        %v4563 = vsub.f32 %v4271, %v4562
        %v4564 = vand.u32 %v4563, 4294901760
        %4565 = vmatpush.msra.mxu0 %v4564
        %v4566 = vand.u32 %v4270, 4294901760
        %v4567 = vsub.f32 %v4270, %v4566
        %v4568 = vand.u32 %v4567, 4294901760
        %4569 = vmatpush.msra.mxu0 %v4568
        %v4570 = vand.u32 %v4269, 4294901760
        %v4571 = vsub.f32 %v4269, %v4570
        %v4572 = vand.u32 %v4571, 4294901760
        %4573 = vmatpush.msra.mxu0 %v4572
        %v4574 = vand.u32 %v4268, 4294901760
        %v4575 = vsub.f32 %v4268, %v4574
        %v4576 = vand.u32 %v4575, 4294901760
        %4577 = vmatpush.msra.mxu0 %v4576
        %v4578 = vand.u32 %v4267, 4294901760
        %v4579 = vsub.f32 %v4267, %v4578
        %v4580 = vand.u32 %v4579, 4294901760
        %4581 = vmatpush.msra.mxu0 %v4580
        %v4582 = vand.u32 %v4266, 4294901760
        %v4583 = vsub.f32 %v4266, %v4582
        %v4584 = vand.u32 %v4583, 4294901760
        %4585 = vmatpush.msra.mxu0 %v4584
        %v4586 = vand.u32 %v4265, 4294901760
        %v4587 = vsub.f32 %v4265, %v4586
        %v4588 = vand.u32 %v4587, 4294901760
        %4589 = vmatpush.msra.mxu0 %v4588
        %v4590 = vand.u32 %v4264, 4294901760
        %v4591 = vsub.f32 %v4264, %v4590
        %v4592 = vand.u32 %v4591, 4294901760
        %4593 = vmatpush.msra.mxu0 %v4592
        %v4594 = vand.u32 %v4263, 4294901760
        %v4595 = vsub.f32 %v4263, %v4594
        %v4596 = vand.u32 %v4595, 4294901760
        %4597 = vmatpush.msra.mxu0 %v4596
        %v4598 = vand.u32 %v4262, 4294901760
        %v4599 = vsub.f32 %v4262, %v4598
        %v4600 = vand.u32 %v4599, 4294901760
        %4601 = vmatpush.msra.mxu0 %v4600
        %v4602 = vand.u32 %v4261, 4294901760
        %v4603 = vsub.f32 %v4261, %v4602
        %v4604 = vand.u32 %v4603, 4294901760
        %4605 = vmatpush.msra.mxu0 %v4604
        %v4606 = vand.u32 %v4260, 4294901760
        %v4607 = vsub.f32 %v4260, %v4606
        %v4608 = vand.u32 %v4607, 4294901760
        %4609 = vmatpush.msra.mxu0 %v4608
        %v4610 = vand.u32 %v4259, 4294901760
        %v4611 = vsub.f32 %v4259, %v4610
        %v4612 = vand.u32 %v4611, 4294901760
        %4613 = vmatpush.msra.mxu0 %v4612
        %v4614 = vand.u32 %v4258, 4294901760
        %v4615 = vsub.f32 %v4258, %v4614
        %v4616 = vand.u32 %v4615, 4294901760
        %4617 = vmatpush.msra.mxu0 %v4616
        %v4618 = vand.u32 %v4257, 4294901760
        %v4619 = vsub.f32 %v4257, %v4618
        %v4620 = vand.u32 %v4619, 4294901760
        %4621 = vmatpush.msra.mxu0 %v4620
        %v4622 = vand.u32 %v4254, 4294901760
        %4623 = vmatmul.f32.gmra.mxu0 %v4622
        %v4624 = vpop.f32.mrf.mxu0
        %v4625 = vadd.f32 %v4544, %v4624
        %v4626 = vand.u32 %v4255, 4294901760
        %4627 = vmatmul.f32.gmra.mxu0 %v4626
        %v4628 = vpop.f32.mrf.mxu0
        %v4629 = vadd.f32 %v4550, %v4628
        %v4630 = vand.u32 %v4256, 4294901760
        %4631 = vmatmul.f32.gmra.mxu0 %v4630
        %v4632 = vpop.f32.mrf.mxu0
        %v4633 = vadd.f32 %v4556, %v4632
        %4634 = vdwg.mxu0
        %v4635 = vand.u32 %v4272, 4294901760
        %4636 = vmatpush.msra.mxu0 %v4635
        %v4637 = vand.u32 %v4271, 4294901760
        %4638 = vmatpush.msra.mxu0 %v4637
        %v4639 = vand.u32 %v4270, 4294901760
        %4640 = vmatpush.msra.mxu0 %v4639
        %v4641 = vand.u32 %v4269, 4294901760
        %4642 = vmatpush.msra.mxu0 %v4641
        %v4643 = vand.u32 %v4268, 4294901760
        %4644 = vmatpush.msra.mxu0 %v4643
        %v4645 = vand.u32 %v4267, 4294901760
        %4646 = vmatpush.msra.mxu0 %v4645
        %v4647 = vand.u32 %v4266, 4294901760
        %4648 = vmatpush.msra.mxu0 %v4647
        %v4649 = vand.u32 %v4265, 4294901760
        %4650 = vmatpush.msra.mxu0 %v4649
        %v4651 = vand.u32 %v4264, 4294901760
        %4652 = vmatpush.msra.mxu0 %v4651
        %v4653 = vand.u32 %v4263, 4294901760
        %4654 = vmatpush.msra.mxu0 %v4653
        %v4655 = vand.u32 %v4262, 4294901760
        %4656 = vmatpush.msra.mxu0 %v4655
        %v4657 = vand.u32 %v4261, 4294901760
        %4658 = vmatpush.msra.mxu0 %v4657
        %v4659 = vand.u32 %v4260, 4294901760
        %4660 = vmatpush.msra.mxu0 %v4659
        %v4661 = vand.u32 %v4259, 4294901760
        %4662 = vmatpush.msra.mxu0 %v4661
        %v4663 = vand.u32 %v4258, 4294901760
        %4664 = vmatpush.msra.mxu0 %v4663
        %v4665 = vand.u32 %v4257, 4294901760
        %4666 = vmatpush.msra.mxu0 %v4665
        %v4667 = vand.u32 %v4254, 4294901760
        %4668 = vmatmul.f32.gmra.mxu0 %v4667
        %v4669 = vpop.f32.mrf.mxu0
        %v4670 = vadd.f32 %v4625, %v4669
        %v4671 = vand.u32 %v4255, 4294901760
        %4672 = vmatmul.f32.gmra.mxu0 %v4671
        %v4673 = vpop.f32.mrf.mxu0
        %v4674 = vadd.f32 %v4629, %v4673
        %v4675 = vand.u32 %v4256, 4294901760
        %4676 = vmatmul.f32.gmra.mxu0 %v4675
        %v4677 = vpop.f32.mrf.mxu0
        %v4678 = vadd.f32 %v4633, %v4677
        %4679 = vdwg.mxu0
        %v4680 = vmax.f32 %v4670, 0.0
        %v4681 = vmax.f32 %v4674, 0.0
        %v4682 = vmax.f32 %v4678, 0.0
        %v4683 = vld [vmem:[#allocation19] sm:$0xff]
        %v4684 = vld [vmem:[#allocation19 + $0x8] sm:$0xff]
        %v4685 = vld [vmem:[#allocation19 + $0x10] sm:$0xff]
        %v4686 = vld [vmem:[#allocation19 + $0x18] sm:$0xff]
        %v4687 = vld [vmem:[#allocation19 + $0x20] sm:$0xff]
        %v4688 = vld [vmem:[#allocation19 + $0x28] sm:$0xff]
        %v4689 = vld [vmem:[#allocation19 + $0x30] sm:$0xff]
        %v4690 = vld [vmem:[#allocation19 + $0x38] sm:$0xff]
        %v4691 = vld [vmem:[#allocation19 + $0x40] sm:$0xff]
        %v4692 = vld [vmem:[#allocation19 + $0x48] sm:$0xff]
        %v4693 = vld [vmem:[#allocation19 + $0x50] sm:$0xff]
        %v4694 = vld [vmem:[#allocation19 + $0x58] sm:$0xff]
        %v4695 = vld [vmem:[#allocation19 + $0x60] sm:$0xff]
        %v4696 = vld [vmem:[#allocation19 + $0x68] sm:$0xff]
        %v4697 = vld [vmem:[#allocation19 + $0x70] sm:$0xff]
        %v4698 = vld [vmem:[#allocation19 + $0x78] sm:$0xff]
        %v4699 = vld [vmem:[%s19] sm:$0x1]
        %v4701 = vperm.slane %v4699, 0
        %v4703 = vand.u32 %v4698, 4294901760
        %4704 = vmatpush.msra.mxu0 %v4703
        %v4705 = vand.u32 %v4697, 4294901760
        %4706 = vmatpush.msra.mxu0 %v4705
        %v4707 = vand.u32 %v4696, 4294901760
        %4708 = vmatpush.msra.mxu0 %v4707
        %v4709 = vand.u32 %v4695, 4294901760
        %4710 = vmatpush.msra.mxu0 %v4709
        %v4711 = vand.u32 %v4694, 4294901760
        %4712 = vmatpush.msra.mxu0 %v4711
        %v4713 = vand.u32 %v4693, 4294901760
        %4714 = vmatpush.msra.mxu0 %v4713
        %v4715 = vand.u32 %v4692, 4294901760
        %4716 = vmatpush.msra.mxu0 %v4715
        %v4717 = vand.u32 %v4691, 4294901760
        %4718 = vmatpush.msra.mxu0 %v4717
        %v4719 = vand.u32 %v4690, 4294901760
        %4720 = vmatpush.msra.mxu0 %v4719
        %v4721 = vand.u32 %v4689, 4294901760
        %4722 = vmatpush.msra.mxu0 %v4721
        %v4723 = vand.u32 %v4688, 4294901760
        %4724 = vmatpush.msra.mxu0 %v4723
        %v4725 = vand.u32 %v4687, 4294901760
        %4726 = vmatpush.msra.mxu0 %v4725
        %v4727 = vand.u32 %v4686, 4294901760
        %4728 = vmatpush.msra.mxu0 %v4727
        %v4729 = vand.u32 %v4685, 4294901760
        %4730 = vmatpush.msra.mxu0 %v4729
        %v4731 = vand.u32 %v4684, 4294901760
        %4732 = vmatpush.msra.mxu0 %v4731
        %v4733 = vand.u32 %v4683, 4294901760
        %4734 = vmatpush.msra.mxu0 %v4733
        %v4735 = vand.u32 %v4680, 4294901760
        %v4736 = vsub.f32 %v4680, %v4735
        %v4737 = vand.u32 %v4736, 4294901760
        %v4738 = vsub.f32 %v4736, %v4737
        %v4739 = vand.u32 %v4738, 4294901760
        %4740 = vmatmul.f32.gmra.mxu0 %v4739
        %v4741 = vpop.f32.mrf.mxu0
        %v4742 = vadd.f32 %v4701, %v4741
        %v4743 = vand.u32 %v4681, 4294901760
        %v4744 = vsub.f32 %v4681, %v4743
        %v4745 = vand.u32 %v4744, 4294901760
        %v4746 = vsub.f32 %v4744, %v4745
        %v4747 = vand.u32 %v4746, 4294901760
        %4748 = vmatmul.f32.gmra.mxu0 %v4747
        %v4749 = vpop.f32.mrf.mxu0
        %v4750 = vadd.f32 %v4701, %v4749
        %v4751 = vand.u32 %v4682, 4294901760
        %v4752 = vsub.f32 %v4682, %v4751
        %v4753 = vand.u32 %v4752, 4294901760
        %v4754 = vsub.f32 %v4752, %v4753
        %v4755 = vand.u32 %v4754, 4294901760
        %4756 = vmatmul.f32.gmra.mxu0 %v4755
        %v4757 = vpop.f32.mrf.mxu0
        %v4758 = vadd.f32 %v4701, %v4757
        %4759 = vdwg.mxu0
        %v4760 = vand.u32 %v4698, 4294901760
        %v4761 = vsub.f32 %v4698, %v4760
        %v4762 = vand.u32 %v4761, 4294901760
        %v4763 = vsub.f32 %v4761, %v4762
        %v4764 = vand.u32 %v4763, 4294901760
        %4765 = vmatpush.msra.mxu0 %v4764
        %v4766 = vand.u32 %v4697, 4294901760
        %v4767 = vsub.f32 %v4697, %v4766
        %v4768 = vand.u32 %v4767, 4294901760
        %v4769 = vsub.f32 %v4767, %v4768
        %v4770 = vand.u32 %v4769, 4294901760
        %4771 = vmatpush.msra.mxu0 %v4770
        %v4772 = vand.u32 %v4696, 4294901760
        %v4773 = vsub.f32 %v4696, %v4772
        %v4774 = vand.u32 %v4773, 4294901760
        %v4775 = vsub.f32 %v4773, %v4774
        %v4776 = vand.u32 %v4775, 4294901760
        %4777 = vmatpush.msra.mxu0 %v4776
        %v4778 = vand.u32 %v4695, 4294901760
        %v4779 = vsub.f32 %v4695, %v4778
        %v4780 = vand.u32 %v4779, 4294901760
        %v4781 = vsub.f32 %v4779, %v4780
        %v4782 = vand.u32 %v4781, 4294901760
        %4783 = vmatpush.msra.mxu0 %v4782
        %v4784 = vand.u32 %v4694, 4294901760
        %v4785 = vsub.f32 %v4694, %v4784
        %v4786 = vand.u32 %v4785, 4294901760
        %v4787 = vsub.f32 %v4785, %v4786
        %v4788 = vand.u32 %v4787, 4294901760
        %4789 = vmatpush.msra.mxu0 %v4788
        %v4790 = vand.u32 %v4693, 4294901760
        %v4791 = vsub.f32 %v4693, %v4790
        %v4792 = vand.u32 %v4791, 4294901760
        %v4793 = vsub.f32 %v4791, %v4792
        %v4794 = vand.u32 %v4793, 4294901760
        %4795 = vmatpush.msra.mxu0 %v4794
        %v4796 = vand.u32 %v4692, 4294901760
        %v4797 = vsub.f32 %v4692, %v4796
        %v4798 = vand.u32 %v4797, 4294901760
        %v4799 = vsub.f32 %v4797, %v4798
        %v4800 = vand.u32 %v4799, 4294901760
        %4801 = vmatpush.msra.mxu0 %v4800
        %v4802 = vand.u32 %v4691, 4294901760
        %v4803 = vsub.f32 %v4691, %v4802
        %v4804 = vand.u32 %v4803, 4294901760
        %v4805 = vsub.f32 %v4803, %v4804
        %v4806 = vand.u32 %v4805, 4294901760
        %4807 = vmatpush.msra.mxu0 %v4806
        %v4808 = vand.u32 %v4690, 4294901760
        %v4809 = vsub.f32 %v4690, %v4808
        %v4810 = vand.u32 %v4809, 4294901760
        %v4811 = vsub.f32 %v4809, %v4810
        %v4812 = vand.u32 %v4811, 4294901760
        %4813 = vmatpush.msra.mxu0 %v4812
        %v4814 = vand.u32 %v4689, 4294901760
        %v4815 = vsub.f32 %v4689, %v4814
        %v4816 = vand.u32 %v4815, 4294901760
        %v4817 = vsub.f32 %v4815, %v4816
        %v4818 = vand.u32 %v4817, 4294901760
        %4819 = vmatpush.msra.mxu0 %v4818
        %v4820 = vand.u32 %v4688, 4294901760
        %v4821 = vsub.f32 %v4688, %v4820
        %v4822 = vand.u32 %v4821, 4294901760
        %v4823 = vsub.f32 %v4821, %v4822
        %v4824 = vand.u32 %v4823, 4294901760
        %4825 = vmatpush.msra.mxu0 %v4824
        %v4826 = vand.u32 %v4687, 4294901760
        %v4827 = vsub.f32 %v4687, %v4826
        %v4828 = vand.u32 %v4827, 4294901760
        %v4829 = vsub.f32 %v4827, %v4828
        %v4830 = vand.u32 %v4829, 4294901760
        %4831 = vmatpush.msra.mxu0 %v4830
        %v4832 = vand.u32 %v4686, 4294901760
        %v4833 = vsub.f32 %v4686, %v4832
        %v4834 = vand.u32 %v4833, 4294901760
        %v4835 = vsub.f32 %v4833, %v4834
        %v4836 = vand.u32 %v4835, 4294901760
        %4837 = vmatpush.msra.mxu0 %v4836
        %v4838 = vand.u32 %v4685, 4294901760
        %v4839 = vsub.f32 %v4685, %v4838
        %v4840 = vand.u32 %v4839, 4294901760
        %v4841 = vsub.f32 %v4839, %v4840
        %v4842 = vand.u32 %v4841, 4294901760
        %4843 = vmatpush.msra.mxu0 %v4842
        %v4844 = vand.u32 %v4684, 4294901760
        %v4845 = vsub.f32 %v4684, %v4844
        %v4846 = vand.u32 %v4845, 4294901760
        %v4847 = vsub.f32 %v4845, %v4846
        %v4848 = vand.u32 %v4847, 4294901760
        %4849 = vmatpush.msra.mxu0 %v4848
        %v4850 = vand.u32 %v4683, 4294901760
        %v4851 = vsub.f32 %v4683, %v4850
        %v4852 = vand.u32 %v4851, 4294901760
        %v4853 = vsub.f32 %v4851, %v4852
        %v4854 = vand.u32 %v4853, 4294901760
        %4855 = vmatpush.msra.mxu0 %v4854
        %v4856 = vand.u32 %v4680, 4294901760
        %4857 = vmatmul.f32.gmra.mxu0 %v4856
        %v4858 = vpop.f32.mrf.mxu0
        %v4859 = vadd.f32 %v4742, %v4858
        %v4860 = vand.u32 %v4681, 4294901760
        %4861 = vmatmul.f32.gmra.mxu0 %v4860
        %v4862 = vpop.f32.mrf.mxu0
        %v4863 = vadd.f32 %v4750, %v4862
        %v4864 = vand.u32 %v4682, 4294901760
        %4865 = vmatmul.f32.gmra.mxu0 %v4864
        %v4866 = vpop.f32.mrf.mxu0
        %v4867 = vadd.f32 %v4758, %v4866
        %4868 = vdwg.mxu0
        %v4869 = vand.u32 %v4698, 4294901760
        %v4870 = vsub.f32 %v4698, %v4869
        %4871 = vmatpush.msra.mxu0 %v4870
        %v4872 = vand.u32 %v4697, 4294901760
        %v4873 = vsub.f32 %v4697, %v4872
        %4874 = vmatpush.msra.mxu0 %v4873
        %v4875 = vand.u32 %v4696, 4294901760
        %v4876 = vsub.f32 %v4696, %v4875
        %4877 = vmatpush.msra.mxu0 %v4876
        %v4878 = vand.u32 %v4695, 4294901760
        %v4879 = vsub.f32 %v4695, %v4878
        %4880 = vmatpush.msra.mxu0 %v4879
        %v4881 = vand.u32 %v4694, 4294901760
        %v4882 = vsub.f32 %v4694, %v4881
        %4883 = vmatpush.msra.mxu0 %v4882
        %v4884 = vand.u32 %v4693, 4294901760
        %v4885 = vsub.f32 %v4693, %v4884
        %4886 = vmatpush.msra.mxu0 %v4885
        %v4887 = vand.u32 %v4692, 4294901760
        %v4888 = vsub.f32 %v4692, %v4887
        %4889 = vmatpush.msra.mxu0 %v4888
        %v4890 = vand.u32 %v4691, 4294901760
        %v4891 = vsub.f32 %v4691, %v4890
        %4892 = vmatpush.msra.mxu0 %v4891
        %v4893 = vand.u32 %v4690, 4294901760
        %v4894 = vsub.f32 %v4690, %v4893
        %4895 = vmatpush.msra.mxu0 %v4894
        %v4896 = vand.u32 %v4689, 4294901760
        %v4897 = vsub.f32 %v4689, %v4896
        %4898 = vmatpush.msra.mxu0 %v4897
        %v4899 = vand.u32 %v4688, 4294901760
        %v4900 = vsub.f32 %v4688, %v4899
        %4901 = vmatpush.msra.mxu0 %v4900
        %v4902 = vand.u32 %v4687, 4294901760
        %v4903 = vsub.f32 %v4687, %v4902
        %4904 = vmatpush.msra.mxu0 %v4903
        %v4905 = vand.u32 %v4686, 4294901760
        %v4906 = vsub.f32 %v4686, %v4905
        %4907 = vmatpush.msra.mxu0 %v4906
        %v4908 = vand.u32 %v4685, 4294901760
        %v4909 = vsub.f32 %v4685, %v4908
        %4910 = vmatpush.msra.mxu0 %v4909
        %v4911 = vand.u32 %v4684, 4294901760
        %v4912 = vsub.f32 %v4684, %v4911
        %4913 = vmatpush.msra.mxu0 %v4912
        %v4914 = vand.u32 %v4683, 4294901760
        %v4915 = vsub.f32 %v4683, %v4914
        %4916 = vmatpush.msra.mxu0 %v4915
        %v4917 = vand.u32 %v4680, 4294901760
        %v4918 = vsub.f32 %v4680, %v4917
        %4919 = vmatmul.f32.gmra.mxu0 %v4918
        %v4920 = vpop.f32.mrf.mxu0
        %v4921 = vadd.f32 %v4859, %v4920
        %v4922 = vand.u32 %v4681, 4294901760
        %v4923 = vsub.f32 %v4681, %v4922
        %4924 = vmatmul.f32.gmra.mxu0 %v4923
        %v4925 = vpop.f32.mrf.mxu0
        %v4926 = vadd.f32 %v4863, %v4925
        %v4927 = vand.u32 %v4682, 4294901760
        %v4928 = vsub.f32 %v4682, %v4927
        %4929 = vmatmul.f32.gmra.mxu0 %v4928
        %v4930 = vpop.f32.mrf.mxu0
        %v4931 = vadd.f32 %v4867, %v4930
        %4932 = vdwg.mxu0
        %v4933 = vand.u32 %v4698, 4294901760
        %4934 = vmatpush.msra.mxu0 %v4933
        %v4935 = vand.u32 %v4697, 4294901760
        %4936 = vmatpush.msra.mxu0 %v4935
        %v4937 = vand.u32 %v4696, 4294901760
        %4938 = vmatpush.msra.mxu0 %v4937
        %v4939 = vand.u32 %v4695, 4294901760
        %4940 = vmatpush.msra.mxu0 %v4939
        %v4941 = vand.u32 %v4694, 4294901760
        %4942 = vmatpush.msra.mxu0 %v4941
        %v4943 = vand.u32 %v4693, 4294901760
        %4944 = vmatpush.msra.mxu0 %v4943
        %v4945 = vand.u32 %v4692, 4294901760
        %4946 = vmatpush.msra.mxu0 %v4945
        %v4947 = vand.u32 %v4691, 4294901760
        %4948 = vmatpush.msra.mxu0 %v4947
        %v4949 = vand.u32 %v4690, 4294901760
        %4950 = vmatpush.msra.mxu0 %v4949
        %v4951 = vand.u32 %v4689, 4294901760
        %4952 = vmatpush.msra.mxu0 %v4951
        %v4953 = vand.u32 %v4688, 4294901760
        %4954 = vmatpush.msra.mxu0 %v4953
        %v4955 = vand.u32 %v4687, 4294901760
        %4956 = vmatpush.msra.mxu0 %v4955
        %v4957 = vand.u32 %v4686, 4294901760
        %4958 = vmatpush.msra.mxu0 %v4957
        %v4959 = vand.u32 %v4685, 4294901760
        %4960 = vmatpush.msra.mxu0 %v4959
        %v4961 = vand.u32 %v4684, 4294901760
        %4962 = vmatpush.msra.mxu0 %v4961
        %v4963 = vand.u32 %v4683, 4294901760
        %4964 = vmatpush.msra.mxu0 %v4963
        %v4965 = vand.u32 %v4680, 4294901760
        %v4966 = vsub.f32 %v4680, %v4965
        %v4967 = vand.u32 %v4966, 4294901760
        %4968 = vmatmul.f32.gmra.mxu0 %v4967
        %v4969 = vpop.f32.mrf.mxu0
        %v4970 = vadd.f32 %v4921, %v4969
        %v4971 = vand.u32 %v4681, 4294901760
        %v4972 = vsub.f32 %v4681, %v4971
        %v4973 = vand.u32 %v4972, 4294901760
        %4974 = vmatmul.f32.gmra.mxu0 %v4973
        %v4975 = vpop.f32.mrf.mxu0
        %v4976 = vadd.f32 %v4926, %v4975
        %v4977 = vand.u32 %v4682, 4294901760
        %v4978 = vsub.f32 %v4682, %v4977
        %v4979 = vand.u32 %v4978, 4294901760
        %4980 = vmatmul.f32.gmra.mxu0 %v4979
        %v4981 = vpop.f32.mrf.mxu0
        %v4982 = vadd.f32 %v4931, %v4981
        %4983 = vdwg.mxu0
        %v4984 = vand.u32 %v4698, 4294901760
        %v4985 = vsub.f32 %v4698, %v4984
        %v4986 = vand.u32 %v4985, 4294901760
        %4987 = vmatpush.msra.mxu0 %v4986
        %v4988 = vand.u32 %v4697, 4294901760
        %v4989 = vsub.f32 %v4697, %v4988
        %v4990 = vand.u32 %v4989, 4294901760
        %4991 = vmatpush.msra.mxu0 %v4990
        %v4992 = vand.u32 %v4696, 4294901760
        %v4993 = vsub.f32 %v4696, %v4992
        %v4994 = vand.u32 %v4993, 4294901760
        %4995 = vmatpush.msra.mxu0 %v4994
        %v4996 = vand.u32 %v4695, 4294901760
        %v4997 = vsub.f32 %v4695, %v4996
        %v4998 = vand.u32 %v4997, 4294901760
        %4999 = vmatpush.msra.mxu0 %v4998
        %v5000 = vand.u32 %v4694, 4294901760
        %v5001 = vsub.f32 %v4694, %v5000
        %v5002 = vand.u32 %v5001, 4294901760
        %5003 = vmatpush.msra.mxu0 %v5002
        %v5004 = vand.u32 %v4693, 4294901760
        %v5005 = vsub.f32 %v4693, %v5004
        %v5006 = vand.u32 %v5005, 4294901760
        %5007 = vmatpush.msra.mxu0 %v5006
        %v5008 = vand.u32 %v4692, 4294901760
        %v5009 = vsub.f32 %v4692, %v5008
        %v5010 = vand.u32 %v5009, 4294901760
        %5011 = vmatpush.msra.mxu0 %v5010
        %v5012 = vand.u32 %v4691, 4294901760
        %v5013 = vsub.f32 %v4691, %v5012
        %v5014 = vand.u32 %v5013, 4294901760
        %5015 = vmatpush.msra.mxu0 %v5014
        %v5016 = vand.u32 %v4690, 4294901760
        %v5017 = vsub.f32 %v4690, %v5016
        %v5018 = vand.u32 %v5017, 4294901760
        %5019 = vmatpush.msra.mxu0 %v5018
        %v5020 = vand.u32 %v4689, 4294901760
        %v5021 = vsub.f32 %v4689, %v5020
        %v5022 = vand.u32 %v5021, 4294901760
        %5023 = vmatpush.msra.mxu0 %v5022
        %v5024 = vand.u32 %v4688, 4294901760
        %v5025 = vsub.f32 %v4688, %v5024
        %v5026 = vand.u32 %v5025, 4294901760
        %5027 = vmatpush.msra.mxu0 %v5026
        %v5028 = vand.u32 %v4687, 4294901760
        %v5029 = vsub.f32 %v4687, %v5028
        %v5030 = vand.u32 %v5029, 4294901760
        %5031 = vmatpush.msra.mxu0 %v5030
        %v5032 = vand.u32 %v4686, 4294901760
        %v5033 = vsub.f32 %v4686, %v5032
        %v5034 = vand.u32 %v5033, 4294901760
        %5035 = vmatpush.msra.mxu0 %v5034
        %v5036 = vand.u32 %v4685, 4294901760
        %v5037 = vsub.f32 %v4685, %v5036
        %v5038 = vand.u32 %v5037, 4294901760
        %5039 = vmatpush.msra.mxu0 %v5038
        %v5040 = vand.u32 %v4684, 4294901760
        %v5041 = vsub.f32 %v4684, %v5040
        %v5042 = vand.u32 %v5041, 4294901760
        %5043 = vmatpush.msra.mxu0 %v5042
        %v5044 = vand.u32 %v4683, 4294901760
        %v5045 = vsub.f32 %v4683, %v5044
        %v5046 = vand.u32 %v5045, 4294901760
        %5047 = vmatpush.msra.mxu0 %v5046
        %v5048 = vand.u32 %v4680, 4294901760
        %5049 = vmatmul.f32.gmra.mxu0 %v5048
        %v5050 = vpop.f32.mrf.mxu0
        %v5051 = vadd.f32 %v4970, %v5050
        %v5052 = vand.u32 %v4681, 4294901760
        %5053 = vmatmul.f32.gmra.mxu0 %v5052
        %v5054 = vpop.f32.mrf.mxu0
        %v5055 = vadd.f32 %v4976, %v5054
        %v5056 = vand.u32 %v4682, 4294901760
        %5057 = vmatmul.f32.gmra.mxu0 %v5056
        %v5058 = vpop.f32.mrf.mxu0
        %v5059 = vadd.f32 %v4982, %v5058
        %5060 = vdwg.mxu0
        %v5061 = vand.u32 %v4698, 4294901760
        %5062 = vmatpush.msra.mxu0 %v5061
        %v5063 = vand.u32 %v4697, 4294901760
        %5064 = vmatpush.msra.mxu0 %v5063
        %v5065 = vand.u32 %v4696, 4294901760
        %5066 = vmatpush.msra.mxu0 %v5065
        %v5067 = vand.u32 %v4695, 4294901760
        %5068 = vmatpush.msra.mxu0 %v5067
        %v5069 = vand.u32 %v4694, 4294901760
        %5070 = vmatpush.msra.mxu0 %v5069
        %v5071 = vand.u32 %v4693, 4294901760
        %5072 = vmatpush.msra.mxu0 %v5071
        %v5073 = vand.u32 %v4692, 4294901760
        %5074 = vmatpush.msra.mxu0 %v5073
        %v5075 = vand.u32 %v4691, 4294901760
        %5076 = vmatpush.msra.mxu0 %v5075
        %v5077 = vand.u32 %v4690, 4294901760
        %5078 = vmatpush.msra.mxu0 %v5077
        %v5079 = vand.u32 %v4689, 4294901760
        %5080 = vmatpush.msra.mxu0 %v5079
        %v5081 = vand.u32 %v4688, 4294901760
        %5082 = vmatpush.msra.mxu0 %v5081
        %v5083 = vand.u32 %v4687, 4294901760
        %5084 = vmatpush.msra.mxu0 %v5083
        %v5085 = vand.u32 %v4686, 4294901760
        %5086 = vmatpush.msra.mxu0 %v5085
        %v5087 = vand.u32 %v4685, 4294901760
        %5088 = vmatpush.msra.mxu0 %v5087
        %v5089 = vand.u32 %v4684, 4294901760
        %5090 = vmatpush.msra.mxu0 %v5089
        %v5091 = vand.u32 %v4683, 4294901760
        %5092 = vmatpush.msra.mxu0 %v5091
        %v5093 = vand.u32 %v4680, 4294901760
        %5094 = vmatmul.f32.gmra.mxu0 %v5093
        %v5095 = vpop.f32.mrf.mxu0
        %v5096 = vadd.f32 %v5051, %v5095
        %v5097 = vand.u32 %v4681, 4294901760
        %5098 = vmatmul.f32.gmra.mxu0 %v5097
        %v5099 = vpop.f32.mrf.mxu0
        %v5100 = vadd.f32 %v5055, %v5099
        %v5101 = vand.u32 %v4682, 4294901760
        %5102 = vmatmul.f32.gmra.mxu0 %v5101
        %v5103 = vpop.f32.mrf.mxu0
        %v5104 = vadd.f32 %v5059, %v5103
        %5105 = vdwg.mxu0
        %5106 = vst [vmem:[%s845] sm:$0xff] %v5096
        %5107 = vst [vmem:[%s845 + $0x8] sm:$0xff] %v5100
        %5108 = vst [vmem:[%s845 + $0x10] sm:$0xff] %v5104
        %5109 = vst [vmem:[%s852] sm:$0xff] %v3399
        %5110 = vst [vmem:[%s852 + $0x8] sm:$0xff] %v3403
        %5111 = vst [vmem:[%s852 + $0x10] sm:$0xff] %v3407
        %s5112 = sand.u32 %s480, 1
        %s5113 = scalar_lea.sflag [#allocation4], %s5112
        %s5114 = sand.u32 %s480, 1
        %s5115 = smul.addr %s5114, 24
        %s5116 = scalar_lea.vmem [#allocation20], %s5115
        %s5117 = sand.u32 %s506, 1
        %s5118 = scalar_lea.sflag [#allocation22], %s5117
        %s5119 = sand.u32 %s506, 1
        %s5120 = smul.addr %s5119, 24
        %s5121 = scalar_lea.vmem [#allocation21], %s5120
        // Predicated region
        $region145: #{tpu_custom_call.1} parent=99 // pred_check
          %p5122 = pneg %p490
        $region146: #{tpu_custom_call.1} parent=99 // pred_check_branch
          %5124 = sbr.rel (%p5122) target = $region148
        $region147: #{tpu_custom_call.1} parent=99 // pred_region
          %s5125 = smul.u32 3, %s47
          %5127 = vsyncadd %s5113, 0
          %s5128 = smul.addr %s5125, 8
          %s5129 = scalar_lea.hbm %s20, %s5128
          %s5130 = sshll.u32 %s5116, 4
          %s5131 = int_to_ptr.vmem [resolvable:$true] %s5130
          %s5132 = sshll.u32 %s5129, 4
          %s5133 = int_to_ptr.hbm [resolvable:$true] %s5132
          %5138 = dma.vmem_to_hbm [thread:$0]  %s5131, 384, %s5133, %s5113, 128, 128, 8
        $region148: #{tpu_custom_call.1} parent=99 // pred_fallthru
          _
        // Predicated region
        $region149: #{tpu_custom_call.1} parent=99 // pred_check
          %p5139 = pneg %p516
        $region150: #{tpu_custom_call.1} parent=99 // pred_check_branch
          %5141 = sbr.rel (%p5139) target = $region152
        $region151: #{tpu_custom_call.1} parent=99 // pred_region
          %s5142 = smul.u32 3, %s47
          %5144 = vsyncadd %s5118, 0
          %s5145 = smul.addr %s5142, 8
          %s5146 = scalar_lea.hbm %s21, %s5145
          %s5147 = sshll.u32 %s5121, 4
          %s5148 = int_to_ptr.vmem [resolvable:$true] %s5147
          %s5149 = sshll.u32 %s5146, 4
          %s5150 = int_to_ptr.hbm [resolvable:$true] %s5149
          %5155 = dma.vmem_to_hbm [thread:$0]  %s5148, 384, %s5150, %s5118, 128, 128, 8
        $region152: #{tpu_custom_call.1} parent=99 // pred_fallthru
          _
      $region100: #{tpu_custom_call.1} parent=5 // pred_fallthru
        _
      %p5156 = scmp.le.s32.totalorder 2, %s42
      // Predicated region
      $region153: #{tpu_custom_call.1} parent=5 // pred_check
        %p5157 = pneg %p5156
      $region154: #{tpu_custom_call.1} parent=5 // pred_check_branch
        %5159 = sbr.rel (%p5157) target = $region156
      $region155: #{tpu_custom_call.1} parent=5 // pred_region
        %s5160 = ssub.s32 %s42, 2
        // Predicated region
        $region157: #{tpu_custom_call.1} parent=155 // pred_check
          %p5161 = pneg %p496
        $region158: #{tpu_custom_call.1} parent=155 // pred_check_branch
          %5163 = sbr.rel (%p5161) target = $region160
        $region159: #{tpu_custom_call.1} parent=155 // pred_region
          %s5164 = sand.u32 %s481, 1
          %s5165 = scalar_lea.sflag [#allocation4], %s5164
          %s5166 = sand.u32 %s481, 1
          %s5167 = smul.addr %s5166, 24
          %s5168 = scalar_lea.vmem [#allocation20], %s5167
          %5170 = dma.done %s5165, 384
        $region160: #{tpu_custom_call.1} parent=155 // pred_fallthru
          _
        // Predicated region
        $region161: #{tpu_custom_call.1} parent=155 // pred_check
          %p5171 = pneg %p522
        $region162: #{tpu_custom_call.1} parent=155 // pred_check_branch
          %5173 = sbr.rel (%p5171) target = $region164
        $region163: #{tpu_custom_call.1} parent=155 // pred_region
          %s5174 = sand.u32 %s507, 1
          %s5175 = scalar_lea.sflag [#allocation22], %s5174
          %s5176 = sand.u32 %s507, 1
          %s5177 = smul.addr %s5176, 24
          %s5178 = scalar_lea.vmem [#allocation21], %s5177
          %5180 = dma.done %s5175, 384
        $region164: #{tpu_custom_call.1} parent=155 // pred_fallthru
          _
      $region156: #{tpu_custom_call.1} parent=5 // pred_fallthru
        _
    $region6: #{tpu_custom_call.1} parent=1 // loop_footer
      %s46 = sadd.s32 1, %s42
    $region7: #{tpu_custom_call.1} parent=1 // loop_footer_branch
      %41 = sbr.rel target = $region3
    $region8: #{tpu_custom_call.1} parent=1 // loop_exit
      _
    %5181 = vsyncpa [#allocation3], 1
    %s5182 = scalar_lea.sflag [#allocation3], 1
    %5183 = vsyncpa %s5182, 1
    %5184 = vsyncpa [#allocation6], 1
    %5185 = vsyncpa [#allocation9], 1
    %5186 = vsyncpa [#allocation12], 1
    %5187 = vsyncpa [#allocation15], 1
    %5188 = vsyncpa [#allocation18], 1
    %5189 = vsyncpa [#allocation4], 1
    %s5190 = scalar_lea.sflag [#allocation4], 1
    %5191 = vsyncpa %s5190, 1
    %5192 = vsyncpa [#allocation22], 1
    %s5193 = scalar_lea.sflag [#allocation22], 1
    %5194 = vsyncpa %s5193, 1

</llo_original>
